<compile_context>
chip_gen: v5e
topology: v5e:2x2
jax: 0.10.0
libtpu: 0.0.40
codegen_flags: <defaults>
</compile_context>

<pallas_src>
import functools
import math

import jax
import jax.numpy as jnp
from jax.experimental import pallas as pl
from jax.experimental.pallas import tpu as pltpu


# --------------------------------------------------------------------------
# bf16-operand / f32-accumulation matmul helper (shared by kernel & reference
# so the numerics match).
# --------------------------------------------------------------------------
def _mm(a, b):
    """a @ b with bf16 operands, f32 accumulation (MXU-friendly)."""
    return jnp.dot(a.astype(jnp.bfloat16), b.astype(jnp.bfloat16),
                   preferred_element_type=jnp.float32)


# --------------------------------------------------------------------------
# Fused SAB kernel: one grid step == Bt batch sets.
# --------------------------------------------------------------------------
def sab_kernel(x_ref, wqkv_ref, wo_ref, bqkv_ref, bo_ref, o_ref, *, num_heads):
    bt, n, d_in = x_ref.shape
    dim_v = o_ref.shape[-1]
    dh = dim_v // num_heads
    scale = 1.0 / math.sqrt(dim_v)
    m = bt * n                                       # rows fed to the MXU

    x = x_ref[...].reshape(m, d_in)                  # (Bt*N, dim_in) bf16

    # Fused QKV projection: one wide MXU pass, f32 accumulate, f32 bias add.
    qkv = _mm(x, wqkv_ref[...]) + bqkv_ref[...]      # (Bt*N, 3*dim_v) f32

    # Lane-aligned (multiples of 128) slices -> free.
    q = qkv[:, :dim_v]                               # unscaled (needed for residual)
    k = qkv[:, dim_v:2 * dim_v] * scale              # fold 1/sqrt(dim_V) into K
    v = qkv[:, 2 * dim_v:]

    # Head-batched operands (H*Bt, N, dh): per-head lane slice, regroup rows
    # into sets, stack heads along the leading dim.  (Avoids in-kernel 4-D
    # transposes; slices/leading-dim concat are cheap, well-supported relayouts.)
    def split_heads(t):
        return jnp.concatenate(
            [t[:, h * dh:(h + 1) * dh].reshape(bt, n, dh)
             for h in range(num_heads)],
            axis=0).astype(jnp.bfloat16)

    qh, kh, vh = split_heads(q), split_heads(k), split_heads(v)

    # Batched attention over (head, set): 2 einsums instead of 8 tiny matmuls.
    s = jnp.einsum('bqd,bkd->bqk', qh, kh,
                   preferred_element_type=jnp.float32)       # (H*Bt, N, N) f32
    s = s - jnp.max(s, axis=-1, keepdims=True)
    p = jnp.exp(s)
    denom = jnp.sum(p, axis=-1, keepdims=True)
    a = p * pl.reciprocal(denom, approx=True)                # EUP reciprocal (free slot)
    oh = jnp.einsum('bqk,bkd->bqd', a.astype(jnp.bfloat16), vh,
                    preferred_element_type=jnp.float32)      # (H*Bt, N, dh) f32

    # Re-concatenate heads along the lane dim (PyTorch head order preserved).
    attn = jnp.concatenate(
        [oh[h * bt:(h + 1) * bt].reshape(m, dh) for h in range(num_heads)],
        axis=-1)                                             # (Bt*N, dim_v)

    o1 = q + attn                                            # residual on projected Q
    # TODO(synk): ln=True LayerNorm (ln0/ln1) path not implemented; module default is ln=False.
    ff = _mm(o1, wo_ref[...]) + bo_ref[...]                  # rFF: fc_o (M=Bt*N rows)
    out = o1 + jnp.maximum(ff, 0.0)                          # f32 epilogue
    o_ref[...] = out.reshape(bt, n, dim_v).astype(o_ref.dtype)   # bf16 writeback


def sab_forward(x, wq, wk, wv, wo, bq, bk, bv, bo, *, num_heads, block_b=8):
    """Fused SAB forward.  x: (B, N, dim_in) bf16; weights (in, out) bf16; biases f32.
    Returns (B, N, dim_V) bf16."""
    B, N, dim_in = x.shape
    dim_v = wq.shape[1]
    assert dim_v % num_heads == 0
    assert dim_v % 128 == 0, "keep dim_V lane-dense (multiple of 128)"

    bt = math.gcd(B, block_b)                    # sets per grid step (divides B)
    num_blocks = B // bt                         # keep even when possible (v7x 2 TCs)

    # Fused QKV weight / bias; biases stay f32 (epilogue f32 on all generations).
    wqkv = jnp.concatenate([wq, wk, wv], axis=1).astype(jnp.bfloat16)   # (dim_in, 3*dim_v)
    bqkv = jnp.concatenate([bq, bk, bv]).reshape(1, 3 * dim_v).astype(jnp.float32)
    bo2 = bo.reshape(1, dim_v).astype(jnp.float32)

    kernel = functools.partial(sab_kernel, num_heads=num_heads)

    return pl.pallas_call(
        kernel,
        out_shape=jax.ShapeDtypeStruct((B, N, dim_v), jnp.bfloat16),
        grid_spec=pltpu.PrefetchScalarGridSpec(
            num_scalar_prefetch=0,
            grid=(num_blocks,),                                   # Bt sets per step
            in_specs=[
                pl.BlockSpec((bt, N, dim_in), lambda b: (b, 0, 0)),   # X
                pl.BlockSpec((dim_in, 3 * dim_v), lambda b: (0, 0)),  # [Wq|Wk|Wv]
                pl.BlockSpec((dim_v, dim_v), lambda b: (0, 0)),       # Wo
                pl.BlockSpec((1, 3 * dim_v), lambda b: (0, 0)),       # [bq|bk|bv]
                pl.BlockSpec((1, dim_v), lambda b: (0, 0)),           # bo
            ],
            out_specs=pl.BlockSpec((bt, N, dim_v), lambda b: (b, 0, 0)),
        ),
        compiler_params=pltpu.CompilerParams(
            dimension_semantics=("parallel",),   # shard batch blocks across cores (v7x)
        ),
    )(x, wqkv, wo.astype(jnp.bfloat16), bqkv, bo2)


# --------------------------------------------------------------------------
# Pure-JAX reference (mirrors the kernel's bf16-operand / f32-accum numerics,
# exact softmax division).
# --------------------------------------------------------------------------
def sab_reference(x, wq, wk, wv, wo, bq, bk, bv, bo, *, num_heads):
    B, N, _ = x.shape
    dim_v = wq.shape[1]
    dh = dim_v // num_heads
    scale = 1.0 / math.sqrt(dim_v)
    bf = jnp.bfloat16

    xb = x.astype(bf)
    q = jnp.einsum('bnd,dk->bnk', xb, wq.astype(bf),
                   preferred_element_type=jnp.float32) + bq
    k = jnp.einsum('bnd,dk->bnk', xb, wk.astype(bf),
                   preferred_element_type=jnp.float32) + bk
    v = jnp.einsum('bnd,dk->bnk', xb, wv.astype(bf),
                   preferred_element_type=jnp.float32) + bv
    k = k * scale

    def heads(t):
        return t.reshape(B, N, num_heads, dh).transpose(0, 2, 1, 3).astype(bf)

    qh, kh, vh = heads(q), heads(k), heads(v)
    s = jnp.einsum('bhqd,bhkd->bhqk', qh, kh, preferred_element_type=jnp.float32)
    s = s - jnp.max(s, axis=-1, keepdims=True)
    p = jnp.exp(s)
    a = p / jnp.sum(p, axis=-1, keepdims=True)
    oh = jnp.einsum('bhqk,bhkd->bhqd', a.astype(bf), vh,
                    preferred_element_type=jnp.float32)
    attn = oh.transpose(0, 2, 1, 3).reshape(B, N, dim_v)

    o1 = q + attn
    ff = jnp.einsum('bnd,dk->bnk', o1.astype(bf), wo.astype(bf),
                    preferred_element_type=jnp.float32) + bo
    return o1 + jnp.maximum(ff, 0.0)          # f32


if __name__ == "__main__":
    key = jax.random.PRNGKey(0)
    ks = jax.random.split(key, 9)

    # 16 sets of 16 elements: dim_in=32, dim_V=128 (lane-dense), 4 heads (dh=32).
    # Bt=8 sets per grid step -> M=128 matmul rows, grid=(2,) (even, v7x-friendly).
    B, N = 16, 16
    dim_in, dim_out, num_heads = 32, 128, 4

    def init_linear(kw, kb, fan_in, fan_out):
        # PyTorch nn.Linear-style uniform(-1/sqrt(fan_in), 1/sqrt(fan_in)).
        bound = 1.0 / math.sqrt(fan_in)
        w = jax.random.uniform(kw, (fan_in, fan_out), jnp.float32, -bound, bound)
        bias = jax.random.uniform(kb, (fan_out,), jnp.float32, -bound, bound)
        return w.astype(jnp.bfloat16), bias                 # weight bf16, bias f32

    x = jax.random.normal(ks[0], (B, N, dim_in), jnp.float32).astype(jnp.bfloat16)
    wq, bq = init_linear(ks[1], ks[2], dim_in, dim_out)
    wk, bk = init_linear(ks[3], ks[4], dim_in, dim_out)
    wv, bv = init_linear(ks[5], ks[6], dim_in, dim_out)
    wo, bo = init_linear(ks[7], ks[8], dim_out, dim_out)

    y = sab_forward(x, wq, wk, wv, wo, bq, bk, bv, bo,
                    num_heads=num_heads, block_b=8)
    jax.block_until_ready(y)

    y_ref = sab_reference(x, wq, wk, wv, wo, bq, bk, bv, bo, num_heads=num_heads)
    assert y.shape == (B, N, dim_out)
    assert y.dtype == jnp.bfloat16
    max_err = float(jnp.max(jnp.abs(y.astype(jnp.float32) - y_ref)))
    assert jnp.allclose(y.astype(jnp.float32), y_ref, atol=3e-2, rtol=3e-2), max_err

    print("KERNEL_OK")
</pallas_src>

<mosaic_0001>
module attributes {stable_mosaic.version = 11 : i64} {
  func.func @sab_kernel(%arg0: i32, %arg1: memref<8x16x32xbf16, #tpu.memory_space<vmem>>, %arg2: memref<32x384xbf16, #tpu.memory_space<vmem>>, %arg3: memref<128x128xbf16, #tpu.memory_space<vmem>>, %arg4: memref<1x384xf32, #tpu.memory_space<vmem>>, %arg5: memref<1x128xf32, #tpu.memory_space<vmem>>, %arg6: memref<8x16x128xbf16, #tpu.memory_space<vmem>>) attributes {dimension_semantics = [#tpu.dimension_semantics<parallel>], iteration_bounds = array<i64: 2>, scalar_prefetch = 0 : i64, scratch_operands = 0 : i64, tpu.core_type = #tpu.core_type<tc>, window_params = [{transform_indices = @transform_0, window_bounds = array<i64: 8, 16, 32>}, {pipeline_mode = #tpu.pipeline_mode<synchronous>, transform_indices = @transform_1, window_bounds = array<i64: 32, 384>}, {pipeline_mode = #tpu.pipeline_mode<synchronous>, transform_indices = @transform_2, window_bounds = array<i64: 128, 128>}, {pipeline_mode = #tpu.pipeline_mode<synchronous>, transform_indices = @transform_3, window_bounds = array<i64: 1, 384>}, {pipeline_mode = #tpu.pipeline_mode<synchronous>, transform_indices = @transform_4, window_bounds = array<i64: 1, 128>}, {transform_indices = @transform_5, window_bounds = array<i64: 8, 16, 128>}]} {
    %c0 = arith.constant 0 : index
    %c0_0 = arith.constant 0 : index
    %c0_1 = arith.constant 0 : index
    %0 = vector.load %arg1[%c0, %c0_0, %c0_1] : memref<8x16x32xbf16, #tpu.memory_space<vmem>>, vector<8x16x32xbf16>
    %1 = vector.shape_cast %0 : vector<8x16x32xbf16> to vector<128x32xbf16>
    %c0_2 = arith.constant 0 : index
    %c0_3 = arith.constant 0 : index
    %2 = vector.load %arg2[%c0_2, %c0_3] : memref<32x384xbf16, #tpu.memory_space<vmem>>, vector<32x384xbf16>
    %cst = arith.constant dense<0.000000e+00> : vector<128x384xf32>
    %3 = tpu.matmul %1, %2, %cst {dimension_numbers = #tpu.dot_dimension_numbers<[1], [0], [0], [1], [0, 0, 1, 1], [], []>} : vector<128x32xbf16>, vector<32x384xbf16>, vector<128x384xf32> -> vector<128x384xf32>
    %c0_4 = arith.constant 0 : index
    %c0_5 = arith.constant 0 : index
    %4 = vector.load %arg4[%c0_4, %c0_5] : memref<1x384xf32, #tpu.memory_space<vmem>>, vector<1x384xf32>
    %5 = vector.broadcast %4 : vector<1x384xf32> to vector<128x384xf32>
    %6 = arith.addf %3, %5 : vector<128x384xf32>
    %7 = vector.extract_strided_slice %6 {offsets = [0, 0], sizes = [128, 128], strides = [1, 1]} : vector<128x384xf32> to vector<128x128xf32>
    %8 = vector.extract_strided_slice %6 {offsets = [0, 128], sizes = [128, 128], strides = [1, 1]} : vector<128x384xf32> to vector<128x128xf32>
    %cst_6 = arith.constant 0.0883883461 : f32
    %9 = vector.broadcast %cst_6 : f32 to vector<128x128xf32>
    %10 = arith.mulf %8, %9 : vector<128x128xf32>
    %11 = vector.extract_strided_slice %6 {offsets = [0, 256], sizes = [128, 128], strides = [1, 1]} : vector<128x384xf32> to vector<128x128xf32>
    %12 = vector.extract_strided_slice %7 {offsets = [0, 0], sizes = [128, 32], strides = [1, 1]} : vector<128x128xf32> to vector<128x32xf32>
    %13 = vector.shape_cast %12 : vector<128x32xf32> to vector<8x16x32xf32>
    %14 = vector.extract_strided_slice %7 {offsets = [0, 32], sizes = [128, 32], strides = [1, 1]} : vector<128x128xf32> to vector<128x32xf32>
    %15 = vector.shape_cast %14 : vector<128x32xf32> to vector<8x16x32xf32>
    %16 = vector.extract_strided_slice %7 {offsets = [0, 64], sizes = [128, 32], strides = [1, 1]} : vector<128x128xf32> to vector<128x32xf32>
    %17 = vector.shape_cast %16 : vector<128x32xf32> to vector<8x16x32xf32>
    %18 = vector.extract_strided_slice %7 {offsets = [0, 96], sizes = [128, 32], strides = [1, 1]} : vector<128x128xf32> to vector<128x32xf32>
    %19 = vector.shape_cast %18 : vector<128x32xf32> to vector<8x16x32xf32>
    %20 = tpu.concatenate %13, %15, %17, %19 in 0 : vector<8x16x32xf32>, vector<8x16x32xf32>, vector<8x16x32xf32>, vector<8x16x32xf32> -> vector<32x16x32xf32>
    %21 = arith.truncf %20 : vector<32x16x32xf32> to vector<32x16x32xbf16>
    %22 = vector.extract_strided_slice %10 {offsets = [0, 0], sizes = [128, 32], strides = [1, 1]} : vector<128x128xf32> to vector<128x32xf32>
    %23 = vector.shape_cast %22 : vector<128x32xf32> to vector<8x16x32xf32>
    %24 = vector.extract_strided_slice %10 {offsets = [0, 32], sizes = [128, 32], strides = [1, 1]} : vector<128x128xf32> to vector<128x32xf32>
    %25 = vector.shape_cast %24 : vector<128x32xf32> to vector<8x16x32xf32>
    %26 = vector.extract_strided_slice %10 {offsets = [0, 64], sizes = [128, 32], strides = [1, 1]} : vector<128x128xf32> to vector<128x32xf32>
    %27 = vector.shape_cast %26 : vector<128x32xf32> to vector<8x16x32xf32>
    %28 = vector.extract_strided_slice %10 {offsets = [0, 96], sizes = [128, 32], strides = [1, 1]} : vector<128x128xf32> to vector<128x32xf32>
    %29 = vector.shape_cast %28 : vector<128x32xf32> to vector<8x16x32xf32>
    %30 = tpu.concatenate %23, %25, %27, %29 in 0 : vector<8x16x32xf32>, vector<8x16x32xf32>, vector<8x16x32xf32>, vector<8x16x32xf32> -> vector<32x16x32xf32>
    %31 = arith.truncf %30 : vector<32x16x32xf32> to vector<32x16x32xbf16>
    %32 = vector.extract_strided_slice %11 {offsets = [0, 0], sizes = [128, 32], strides = [1, 1]} : vector<128x128xf32> to vector<128x32xf32>
    %33 = vector.shape_cast %32 : vector<128x32xf32> to vector<8x16x32xf32>
    %34 = vector.extract_strided_slice %11 {offsets = [0, 32], sizes = [128, 32], strides = [1, 1]} : vector<128x128xf32> to vector<128x32xf32>
    %35 = vector.shape_cast %34 : vector<128x32xf32> to vector<8x16x32xf32>
    %36 = vector.extract_strided_slice %11 {offsets = [0, 64], sizes = [128, 32], strides = [1, 1]} : vector<128x128xf32> to vector<128x32xf32>
    %37 = vector.shape_cast %36 : vector<128x32xf32> to vector<8x16x32xf32>
    %38 = vector.extract_strided_slice %11 {offsets = [0, 96], sizes = [128, 32], strides = [1, 1]} : vector<128x128xf32> to vector<128x32xf32>
    %39 = vector.shape_cast %38 : vector<128x32xf32> to vector<8x16x32xf32>
    %40 = tpu.concatenate %33, %35, %37, %39 in 0 : vector<8x16x32xf32>, vector<8x16x32xf32>, vector<8x16x32xf32>, vector<8x16x32xf32> -> vector<32x16x32xf32>
    %41 = arith.truncf %40 : vector<32x16x32xf32> to vector<32x16x32xbf16>
    "tpu.trace_start"() <{level = 10 : i32, message = "bqd,bkd->bqk"}> : () -> ()
    %cst_7 = arith.constant dense<0.000000e+00> : vector<32x16x16xf32>
    %42 = tpu.matmul %21, %31, %cst_7 {dimension_numbers = #tpu.dot_dimension_numbers<[2], [2], [1], [1], [0, 0, 0, 1, 1, 1], [0], [0]>} : vector<32x16x32xbf16>, vector<32x16x32xbf16>, vector<32x16x16xf32> -> vector<32x16x16xf32>
    "tpu.trace_stop"() : () -> ()
    %cst_8 = arith.constant dense<0xFF800000> : vector<32x16xf32>
    %43 = vector.multi_reduction <maximumf>, %42, %cst_8 [2] : vector<32x16x16xf32> to vector<32x16xf32>
    %44 = vector.shape_cast %43 : vector<32x16xf32> to vector<32x16x1xf32>
    %45 = vector.broadcast %44 : vector<32x16x1xf32> to vector<32x16x16xf32>
    %46 = arith.subf %42, %45 : vector<32x16x16xf32>
    %47 = math.exp %46 : vector<32x16x16xf32>
    %cst_9 = arith.constant dense<0.000000e+00> : vector<32x16xf32>
    %48 = vector.multi_reduction <add>, %47, %cst_9 [2] : vector<32x16x16xf32> to vector<32x16xf32>
    %49 = vector.shape_cast %48 : vector<32x16xf32> to vector<32x16x1xf32>
    %50 = tpu.reciprocal %49 {approx = true} : vector<32x16x1xf32> -> vector<32x16x1xf32>
    %51 = vector.broadcast %50 : vector<32x16x1xf32> to vector<32x16x16xf32>
    %52 = arith.mulf %47, %51 : vector<32x16x16xf32>
    %53 = arith.truncf %52 : vector<32x16x16xf32> to vector<32x16x16xbf16>
    "tpu.trace_start"() <{level = 10 : i32, message = "bqk,bkd->bqd"}> : () -> ()
    %cst_10 = arith.constant dense<0.000000e+00> : vector<32x16x32xf32>
    %54 = tpu.matmul %53, %41, %cst_10 {dimension_numbers = #tpu.dot_dimension_numbers<[2], [1], [1], [2], [0, 0, 0, 1, 1, 2], [0], [0]>} : vector<32x16x16xbf16>, vector<32x16x32xbf16>, vector<32x16x32xf32> -> vector<32x16x32xf32>
    "tpu.trace_stop"() : () -> ()
    %55 = vector.extract_strided_slice %54 {offsets = [0, 0, 0], sizes = [8, 16, 32], strides = [1, 1, 1]} : vector<32x16x32xf32> to vector<8x16x32xf32>
    %56 = vector.shape_cast %55 : vector<8x16x32xf32> to vector<128x32xf32>
    %57 = vector.extract_strided_slice %54 {offsets = [8, 0, 0], sizes = [8, 16, 32], strides = [1, 1, 1]} : vector<32x16x32xf32> to vector<8x16x32xf32>
    %58 = vector.shape_cast %57 : vector<8x16x32xf32> to vector<128x32xf32>
    %59 = vector.extract_strided_slice %54 {offsets = [16, 0, 0], sizes = [8, 16, 32], strides = [1, 1, 1]} : vector<32x16x32xf32> to vector<8x16x32xf32>
    %60 = vector.shape_cast %59 : vector<8x16x32xf32> to vector<128x32xf32>
    %61 = vector.extract_strided_slice %54 {offsets = [24, 0, 0], sizes = [8, 16, 32], strides = [1, 1, 1]} : vector<32x16x32xf32> to vector<8x16x32xf32>
    %62 = vector.shape_cast %61 : vector<8x16x32xf32> to vector<128x32xf32>
    %63 = tpu.concatenate %56, %58, %60, %62 in 1 : vector<128x32xf32>, vector<128x32xf32>, vector<128x32xf32>, vector<128x32xf32> -> vector<128x128xf32>
    %64 = arith.addf %7, %63 : vector<128x128xf32>
    %c0_11 = arith.constant 0 : index
    %c0_12 = arith.constant 0 : index
    %65 = vector.load %arg3[%c0_11, %c0_12] : memref<128x128xbf16, #tpu.memory_space<vmem>>, vector<128x128xbf16>
    %66 = arith.truncf %64 : vector<128x128xf32> to vector<128x128xbf16>
    %cst_13 = arith.constant dense<0.000000e+00> : vector<128x128xf32>
    %67 = tpu.matmul %66, %65, %cst_13 {dimension_numbers = #tpu.dot_dimension_numbers<[1], [0], [0], [1], [0, 0, 1, 1], [], []>} : vector<128x128xbf16>, vector<128x128xbf16>, vector<128x128xf32> -> vector<128x128xf32>
    %c0_14 = arith.constant 0 : index
    %c0_15 = arith.constant 0 : index
    %68 = vector.load %arg5[%c0_14, %c0_15] : memref<1x128xf32, #tpu.memory_space<vmem>>, vector<1x128xf32>
    %69 = vector.broadcast %68 : vector<1x128xf32> to vector<128x128xf32>
    %70 = arith.addf %67, %69 : vector<128x128xf32>
    %cst_16 = arith.constant 0.000000e+00 : f32
    %71 = vector.broadcast %cst_16 : f32 to vector<128x128xf32>
    %72 = arith.maximumf %70, %71 : vector<128x128xf32>
    %73 = arith.addf %64, %72 : vector<128x128xf32>
    %74 = vector.shape_cast %73 : vector<128x128xf32> to vector<8x16x128xf32>
    %75 = arith.truncf %74 : vector<8x16x128xf32> to vector<8x16x128xbf16>
    %c0_17 = arith.constant 0 : index
    %c0_18 = arith.constant 0 : index
    %c0_19 = arith.constant 0 : index
    %76 = vector.load %arg6[%c0_17, %c0_18, %c0_19] : memref<8x16x128xbf16, #tpu.memory_space<vmem>>, vector<8x16x128xbf16>
    tpu.vector_store %arg6[%c0_17, %c0_18, %c0_19], %75 {strides = array<i32>} : memref<8x16x128xbf16, #tpu.memory_space<vmem>>, vector<8x16x128xbf16>,
    return
  }
  func.func @transform_0(%arg0: i32) -> (i32, i32, i32) {
    %c0_i32 = arith.constant 0 : i32
    %c0_i32_0 = arith.constant 0 : i32
    %c0_i32_1 = arith.constant 0 : i32
    return %arg0, %c0_i32, %c0_i32_0 : i32, i32, i32
  }
  func.func @transform_1(%arg0: i32) -> (i32, i32) {
    %c0_i32 = arith.constant 0 : i32
    %c0_i32_0 = arith.constant 0 : i32
    %c0_i32_1 = arith.constant 0 : i32
    return %c0_i32, %c0_i32_0 : i32, i32
  }
  func.func @transform_2(%arg0: i32) -> (i32, i32) {
    %c0_i32 = arith.constant 0 : i32
    %c0_i32_0 = arith.constant 0 : i32
    %c0_i32_1 = arith.constant 0 : i32
    return %c0_i32, %c0_i32_0 : i32, i32
  }
  func.func @transform_3(%arg0: i32) -> (i32, i32) {
    %c0_i32 = arith.constant 0 : i32
    %c0_i32_0 = arith.constant 0 : i32
    %c0_i32_1 = arith.constant 0 : i32
    return %c0_i32, %c0_i32_0 : i32, i32
  }
  func.func @transform_4(%arg0: i32) -> (i32, i32) {
    %c0_i32 = arith.constant 0 : i32
    %c0_i32_0 = arith.constant 0 : i32
    %c0_i32_1 = arith.constant 0 : i32
    return %c0_i32, %c0_i32_0 : i32, i32
  }
  func.func @transform_5(%arg0: i32) -> (i32, i32, i32) {
    %c0_i32 = arith.constant 0 : i32
    %c0_i32_0 = arith.constant 0 : i32
    %c0_i32_1 = arith.constant 0 : i32
    return %arg0, %c0_i32, %c0_i32_0 : i32, i32, i32
  }
}

</mosaic_0001>

<llo_original>
// kernel: tpu_custom_call.1
$region0: #{tpu_custom_call.1}
  #allocation0 [shape = 'u32[]', space=smem, size = 0x4, offset = 0x4, fixed_abs, tag = 'smem constant byte address 0x4 - core index']
  #allocation1 [shape = 'u32[72,128]{1,0:T(1,128)}', space=vmem, size = 0x9000, scoped, tag = 'internal scratch']
  %s0 = inlined_call_operand.hbm [shape: bf16[16,16,32], index: 0, kind: input, shape index: {}]
  %s1 = inlined_call_operand.hbm [shape: bf16[32,384], index: 1, kind: input, shape index: {}]
  %s2 = inlined_call_operand.hbm [shape: bf16[128,128], index: 2, kind: input, shape index: {}]
  %s3 = inlined_call_operand.hbm [shape: f32[1,384], index: 3, kind: input, shape index: {}]
  %s4 = inlined_call_operand.vmem [shape: f32[1,128], index: 4, kind: input, shape index: {}]
  %s5 = inlined_call_operand.hbm [shape: bf16[16,16,128], index: 5, kind: output, shape index: {}]
  %s6 = sld [smem:[#allocation0]]
  $region69: #{tpu_custom_call.1} parent=0
    _
  %s8 = ssub.s32 1, %s6
  %s9 = scalar_select 0, %s8, %s6
  $region1: #{tpu_custom_call.1} parent=0
    #allocation2 [shape = 'u8[65536]{0}', space=vmem, size = 0x10000, scoped, tag = 'input window, operand 0']
    #allocation3 [shape = 's32[2]{0}', space=sflag, size = 0x8, scoped, tag = 'scoped memory for tpu_custom_call.1']
    #allocation4 [shape = 's32[2]{0}', space=sflag, size = 0x8, scoped, tag = 'scoped memory for tpu_custom_call.1']
    #allocation5 [shape = 'u8[24576]{0}', space=vmem, size = 0x6000, scoped, tag = 'input window, operand 1, single buffered']
    #allocation6 [shape = 's32[1]{0}', space=sflag, size = 0x4, scoped, tag = 'scoped memory for tpu_custom_call.1']
    #allocation7 [shape = 'u8[32768]{0}', space=vmem, size = 0x8000, scoped, tag = 'input window, operand 2, single buffered']
    #allocation8 [shape = 'u8[1536]{0}', space=vmem, size = 0x800, scoped, tag = 'input window, operand 3, single buffered']
    #allocation9 [shape = 's32[1]{0}', space=sflag, size = 0x4, scoped, tag = 'scoped memory for tpu_custom_call.1']
    #allocation10 [shape = 'u8[65536]{0}', space=vmem, size = 0x10000, scoped, tag = 'output window, operand 0']
    %10 = vsyncpa [#allocation3], 0
    %s11 = scalar_lea.sflag [#allocation3], 1
    %12 = vsyncpa %s11, 0
    %13 = vsyncpa [#allocation6], 0
    %14 = vsyncpa [#allocation9], 0
    %15 = vsyncpa [#allocation4], 0
    %s16 = scalar_lea.sflag [#allocation4], 1
    %17 = vsyncpa %s16, 0
    loop: start=0, step=1, limit=4
    $region2: #{tpu_custom_call.1} parent=1 // loop_pre_header
      _
    $region3: #{tpu_custom_call.1} parent=1 // loop_header
      %s19 = sphi 0, %s23
      %p20 = scmp.ge.s32.totalorder %s19, 4
      %s29 = sphi 0, %s31
      %s32 = sphi 0, %s29
      %s33 = sphi 0, %s32
      %s49 = sphi 0, %s33
      %s53 = sphi 0, %s53
      %s55 = sphi 0, %s53
      %s56 = sphi 0, %s55
      %s70 = sphi 0, %s56
      %s74 = sphi 0, %s74
      %s76 = sphi 0, %s74
      %s77 = sphi 0, %s76
      %s91 = sphi 0, %s77
      %s95 = sphi 0, %s95
      %s97 = sphi 0, %s95
      %s98 = sphi 0, %s97
      %s112 = sphi 0, %s98
      %s116 = sphi 0, %s116
      %s118 = sphi 0, %s116
      %s119 = sphi 0, %s118
      %s133 = sphi 0, %s119
      %s139 = sphi 0, %s141
      %s142 = sphi 0, %s139
      %s143 = sphi 0, %s142
      %s159 = sphi 0, %s143
    $region4: #{tpu_custom_call.1} parent=1 // loop_header_branch
      %22 = sbr.rel (%p20) target = $region8
    $region5: #{tpu_custom_call.1} parent=1 // loop_body
      %s24 = ssub.s32 %s19, 1
      %s25 = ssub.s32 %s19, 2
      %s26 = sadd.s32 %s19, 1
      %s27 = ssub.s32 %s19, %s26
      %p28 = scmp.eq.s32.totalorder %s27, 0
      %s30 = sadd.s32 %s29, 1
      %s31 = scalar_select %p28, %s29, %s30
      %p34 = pneg %p28
      %p35 = scmp.eq.s32.totalorder %s19, 1
      %p36 = por %p34, %p35
      %p37 = scmp.ne.s32.totalorder %s29, %s32
      %p38 = scmp.eq.s32.totalorder %s19, 0
      %p39 = por %p37, %p38
      %p40 = scmp.ne.s32.totalorder %s29, %s32
      %p41 = scmp.eq.s32.totalorder %s24, 1
      %p42 = por %p40, %p41
      %p43 = scmp.ne.s32.totalorder %s32, %s33
      %p44 = scmp.eq.s32.totalorder %s24, 0
      %p45 = por %p43, %p44
      %p46 = scmp.ne.s32.totalorder %s32, %s33
      %p47 = scmp.eq.s32.totalorder %s25, 1
      %p48 = por %p46, %p47
      %p50 = scmp.ne.s32.totalorder %s33, %s49
      %p51 = scmp.eq.s32.totalorder %s25, 0
      %p52 = por %p50, %p51
      %s54 = sadd.s32 %s53, 1
      %p57 = scmp.eq.s32.totalorder %s19, 1
      %p58 = scmp.ne.s32.totalorder %s53, %s55
      %p59 = scmp.eq.s32.totalorder %s19, 0
      %p60 = por %p58, %p59
      %p61 = scmp.ne.s32.totalorder %s53, %s55
      %p62 = scmp.eq.s32.totalorder %s24, 1
      %p63 = por %p61, %p62
      %p64 = scmp.ne.s32.totalorder %s55, %s56
      %p65 = scmp.eq.s32.totalorder %s24, 0
      %p66 = por %p64, %p65
      %p67 = scmp.ne.s32.totalorder %s55, %s56
      %p68 = scmp.eq.s32.totalorder %s25, 1
      %p69 = por %p67, %p68
      %p71 = scmp.ne.s32.totalorder %s56, %s70
      %p72 = scmp.eq.s32.totalorder %s25, 0
      %p73 = por %p71, %p72
      %s75 = sadd.s32 %s74, 1
      %p78 = scmp.eq.s32.totalorder %s19, 1
      %p79 = scmp.ne.s32.totalorder %s74, %s76
      %p80 = scmp.eq.s32.totalorder %s19, 0
      %p81 = por %p79, %p80
      %p82 = scmp.ne.s32.totalorder %s74, %s76
      %p83 = scmp.eq.s32.totalorder %s24, 1
      %p84 = por %p82, %p83
      %p85 = scmp.ne.s32.totalorder %s76, %s77
      %p86 = scmp.eq.s32.totalorder %s24, 0
      %p87 = por %p85, %p86
      %p88 = scmp.ne.s32.totalorder %s76, %s77
      %p89 = scmp.eq.s32.totalorder %s25, 1
      %p90 = por %p88, %p89
      %p92 = scmp.ne.s32.totalorder %s77, %s91
      %p93 = scmp.eq.s32.totalorder %s25, 0
      %p94 = por %p92, %p93
      %s96 = sadd.s32 %s95, 1
      %p99 = scmp.eq.s32.totalorder %s19, 1
      %p100 = scmp.ne.s32.totalorder %s95, %s97
      %p101 = scmp.eq.s32.totalorder %s19, 0
      %p102 = por %p100, %p101
      %p103 = scmp.ne.s32.totalorder %s95, %s97
      %p104 = scmp.eq.s32.totalorder %s24, 1
      %p105 = por %p103, %p104
      %p106 = scmp.ne.s32.totalorder %s97, %s98
      %p107 = scmp.eq.s32.totalorder %s24, 0
      %p108 = por %p106, %p107
      %p109 = scmp.ne.s32.totalorder %s97, %s98
      %p110 = scmp.eq.s32.totalorder %s25, 1
      %p111 = por %p109, %p110
      %p113 = scmp.ne.s32.totalorder %s98, %s112
      %p114 = scmp.eq.s32.totalorder %s25, 0
      %p115 = por %p113, %p114
      %s117 = sadd.s32 %s116, 1
      %p120 = scmp.eq.s32.totalorder %s19, 1
      %p121 = scmp.ne.s32.totalorder %s116, %s118
      %p122 = scmp.eq.s32.totalorder %s19, 0
      %p123 = por %p121, %p122
      %p124 = scmp.ne.s32.totalorder %s116, %s118
      %p125 = scmp.eq.s32.totalorder %s24, 1
      %p126 = por %p124, %p125
      %p127 = scmp.ne.s32.totalorder %s118, %s119
      %p128 = scmp.eq.s32.totalorder %s24, 0
      %p129 = por %p127, %p128
      %p130 = scmp.ne.s32.totalorder %s118, %s119
      %p131 = scmp.eq.s32.totalorder %s25, 1
      %p132 = por %p130, %p131
      %p134 = scmp.ne.s32.totalorder %s119, %s133
      %p135 = scmp.eq.s32.totalorder %s25, 0
      %p136 = por %p134, %p135
      %s137 = ssub.s32 %s19, %s26
      %p138 = scmp.eq.s32.totalorder %s137, 0
      %s140 = sadd.s32 %s139, 1
      %s141 = scalar_select %p138, %s139, %s140
      %p144 = pneg %p138
      %p145 = scmp.eq.s32.totalorder %s19, 1
      %p146 = por %p144, %p145
      %p147 = scmp.ne.s32.totalorder %s139, %s142
      %p148 = scmp.eq.s32.totalorder %s19, 0
      %p149 = por %p147, %p148
      %p150 = scmp.ne.s32.totalorder %s139, %s142
      %p151 = scmp.eq.s32.totalorder %s24, 1
      %p152 = por %p150, %p151
      %p153 = scmp.ne.s32.totalorder %s142, %s143
      %p154 = scmp.eq.s32.totalorder %s24, 0
      %p155 = por %p153, %p154
      %p156 = scmp.ne.s32.totalorder %s142, %s143
      %p157 = scmp.eq.s32.totalorder %s25, 1
      %p158 = por %p156, %p157
      %p160 = scmp.ne.s32.totalorder %s143, %s159
      %p161 = scmp.eq.s32.totalorder %s25, 0
      %p162 = por %p160, %p161
      %p163 = scmp.le.s32.totalorder 1, %s19
      %p164 = scmp.lt.s32.totalorder %s19, 3
      %p165 = pnand %p163, %p164
      %p166 = pneg %p165
      // Predicated region
      $region9: #{tpu_custom_call.1} parent=5 // pred_check
        _
      $region10: #{tpu_custom_call.1} parent=5 // pred_check_branch
        %168 = sbr.rel (%p165) target = $region12
      $region11: #{tpu_custom_call.1} parent=5 // pred_region
        %s169 = ssub.s32 %s19, 1
        // Predicated region
        $region13: #{tpu_custom_call.1} parent=11 // pred_check
          %p170 = pneg %p66
        $region14: #{tpu_custom_call.1} parent=11 // pred_check_branch
          %172 = sbr.rel (%p170) target = $region16
        $region15: #{tpu_custom_call.1} parent=11 // pred_region
          %174 = vsyncadd [#allocation6], 0
          %s175 = sshll.u32 %s1, 4
          %s176 = int_to_ptr.hbm [resolvable:$true] %s175
          %s177 = sshll.u32 [#allocation5], 4
          %s178 = int_to_ptr.vmem [resolvable:$true] %s177
          %183 = dma.hbm_to_vmem [thread:$0]  %s176, 768, %s178, [#allocation6], 192, 192, 12
        $region16: #{tpu_custom_call.1} parent=11 // pred_fallthru
          _
        // Predicated region
        $region17: #{tpu_custom_call.1} parent=11 // pred_check
          %p184 = pneg %p87
        $region18: #{tpu_custom_call.1} parent=11 // pred_check_branch
          %186 = sbr.rel (%p184) target = $region20
        $region19: #{tpu_custom_call.1} parent=11 // pred_region
          %188 = vsyncadd [#allocation6], 0
          %s189 = sshll.u32 %s2, 4
          %s190 = int_to_ptr.hbm [resolvable:$true] %s189
          %s191 = sshll.u32 [#allocation7], 4
          %s192 = int_to_ptr.vmem [resolvable:$true] %s191
          %197 = dma.hbm_to_vmem [thread:$0]  %s190, 1024, %s192, [#allocation6], 64, 64, 4
        $region20: #{tpu_custom_call.1} parent=11 // pred_fallthru
          _
        // Predicated region
        $region21: #{tpu_custom_call.1} parent=11 // pred_check
          %p198 = pneg %p108
        $region22: #{tpu_custom_call.1} parent=11 // pred_check_branch
          %200 = sbr.rel (%p198) target = $region24
        $region23: #{tpu_custom_call.1} parent=11 // pred_region
          %202 = vsyncadd [#allocation9], 0
          %s204 = sshll.u32 %s3, 4
          %s205 = int_to_ptr.hbm [resolvable:$true] %s204
          %s206 = sshll.u32 [#allocation8], 4
          %s207 = int_to_ptr.vmem [resolvable:$true] %s206
          %209 = dma.hbm_to_vmem [thread:$0]  %s205, 48, %s207, [#allocation9]
        $region24: #{tpu_custom_call.1} parent=11 // pred_fallthru
          _
        // Predicated region
        $region25: #{tpu_custom_call.1} parent=11 // pred_check
          %p210 = pneg %p129
        $region26: #{tpu_custom_call.1} parent=11 // pred_check_branch
          %212 = sbr.rel (%p210) target = $region28
        $region27: #{tpu_custom_call.1} parent=11 // pred_region
          _
        $region28: #{tpu_custom_call.1} parent=11 // pred_fallthru
          _
      $region12: #{tpu_custom_call.1} parent=5 // pred_fallthru
        _
      %p213 = scmp.lt.s32.totalorder %s19, 2
      // Predicated region
      $region29: #{tpu_custom_call.1} parent=5 // pred_check
        %p214 = pneg %p213
      $region30: #{tpu_custom_call.1} parent=5 // pred_check_branch
        %216 = sbr.rel (%p214) target = $region32
      $region31: #{tpu_custom_call.1} parent=5 // pred_region
        // Predicated region
        $region33: #{tpu_custom_call.1} parent=31 // pred_check
          %p217 = pneg %p39
        $region34: #{tpu_custom_call.1} parent=31 // pred_check_branch
          %219 = sbr.rel (%p217) target = $region36
        $region35: #{tpu_custom_call.1} parent=31 // pred_region
          %s220 = sand.u32 %s29, 1
          %s221 = scalar_lea.sflag [#allocation3], %s220
          %s222 = sand.u32 %s29, 1
          %s223 = smul.addr %s222, 64
          %s224 = scalar_lea.vmem [#allocation2], %s223
          %s225 = smul.u32 8, %s19
          %227 = vsyncadd %s221, 0
          %s228 = smul.addr %s225, 2
          %s229 = smul.addr %s228, 4
          %s230 = scalar_lea.hbm %s0, %s229
          %s231 = sshll.u32 %s230, 4
          %s232 = int_to_ptr.hbm [resolvable:$true] %s231
          %s233 = sshll.u32 %s224, 4
          %s234 = int_to_ptr.vmem [resolvable:$true] %s233
          %239 = dma.hbm_to_vmem [thread:$0]  %s232, 1024, %s234, %s221, 64, 64, 4
        $region36: #{tpu_custom_call.1} parent=31 // pred_fallthru
          _
      $region32: #{tpu_custom_call.1} parent=5 // pred_fallthru
        _
      %p240 = scmp.le.s32.totalorder 1, %s19
      %p241 = scmp.lt.s32.totalorder %s19, 3
      %p242 = pnand %p240, %p241
      %p243 = pneg %p242
      // Predicated region
      $region37: #{tpu_custom_call.1} parent=5 // pred_check
        _
      $region38: #{tpu_custom_call.1} parent=5 // pred_check_branch
        %245 = sbr.rel (%p242) target = $region40
      $region39: #{tpu_custom_call.1} parent=5 // pred_region
        %s246 = ssub.s32 %s19, 1
        %s247 = sand.u32 %s32, 1
        %s248 = scalar_lea.sflag [#allocation3], %s247
        %s249 = sand.u32 %s32, 1
        %s250 = smul.addr %s249, 64
        %s251 = scalar_lea.vmem [#allocation2], %s250
        // Predicated region
        $region41: #{tpu_custom_call.1} parent=39 // pred_check
          %p252 = pneg %p45
        $region42: #{tpu_custom_call.1} parent=39 // pred_check_branch
          %254 = sbr.rel (%p252) target = $region44
        $region43: #{tpu_custom_call.1} parent=39 // pred_region
          %256 = dma.done %s248, 1024
        $region44: #{tpu_custom_call.1} parent=39 // pred_fallthru
          _
        // Predicated region
        $region45: #{tpu_custom_call.1} parent=39 // pred_check
          %p257 = pneg %p66
        $region46: #{tpu_custom_call.1} parent=39 // pred_check_branch
          %259 = sbr.rel (%p257) target = $region48
        $region47: #{tpu_custom_call.1} parent=39 // pred_region
          %261 = dma.done [#allocation6], 768
        $region48: #{tpu_custom_call.1} parent=39 // pred_fallthru
          _
        // Predicated region
        $region49: #{tpu_custom_call.1} parent=39 // pred_check
          %p262 = pneg %p87
        $region50: #{tpu_custom_call.1} parent=39 // pred_check_branch
          %264 = sbr.rel (%p262) target = $region52
        $region51: #{tpu_custom_call.1} parent=39 // pred_region
          %266 = dma.done [#allocation6], 1024
        $region52: #{tpu_custom_call.1} parent=39 // pred_fallthru
          _
        // Predicated region
        $region53: #{tpu_custom_call.1} parent=39 // pred_check
          %p267 = pneg %p108
        $region54: #{tpu_custom_call.1} parent=39 // pred_check_branch
          %269 = sbr.rel (%p267) target = $region56
        $region55: #{tpu_custom_call.1} parent=39 // pred_region
          %271 = dma.done [#allocation9], 48
        $region56: #{tpu_custom_call.1} parent=39 // pred_fallthru
          _
        %s272 = sand.u32 %s32, 1
        %s273 = scalar_lea.sflag [#allocation3], %s272
        %s274 = sand.u32 %s32, 1
        %s275 = smul.addr %s274, 64
        %s276 = scalar_lea.vmem [#allocation2], %s275
        %p277 = pneg %p45
        %p278 = pneg %p42
        %p279 = pneg %p66
        %p280 = pneg %p63
        %p281 = pneg %p87
        %p282 = pneg %p84
        %p283 = pneg %p108
        %p284 = pneg %p105
        %p285 = pneg %p129
        %p286 = pneg %p126
        %p287 = pneg %p155
        %p288 = pneg %p152
        %s289 = sand.u32 %s142, 1
        %s290 = scalar_lea.sflag [#allocation4], %s289
        %s291 = sand.u32 %s142, 1
        %s292 = smul.addr %s291, 64
        %s293 = scalar_lea.vmem [#allocation10], %s292
        %s294 = smul.u32 8, %s24
        %s295 = smul.u32 8, %s24
        %v297 = vld [vmem:[%s251] sm:$0xf]
        %v298 = vld [vmem:[%s251 + $0x4] sm:$0xf]
        %v299 = vld [vmem:[%s251 + $0x8] sm:$0xf]
        %v300 = vld [vmem:[%s251 + $0xc] sm:$0xf]
        %v301 = vld [vmem:[%s251 + $0x10] sm:$0xf]
        %v302 = vld [vmem:[%s251 + $0x14] sm:$0xf]
        %v303 = vld [vmem:[%s251 + $0x18] sm:$0xf]
        %v304 = vld [vmem:[%s251 + $0x1c] sm:$0xf]
        %v305 = vld [vmem:[%s251 + $0x20] sm:$0xf]
        %v306 = vld [vmem:[%s251 + $0x24] sm:$0xf]
        %v307 = vld [vmem:[%s251 + $0x28] sm:$0xf]
        %v308 = vld [vmem:[%s251 + $0x2c] sm:$0xf]
        %v309 = vld [vmem:[%s251 + $0x30] sm:$0xf]
        %v310 = vld [vmem:[%s251 + $0x34] sm:$0xf]
        %v311 = vld [vmem:[%s251 + $0x38] sm:$0xf]
        %v312 = vld [vmem:[%s251 + $0x3c] sm:$0xf]
        %v313 = vld [vmem:[#allocation5] sm:$0xff]
        %v314 = vld [vmem:[#allocation5 + $0x8] sm:$0xf]
        %v315 = vld [vmem:[#allocation5 + $0xc] sm:$0xff]
        %v316 = vld [vmem:[#allocation5 + $0x14] sm:$0xf]
        %v317 = vld [vmem:[#allocation5 + $0x18] sm:$0xff]
        %v318 = vld [vmem:[#allocation5 + $0x20] sm:$0xf]
        %v319 = vld [vmem:[#allocation5 + $0x24] sm:$0xff]
        %v320 = vld [vmem:[#allocation5 + $0x2c] sm:$0xf]
        %v321 = vld [vmem:[#allocation8] sm:$0x7]
        %v323 = vperm.slane %v321, 0
        %v324 = vperm.slane %v321, 1
        %v325 = vperm.slane %v321, 2
        %v345 = vunpack.c.l.b16 %v297
        %v346 = vunpack.c.l.b16 %v298
        %v347 = vunpack.c.l.b16 %v299
        %v348 = vunpack.c.l.b16 %v300
        %v349 = vunpack.c.l.b16 %v301
        %v350 = vunpack.c.l.b16 %v302
        %v351 = vunpack.c.l.b16 %v303
        %v352 = vunpack.c.l.b16 %v304
        %v353 = vunpack.c.l.b16 %v305
        %v354 = vunpack.c.l.b16 %v306
        %v355 = vunpack.c.l.b16 %v307
        %v356 = vunpack.c.l.b16 %v308
        %v357 = vunpack.c.l.b16 %v309
        %v358 = vunpack.c.l.b16 %v310
        %v359 = vunpack.c.l.b16 %v311
        %v360 = vunpack.c.l.b16 %v312
        %v361 = vpack.c.b16 %v346, %v345
        %v362 = vpack.c.b16 %v348, %v347
        %v363 = vpack.c.b16 %v350, %v349
        %v364 = vpack.c.b16 %v352, %v351
        %v365 = vpack.c.b16 %v354, %v353
        %v366 = vpack.c.b16 %v356, %v355
        %v367 = vpack.c.b16 %v358, %v357
        %v368 = vpack.c.b16 %v360, %v359
        %v377 = vunpack.c.l.b16 %v313
        %v378 = vunpack.c.h.b16 %v313
        %v379 = vunpack.c.l.b16 %v314
        %v380 = vunpack.c.l.b16 %v315
        %v381 = vunpack.c.h.b16 %v315
        %v382 = vunpack.c.l.b16 %v316
        %v383 = vunpack.c.l.b16 %v317
        %v384 = vunpack.c.h.b16 %v317
        %v385 = vunpack.c.l.b16 %v318
        %v386 = vunpack.c.l.b16 %v319
        %v387 = vunpack.c.h.b16 %v319
        %v388 = vunpack.c.l.b16 %v320
        %v389 = vpack.c.b16 %v380, %v377
        %v390 = vpack.c.b16 %v381, %v378
        %v391 = vpack.c.b16 %v382, %v379
        %v392 = vpack.c.b16 %v386, %v383
        %v393 = vpack.c.b16 %v387, %v384
        %v394 = vpack.c.b16 %v388, %v385
        %vm401 = vcmask 261120
        %v403 = vsel %vm401, %v361, 0
        %v406 = vsel %vm401, %v362, 0
        %v409 = vsel %vm401, %v363, 0
        %v412 = vsel %vm401, %v364, 0
        %v415 = vsel %vm401, %v365, 0
        %v418 = vsel %vm401, %v366, 0
        %v421 = vsel %vm401, %v367, 0
        %v424 = vsel %vm401, %v368, 0
        %426 = vmatpush.bf16.msra.mxu0 0
        %427 = vmatpush.bf16.msra.mxu0 0
        %428 = vmatpush.bf16.msra.mxu0 0
        %429 = vmatpush.bf16.msra.mxu0 0
        %430 = vmatpush.bf16.msra.mxu0 0
        %431 = vmatpush.bf16.msra.mxu0 0
        %432 = vmatpush.bf16.msra.mxu0 %v392
        %433 = vmatpush.bf16.msra.mxu0 %v389
        %434 = vmatmul.bf16.gmra.mxu0 %v403
        %v435 = vpop.f32.mrf.mxu0
        %v436 = vadd.f32 %v323, %v435
        %v437 = vpop.f32.mrf.mxu0
        %v438 = vadd.f32 %v323, %v437
        %439 = vmatmul.bf16.gmra.mxu0 %v406
        %v440 = vpop.f32.mrf.mxu0
        %v441 = vadd.f32 %v323, %v440
        %v442 = vpop.f32.mrf.mxu0
        %v443 = vadd.f32 %v323, %v442
        %444 = vmatmul.bf16.gmra.mxu0 %v409
        %v445 = vpop.f32.mrf.mxu0
        %v446 = vadd.f32 %v323, %v445
        %v447 = vpop.f32.mrf.mxu0
        %v448 = vadd.f32 %v323, %v447
        %449 = vmatmul.bf16.gmra.mxu0 %v412
        %v450 = vpop.f32.mrf.mxu0
        %v451 = vadd.f32 %v323, %v450
        %v452 = vpop.f32.mrf.mxu0
        %v453 = vadd.f32 %v323, %v452
        %454 = vmatmul.bf16.gmra.mxu0 %v415
        %v455 = vpop.f32.mrf.mxu0
        %v456 = vadd.f32 %v323, %v455
        %v457 = vpop.f32.mrf.mxu0
        %v458 = vadd.f32 %v323, %v457
        %459 = vmatmul.bf16.gmra.mxu0 %v418
        %v460 = vpop.f32.mrf.mxu0
        %v461 = vadd.f32 %v323, %v460
        %v462 = vpop.f32.mrf.mxu0
        %v463 = vadd.f32 %v323, %v462
        %464 = vmatmul.bf16.gmra.mxu0 %v421
        %v465 = vpop.f32.mrf.mxu0
        %v466 = vadd.f32 %v323, %v465
        %v467 = vpop.f32.mrf.mxu0
        %v468 = vadd.f32 %v323, %v467
        %469 = vmatmul.bf16.gmra.mxu0 %v424
        %v470 = vpop.f32.mrf.mxu0
        %v471 = vadd.f32 %v323, %v470
        %v472 = vpop.f32.mrf.mxu0
        %v473 = vadd.f32 %v323, %v472
        %474 = vdwg.mxu0
        %475 = vmatpush.bf16.msra.mxu0 0
        %476 = vmatpush.bf16.msra.mxu0 0
        %477 = vmatpush.bf16.msra.mxu0 0
        %478 = vmatpush.bf16.msra.mxu0 0
        %479 = vmatpush.bf16.msra.mxu0 0
        %480 = vmatpush.bf16.msra.mxu0 0
        %481 = vmatpush.bf16.msra.mxu0 %v393
        %482 = vmatpush.bf16.msra.mxu0 %v390
        %483 = vmatmul.bf16.gmra.mxu0 %v403
        %v484 = vpop.f32.mrf.mxu0
        %v485 = vadd.f32 %v324, %v484
        %v486 = vpop.f32.mrf.mxu0
        %v487 = vadd.f32 %v324, %v486
        %488 = vmatmul.bf16.gmra.mxu0 %v406
        %v489 = vpop.f32.mrf.mxu0
        %v490 = vadd.f32 %v324, %v489
        %v491 = vpop.f32.mrf.mxu0
        %v492 = vadd.f32 %v324, %v491
        %493 = vmatmul.bf16.gmra.mxu0 %v409
        %v494 = vpop.f32.mrf.mxu0
        %v495 = vadd.f32 %v324, %v494
        %v496 = vpop.f32.mrf.mxu0
        %v497 = vadd.f32 %v324, %v496
        %498 = vmatmul.bf16.gmra.mxu0 %v412
        %v499 = vpop.f32.mrf.mxu0
        %v500 = vadd.f32 %v324, %v499
        %v501 = vpop.f32.mrf.mxu0
        %v502 = vadd.f32 %v324, %v501
        %503 = vmatmul.bf16.gmra.mxu0 %v415
        %v504 = vpop.f32.mrf.mxu0
        %v505 = vadd.f32 %v324, %v504
        %v506 = vpop.f32.mrf.mxu0
        %v507 = vadd.f32 %v324, %v506
        %508 = vmatmul.bf16.gmra.mxu0 %v418
        %v509 = vpop.f32.mrf.mxu0
        %v510 = vadd.f32 %v324, %v509
        %v511 = vpop.f32.mrf.mxu0
        %v512 = vadd.f32 %v324, %v511
        %513 = vmatmul.bf16.gmra.mxu0 %v421
        %v514 = vpop.f32.mrf.mxu0
        %v515 = vadd.f32 %v324, %v514
        %v516 = vpop.f32.mrf.mxu0
        %v517 = vadd.f32 %v324, %v516
        %518 = vmatmul.bf16.gmra.mxu0 %v424
        %v519 = vpop.f32.mrf.mxu0
        %v520 = vadd.f32 %v324, %v519
        %v521 = vpop.f32.mrf.mxu0
        %v522 = vadd.f32 %v324, %v521
        %523 = vdwg.mxu0
        %524 = vmatpush.bf16.msra.mxu0 0
        %525 = vmatpush.bf16.msra.mxu0 0
        %526 = vmatpush.bf16.msra.mxu0 0
        %527 = vmatpush.bf16.msra.mxu0 0
        %528 = vmatpush.bf16.msra.mxu0 0
        %529 = vmatpush.bf16.msra.mxu0 0
        %530 = vmatpush.bf16.msra.mxu0 %v394
        %531 = vmatpush.bf16.msra.mxu0 %v391
        %532 = vmatmul.bf16.gmra.mxu0 %v403
        %v533 = vpop.f32.mrf.mxu0
        %v534 = vadd.f32 %v325, %v533
        %v535 = vpop.f32.mrf.mxu0
        %v536 = vadd.f32 %v325, %v535
        %537 = vmatmul.bf16.gmra.mxu0 %v406
        %v538 = vpop.f32.mrf.mxu0
        %v539 = vadd.f32 %v325, %v538
        %v540 = vpop.f32.mrf.mxu0
        %v541 = vadd.f32 %v325, %v540
        %542 = vmatmul.bf16.gmra.mxu0 %v409
        %v543 = vpop.f32.mrf.mxu0
        %v544 = vadd.f32 %v325, %v543
        %v545 = vpop.f32.mrf.mxu0
        %v546 = vadd.f32 %v325, %v545
        %547 = vmatmul.bf16.gmra.mxu0 %v412
        %v548 = vpop.f32.mrf.mxu0
        %v549 = vadd.f32 %v325, %v548
        %v550 = vpop.f32.mrf.mxu0
        %v551 = vadd.f32 %v325, %v550
        %552 = vmatmul.bf16.gmra.mxu0 %v415
        %v553 = vpop.f32.mrf.mxu0
        %v554 = vadd.f32 %v325, %v553
        %v555 = vpop.f32.mrf.mxu0
        %v556 = vadd.f32 %v325, %v555
        %557 = vmatmul.bf16.gmra.mxu0 %v418
        %v558 = vpop.f32.mrf.mxu0
        %v559 = vadd.f32 %v325, %v558
        %v560 = vpop.f32.mrf.mxu0
        %v561 = vadd.f32 %v325, %v560
        %562 = vmatmul.bf16.gmra.mxu0 %v421
        %v563 = vpop.f32.mrf.mxu0
        %v564 = vadd.f32 %v325, %v563
        %v565 = vpop.f32.mrf.mxu0
        %v566 = vadd.f32 %v325, %v565
        %567 = vmatmul.bf16.gmra.mxu0 %v424
        %v568 = vpop.f32.mrf.mxu0
        %v569 = vadd.f32 %v325, %v568
        %v570 = vpop.f32.mrf.mxu0
        %v571 = vadd.f32 %v325, %v570
        %572 = vdwg.mxu0
        %v573 = vmul.f32 %v485, 0.088388346
        %v574 = vmul.f32 %v487, 0.088388346
        %v575 = vmul.f32 %v490, 0.088388346
        %v576 = vmul.f32 %v492, 0.088388346
        %v577 = vmul.f32 %v495, 0.088388346
        %v578 = vmul.f32 %v497, 0.088388346
        %v579 = vmul.f32 %v500, 0.088388346
        %v580 = vmul.f32 %v502, 0.088388346
        %v581 = vmul.f32 %v505, 0.088388346
        %v582 = vmul.f32 %v507, 0.088388346
        %v583 = vmul.f32 %v510, 0.088388346
        %v584 = vmul.f32 %v512, 0.088388346
        %v585 = vmul.f32 %v515, 0.088388346
        %v586 = vmul.f32 %v517, 0.088388346
        %v587 = vmul.f32 %v520, 0.088388346
        %v588 = vmul.f32 %v522, 0.088388346
        %605 = vrot.lane.b32.xlu0 %v436, 96
        %v606 = vpop.permute.xlu0 %605
        %607 = vrot.lane.b32.xlu0 %v438, 96
        %v608 = vpop.permute.xlu0 %607
        %609 = vrot.lane.b32.xlu0 %v441, 96
        %v610 = vpop.permute.xlu0 %609
        %611 = vrot.lane.b32.xlu0 %v443, 96
        %v612 = vpop.permute.xlu0 %611
        %613 = vrot.lane.b32.xlu0 %v446, 96
        %v614 = vpop.permute.xlu0 %613
        %615 = vrot.lane.b32.xlu0 %v448, 96
        %v616 = vpop.permute.xlu0 %615
        %617 = vrot.lane.b32.xlu0 %v451, 96
        %v618 = vpop.permute.xlu0 %617
        %619 = vrot.lane.b32.xlu0 %v453, 96
        %v620 = vpop.permute.xlu0 %619
        %621 = vrot.lane.b32.xlu0 %v456, 96
        %v622 = vpop.permute.xlu0 %621
        %623 = vrot.lane.b32.xlu0 %v458, 96
        %v624 = vpop.permute.xlu0 %623
        %625 = vrot.lane.b32.xlu0 %v461, 96
        %v626 = vpop.permute.xlu0 %625
        %627 = vrot.lane.b32.xlu0 %v463, 96
        %v628 = vpop.permute.xlu0 %627
        %629 = vrot.lane.b32.xlu0 %v466, 96
        %v630 = vpop.permute.xlu0 %629
        %631 = vrot.lane.b32.xlu0 %v468, 96
        %v632 = vpop.permute.xlu0 %631
        %633 = vrot.lane.b32.xlu0 %v471, 96
        %v634 = vpop.permute.xlu0 %633
        %635 = vrot.lane.b32.xlu0 %v473, 96
        %v636 = vpop.permute.xlu0 %635
        %653 = vrot.lane.b32.xlu0 %v436, 64
        %v654 = vpop.permute.xlu0 %653
        %655 = vrot.lane.b32.xlu0 %v438, 64
        %v656 = vpop.permute.xlu0 %655
        %657 = vrot.lane.b32.xlu0 %v441, 64
        %v658 = vpop.permute.xlu0 %657
        %659 = vrot.lane.b32.xlu0 %v443, 64
        %v660 = vpop.permute.xlu0 %659
        %661 = vrot.lane.b32.xlu0 %v446, 64
        %v662 = vpop.permute.xlu0 %661
        %663 = vrot.lane.b32.xlu0 %v448, 64
        %v664 = vpop.permute.xlu0 %663
        %665 = vrot.lane.b32.xlu0 %v451, 64
        %v666 = vpop.permute.xlu0 %665
        %667 = vrot.lane.b32.xlu0 %v453, 64
        %v668 = vpop.permute.xlu0 %667
        %669 = vrot.lane.b32.xlu0 %v456, 64
        %v670 = vpop.permute.xlu0 %669
        %671 = vrot.lane.b32.xlu0 %v458, 64
        %v672 = vpop.permute.xlu0 %671
        %673 = vrot.lane.b32.xlu0 %v461, 64
        %v674 = vpop.permute.xlu0 %673
        %675 = vrot.lane.b32.xlu0 %v463, 64
        %v676 = vpop.permute.xlu0 %675
        %677 = vrot.lane.b32.xlu0 %v466, 64
        %v678 = vpop.permute.xlu0 %677
        %679 = vrot.lane.b32.xlu0 %v468, 64
        %v680 = vpop.permute.xlu0 %679
        %681 = vrot.lane.b32.xlu0 %v471, 64
        %v682 = vpop.permute.xlu0 %681
        %683 = vrot.lane.b32.xlu0 %v473, 64
        %v684 = vpop.permute.xlu0 %683
        %701 = vrot.lane.b32.xlu0 %v436, 32
        %v702 = vpop.permute.xlu0 %701
        %703 = vrot.lane.b32.xlu0 %v438, 32
        %v704 = vpop.permute.xlu0 %703
        %705 = vrot.lane.b32.xlu0 %v441, 32
        %v706 = vpop.permute.xlu0 %705
        %707 = vrot.lane.b32.xlu0 %v443, 32
        %v708 = vpop.permute.xlu0 %707
        %709 = vrot.lane.b32.xlu0 %v446, 32
        %v710 = vpop.permute.xlu0 %709
        %711 = vrot.lane.b32.xlu0 %v448, 32
        %v712 = vpop.permute.xlu0 %711
        %713 = vrot.lane.b32.xlu0 %v451, 32
        %v714 = vpop.permute.xlu0 %713
        %715 = vrot.lane.b32.xlu0 %v453, 32
        %v716 = vpop.permute.xlu0 %715
        %717 = vrot.lane.b32.xlu0 %v456, 32
        %v718 = vpop.permute.xlu0 %717
        %719 = vrot.lane.b32.xlu0 %v458, 32
        %v720 = vpop.permute.xlu0 %719
        %721 = vrot.lane.b32.xlu0 %v461, 32
        %v722 = vpop.permute.xlu0 %721
        %723 = vrot.lane.b32.xlu0 %v463, 32
        %v724 = vpop.permute.xlu0 %723
        %725 = vrot.lane.b32.xlu0 %v466, 32
        %v726 = vpop.permute.xlu0 %725
        %727 = vrot.lane.b32.xlu0 %v468, 32
        %v728 = vpop.permute.xlu0 %727
        %729 = vrot.lane.b32.xlu0 %v471, 32
        %v730 = vpop.permute.xlu0 %729
        %731 = vrot.lane.b32.xlu0 %v473, 32
        %v732 = vpop.permute.xlu0 %731
        %v749 = vpack.c.bf16 %v436, %v436
        %v750 = vpack.c.bf16 %v438, %v438
        %v751 = vpack.c.bf16 %v441, %v441
        %v752 = vpack.c.bf16 %v443, %v443
        %v753 = vpack.c.bf16 %v446, %v446
        %v754 = vpack.c.bf16 %v448, %v448
        %v755 = vpack.c.bf16 %v451, %v451
        %v756 = vpack.c.bf16 %v453, %v453
        %v757 = vpack.c.bf16 %v456, %v456
        %v758 = vpack.c.bf16 %v458, %v458
        %v759 = vpack.c.bf16 %v461, %v461
        %v760 = vpack.c.bf16 %v463, %v463
        %v761 = vpack.c.bf16 %v466, %v466
        %v762 = vpack.c.bf16 %v468, %v468
        %v763 = vpack.c.bf16 %v471, %v471
        %v764 = vpack.c.bf16 %v473, %v473
        %v765 = vpack.c.bf16 %v606, %v606
        %v766 = vpack.c.bf16 %v608, %v608
        %v767 = vpack.c.bf16 %v610, %v610
        %v768 = vpack.c.bf16 %v612, %v612
        %v769 = vpack.c.bf16 %v614, %v614
        %v770 = vpack.c.bf16 %v616, %v616
        %v771 = vpack.c.bf16 %v618, %v618
        %v772 = vpack.c.bf16 %v620, %v620
        %v773 = vpack.c.bf16 %v622, %v622
        %v774 = vpack.c.bf16 %v624, %v624
        %v775 = vpack.c.bf16 %v626, %v626
        %v776 = vpack.c.bf16 %v628, %v628
        %v777 = vpack.c.bf16 %v630, %v630
        %v778 = vpack.c.bf16 %v632, %v632
        %v779 = vpack.c.bf16 %v634, %v634
        %v780 = vpack.c.bf16 %v636, %v636
        %v781 = vpack.c.bf16 %v654, %v654
        %v782 = vpack.c.bf16 %v656, %v656
        %v783 = vpack.c.bf16 %v658, %v658
        %v784 = vpack.c.bf16 %v660, %v660
        %v785 = vpack.c.bf16 %v662, %v662
        %v786 = vpack.c.bf16 %v664, %v664
        %v787 = vpack.c.bf16 %v666, %v666
        %v788 = vpack.c.bf16 %v668, %v668
        %v789 = vpack.c.bf16 %v670, %v670
        %v790 = vpack.c.bf16 %v672, %v672
        %v791 = vpack.c.bf16 %v674, %v674
        %v792 = vpack.c.bf16 %v676, %v676
        %v793 = vpack.c.bf16 %v678, %v678
        %v794 = vpack.c.bf16 %v680, %v680
        %v795 = vpack.c.bf16 %v682, %v682
        %v796 = vpack.c.bf16 %v684, %v684
        %v797 = vpack.c.bf16 %v702, %v702
        %v798 = vpack.c.bf16 %v704, %v704
        %v799 = vpack.c.bf16 %v706, %v706
        %v800 = vpack.c.bf16 %v708, %v708
        %v801 = vpack.c.bf16 %v710, %v710
        %v802 = vpack.c.bf16 %v712, %v712
        %v803 = vpack.c.bf16 %v714, %v714
        %v804 = vpack.c.bf16 %v716, %v716
        %v805 = vpack.c.bf16 %v718, %v718
        %v806 = vpack.c.bf16 %v720, %v720
        %v807 = vpack.c.bf16 %v722, %v722
        %v808 = vpack.c.bf16 %v724, %v724
        %v809 = vpack.c.bf16 %v726, %v726
        %v810 = vpack.c.bf16 %v728, %v728
        %v811 = vpack.c.bf16 %v730, %v730
        %v812 = vpack.c.bf16 %v732, %v732
        %829 = vrot.lane.b32.xlu0 %v573, 96
        %v830 = vpop.permute.xlu0 %829
        %831 = vrot.lane.b32.xlu0 %v574, 96
        %v832 = vpop.permute.xlu0 %831
        %833 = vrot.lane.b32.xlu0 %v575, 96
        %v834 = vpop.permute.xlu0 %833
        %835 = vrot.lane.b32.xlu0 %v576, 96
        %v836 = vpop.permute.xlu0 %835
        %837 = vrot.lane.b32.xlu0 %v577, 96
        %v838 = vpop.permute.xlu0 %837
        %839 = vrot.lane.b32.xlu0 %v578, 96
        %v840 = vpop.permute.xlu0 %839
        %841 = vrot.lane.b32.xlu0 %v579, 96
        %v842 = vpop.permute.xlu0 %841
        %843 = vrot.lane.b32.xlu0 %v580, 96
        %v844 = vpop.permute.xlu0 %843
        %845 = vrot.lane.b32.xlu0 %v581, 96
        %v846 = vpop.permute.xlu0 %845
        %847 = vrot.lane.b32.xlu0 %v582, 96
        %v848 = vpop.permute.xlu0 %847
        %849 = vrot.lane.b32.xlu0 %v583, 96
        %v850 = vpop.permute.xlu0 %849
        %851 = vrot.lane.b32.xlu0 %v584, 96
        %v852 = vpop.permute.xlu0 %851
        %853 = vrot.lane.b32.xlu0 %v585, 96
        %v854 = vpop.permute.xlu0 %853
        %855 = vrot.lane.b32.xlu0 %v586, 96
        %v856 = vpop.permute.xlu0 %855
        %857 = vrot.lane.b32.xlu0 %v587, 96
        %v858 = vpop.permute.xlu0 %857
        %859 = vrot.lane.b32.xlu0 %v588, 96
        %v860 = vpop.permute.xlu0 %859
        %877 = vrot.lane.b32.xlu0 %v573, 64
        %v878 = vpop.permute.xlu0 %877
        %879 = vrot.lane.b32.xlu0 %v574, 64
        %v880 = vpop.permute.xlu0 %879
        %881 = vrot.lane.b32.xlu0 %v575, 64
        %v882 = vpop.permute.xlu0 %881
        %883 = vrot.lane.b32.xlu0 %v576, 64
        %v884 = vpop.permute.xlu0 %883
        %885 = vrot.lane.b32.xlu0 %v577, 64
        %v886 = vpop.permute.xlu0 %885
        %887 = vrot.lane.b32.xlu0 %v578, 64
        %v888 = vpop.permute.xlu0 %887
        %889 = vrot.lane.b32.xlu0 %v579, 64
        %v890 = vpop.permute.xlu0 %889
        %891 = vrot.lane.b32.xlu0 %v580, 64
        %v892 = vpop.permute.xlu0 %891
        %893 = vrot.lane.b32.xlu0 %v581, 64
        %v894 = vpop.permute.xlu0 %893
        %895 = vrot.lane.b32.xlu0 %v582, 64
        %v896 = vpop.permute.xlu0 %895
        %897 = vrot.lane.b32.xlu0 %v583, 64
        %v898 = vpop.permute.xlu0 %897
        %899 = vrot.lane.b32.xlu0 %v584, 64
        %v900 = vpop.permute.xlu0 %899
        %901 = vrot.lane.b32.xlu0 %v585, 64
        %v902 = vpop.permute.xlu0 %901
        %903 = vrot.lane.b32.xlu0 %v586, 64
        %v904 = vpop.permute.xlu0 %903
        %905 = vrot.lane.b32.xlu0 %v587, 64
        %v906 = vpop.permute.xlu0 %905
        %907 = vrot.lane.b32.xlu0 %v588, 64
        %v908 = vpop.permute.xlu0 %907
        %925 = vrot.lane.b32.xlu0 %v573, 32
        %v926 = vpop.permute.xlu0 %925
        %927 = vrot.lane.b32.xlu0 %v574, 32
        %v928 = vpop.permute.xlu0 %927
        %929 = vrot.lane.b32.xlu0 %v575, 32
        %v930 = vpop.permute.xlu0 %929
        %931 = vrot.lane.b32.xlu0 %v576, 32
        %v932 = vpop.permute.xlu0 %931
        %933 = vrot.lane.b32.xlu0 %v577, 32
        %v934 = vpop.permute.xlu0 %933
        %935 = vrot.lane.b32.xlu0 %v578, 32
        %v936 = vpop.permute.xlu0 %935
        %937 = vrot.lane.b32.xlu0 %v579, 32
        %v938 = vpop.permute.xlu0 %937
        %939 = vrot.lane.b32.xlu0 %v580, 32
        %v940 = vpop.permute.xlu0 %939
        %941 = vrot.lane.b32.xlu0 %v581, 32
        %v942 = vpop.permute.xlu0 %941
        %943 = vrot.lane.b32.xlu0 %v582, 32
        %v944 = vpop.permute.xlu0 %943
        %945 = vrot.lane.b32.xlu0 %v583, 32
        %v946 = vpop.permute.xlu0 %945
        %947 = vrot.lane.b32.xlu0 %v584, 32
        %v948 = vpop.permute.xlu0 %947
        %949 = vrot.lane.b32.xlu0 %v585, 32
        %v950 = vpop.permute.xlu0 %949
        %951 = vrot.lane.b32.xlu0 %v586, 32
        %v952 = vpop.permute.xlu0 %951
        %953 = vrot.lane.b32.xlu0 %v587, 32
        %v954 = vpop.permute.xlu0 %953
        %955 = vrot.lane.b32.xlu0 %v588, 32
        %v956 = vpop.permute.xlu0 %955
        %v973 = vpack.c.bf16 %v573, %v573
        %v974 = vpack.c.bf16 %v574, %v574
        %v975 = vpack.c.bf16 %v575, %v575
        %v976 = vpack.c.bf16 %v576, %v576
        %v977 = vpack.c.bf16 %v577, %v577
        %v978 = vpack.c.bf16 %v578, %v578
        %v979 = vpack.c.bf16 %v579, %v579
        %v980 = vpack.c.bf16 %v580, %v580
        %v981 = vpack.c.bf16 %v581, %v581
        %v982 = vpack.c.bf16 %v582, %v582
        %v983 = vpack.c.bf16 %v583, %v583
        %v984 = vpack.c.bf16 %v584, %v584
        %v985 = vpack.c.bf16 %v585, %v585
        %v986 = vpack.c.bf16 %v586, %v586
        %v987 = vpack.c.bf16 %v587, %v587
        %v988 = vpack.c.bf16 %v588, %v588
        %v989 = vpack.c.bf16 %v830, %v830
        %v990 = vpack.c.bf16 %v832, %v832
        %v991 = vpack.c.bf16 %v834, %v834
        %v992 = vpack.c.bf16 %v836, %v836
        %v993 = vpack.c.bf16 %v838, %v838
        %v994 = vpack.c.bf16 %v840, %v840
        %v995 = vpack.c.bf16 %v842, %v842
        %v996 = vpack.c.bf16 %v844, %v844
        %v997 = vpack.c.bf16 %v846, %v846
        %v998 = vpack.c.bf16 %v848, %v848
        %v999 = vpack.c.bf16 %v850, %v850
        %v1000 = vpack.c.bf16 %v852, %v852
        %v1001 = vpack.c.bf16 %v854, %v854
        %v1002 = vpack.c.bf16 %v856, %v856
        %v1003 = vpack.c.bf16 %v858, %v858
        %v1004 = vpack.c.bf16 %v860, %v860
        %v1005 = vpack.c.bf16 %v878, %v878
        %v1006 = vpack.c.bf16 %v880, %v880
        %v1007 = vpack.c.bf16 %v882, %v882
        %v1008 = vpack.c.bf16 %v884, %v884
        %v1009 = vpack.c.bf16 %v886, %v886
        %v1010 = vpack.c.bf16 %v888, %v888
        %v1011 = vpack.c.bf16 %v890, %v890
        %v1012 = vpack.c.bf16 %v892, %v892
        %v1013 = vpack.c.bf16 %v894, %v894
        %v1014 = vpack.c.bf16 %v896, %v896
        %v1015 = vpack.c.bf16 %v898, %v898
        %v1016 = vpack.c.bf16 %v900, %v900
        %v1017 = vpack.c.bf16 %v902, %v902
        %v1018 = vpack.c.bf16 %v904, %v904
        %v1019 = vpack.c.bf16 %v906, %v906
        %v1020 = vpack.c.bf16 %v908, %v908
        %v1021 = vpack.c.bf16 %v926, %v926
        %v1022 = vpack.c.bf16 %v928, %v928
        %v1023 = vpack.c.bf16 %v930, %v930
        %v1024 = vpack.c.bf16 %v932, %v932
        %v1025 = vpack.c.bf16 %v934, %v934
        %v1026 = vpack.c.bf16 %v936, %v936
        %v1027 = vpack.c.bf16 %v938, %v938
        %v1028 = vpack.c.bf16 %v940, %v940
        %v1029 = vpack.c.bf16 %v942, %v942
        %v1030 = vpack.c.bf16 %v944, %v944
        %v1031 = vpack.c.bf16 %v946, %v946
        %v1032 = vpack.c.bf16 %v948, %v948
        %v1033 = vpack.c.bf16 %v950, %v950
        %v1034 = vpack.c.bf16 %v952, %v952
        %v1035 = vpack.c.bf16 %v954, %v954
        %v1036 = vpack.c.bf16 %v956, %v956
        %1053 = vrot.lane.b32.xlu0 %v534, 96
        %v1054 = vpop.permute.xlu0 %1053
        %1055 = vrot.lane.b32.xlu0 %v536, 96
        %v1056 = vpop.permute.xlu0 %1055
        %1057 = vrot.lane.b32.xlu0 %v539, 96
        %v1058 = vpop.permute.xlu0 %1057
        %1059 = vrot.lane.b32.xlu0 %v541, 96
        %v1060 = vpop.permute.xlu0 %1059
        %1061 = vrot.lane.b32.xlu0 %v544, 96
        %v1062 = vpop.permute.xlu0 %1061
        %1063 = vrot.lane.b32.xlu0 %v546, 96
        %v1064 = vpop.permute.xlu0 %1063
        %1065 = vrot.lane.b32.xlu0 %v549, 96
        %v1066 = vpop.permute.xlu0 %1065
        %1067 = vrot.lane.b32.xlu0 %v551, 96
        %v1068 = vpop.permute.xlu0 %1067
        %1069 = vrot.lane.b32.xlu0 %v554, 96
        %v1070 = vpop.permute.xlu0 %1069
        %1071 = vrot.lane.b32.xlu0 %v556, 96
        %v1072 = vpop.permute.xlu0 %1071
        %1073 = vrot.lane.b32.xlu0 %v559, 96
        %v1074 = vpop.permute.xlu0 %1073
        %1075 = vrot.lane.b32.xlu0 %v561, 96
        %v1076 = vpop.permute.xlu0 %1075
        %1077 = vrot.lane.b32.xlu0 %v564, 96
        %v1078 = vpop.permute.xlu0 %1077
        %1079 = vrot.lane.b32.xlu0 %v566, 96
        %v1080 = vpop.permute.xlu0 %1079
        %1081 = vrot.lane.b32.xlu0 %v569, 96
        %v1082 = vpop.permute.xlu0 %1081
        %1083 = vrot.lane.b32.xlu0 %v571, 96
        %v1084 = vpop.permute.xlu0 %1083
        %1101 = vrot.lane.b32.xlu0 %v534, 64
        %v1102 = vpop.permute.xlu0 %1101
        %1103 = vrot.lane.b32.xlu0 %v536, 64
        %v1104 = vpop.permute.xlu0 %1103
        %1105 = vrot.lane.b32.xlu0 %v539, 64
        %v1106 = vpop.permute.xlu0 %1105
        %1107 = vrot.lane.b32.xlu0 %v541, 64
        %v1108 = vpop.permute.xlu0 %1107
        %1109 = vrot.lane.b32.xlu0 %v544, 64
        %v1110 = vpop.permute.xlu0 %1109
        %1111 = vrot.lane.b32.xlu0 %v546, 64
        %v1112 = vpop.permute.xlu0 %1111
        %1113 = vrot.lane.b32.xlu0 %v549, 64
        %v1114 = vpop.permute.xlu0 %1113
        %1115 = vrot.lane.b32.xlu0 %v551, 64
        %v1116 = vpop.permute.xlu0 %1115
        %1117 = vrot.lane.b32.xlu0 %v554, 64
        %v1118 = vpop.permute.xlu0 %1117
        %1119 = vrot.lane.b32.xlu0 %v556, 64
        %v1120 = vpop.permute.xlu0 %1119
        %1121 = vrot.lane.b32.xlu0 %v559, 64
        %v1122 = vpop.permute.xlu0 %1121
        %1123 = vrot.lane.b32.xlu0 %v561, 64
        %v1124 = vpop.permute.xlu0 %1123
        %1125 = vrot.lane.b32.xlu0 %v564, 64
        %v1126 = vpop.permute.xlu0 %1125
        %1127 = vrot.lane.b32.xlu0 %v566, 64
        %v1128 = vpop.permute.xlu0 %1127
        %1129 = vrot.lane.b32.xlu0 %v569, 64
        %v1130 = vpop.permute.xlu0 %1129
        %1131 = vrot.lane.b32.xlu0 %v571, 64
        %v1132 = vpop.permute.xlu0 %1131
        %1149 = vrot.lane.b32.xlu0 %v534, 32
        %v1150 = vpop.permute.xlu0 %1149
        %1151 = vrot.lane.b32.xlu0 %v536, 32
        %v1152 = vpop.permute.xlu0 %1151
        %1153 = vrot.lane.b32.xlu0 %v539, 32
        %v1154 = vpop.permute.xlu0 %1153
        %1155 = vrot.lane.b32.xlu0 %v541, 32
        %v1156 = vpop.permute.xlu0 %1155
        %1157 = vrot.lane.b32.xlu0 %v544, 32
        %v1158 = vpop.permute.xlu0 %1157
        %1159 = vrot.lane.b32.xlu0 %v546, 32
        %v1160 = vpop.permute.xlu0 %1159
        %1161 = vrot.lane.b32.xlu0 %v549, 32
        %v1162 = vpop.permute.xlu0 %1161
        %1163 = vrot.lane.b32.xlu0 %v551, 32
        %v1164 = vpop.permute.xlu0 %1163
        %1165 = vrot.lane.b32.xlu0 %v554, 32
        %v1166 = vpop.permute.xlu0 %1165
        %1167 = vrot.lane.b32.xlu0 %v556, 32
        %v1168 = vpop.permute.xlu0 %1167
        %1169 = vrot.lane.b32.xlu0 %v559, 32
        %v1170 = vpop.permute.xlu0 %1169
        %1171 = vrot.lane.b32.xlu0 %v561, 32
        %v1172 = vpop.permute.xlu0 %1171
        %1173 = vrot.lane.b32.xlu0 %v564, 32
        %v1174 = vpop.permute.xlu0 %1173
        %1175 = vrot.lane.b32.xlu0 %v566, 32
        %v1176 = vpop.permute.xlu0 %1175
        %1177 = vrot.lane.b32.xlu0 %v569, 32
        %v1178 = vpop.permute.xlu0 %1177
        %1179 = vrot.lane.b32.xlu0 %v571, 32
        %v1180 = vpop.permute.xlu0 %1179
        %v1197 = vpack.c.bf16 %v534, %v534
        %v1198 = vpack.c.bf16 %v536, %v536
        %v1199 = vpack.c.bf16 %v539, %v539
        %v1200 = vpack.c.bf16 %v541, %v541
        %v1201 = vpack.c.bf16 %v544, %v544
        %v1202 = vpack.c.bf16 %v546, %v546
        %v1203 = vpack.c.bf16 %v549, %v549
        %v1204 = vpack.c.bf16 %v551, %v551
        %v1205 = vpack.c.bf16 %v554, %v554
        %v1206 = vpack.c.bf16 %v556, %v556
        %v1207 = vpack.c.bf16 %v559, %v559
        %v1208 = vpack.c.bf16 %v561, %v561
        %v1209 = vpack.c.bf16 %v564, %v564
        %v1210 = vpack.c.bf16 %v566, %v566
        %v1211 = vpack.c.bf16 %v569, %v569
        %v1212 = vpack.c.bf16 %v571, %v571
        %v1213 = vpack.c.bf16 %v1054, %v1054
        %v1214 = vpack.c.bf16 %v1056, %v1056
        %v1215 = vpack.c.bf16 %v1058, %v1058
        %v1216 = vpack.c.bf16 %v1060, %v1060
        %v1217 = vpack.c.bf16 %v1062, %v1062
        %v1218 = vpack.c.bf16 %v1064, %v1064
        %v1219 = vpack.c.bf16 %v1066, %v1066
        %v1220 = vpack.c.bf16 %v1068, %v1068
        %v1221 = vpack.c.bf16 %v1070, %v1070
        %v1222 = vpack.c.bf16 %v1072, %v1072
        %v1223 = vpack.c.bf16 %v1074, %v1074
        %v1224 = vpack.c.bf16 %v1076, %v1076
        %v1225 = vpack.c.bf16 %v1078, %v1078
        %v1226 = vpack.c.bf16 %v1080, %v1080
        %v1227 = vpack.c.bf16 %v1082, %v1082
        %v1228 = vpack.c.bf16 %v1084, %v1084
        %v1229 = vpack.c.bf16 %v1102, %v1102
        %v1230 = vpack.c.bf16 %v1104, %v1104
        %v1231 = vpack.c.bf16 %v1106, %v1106
        %v1232 = vpack.c.bf16 %v1108, %v1108
        %v1233 = vpack.c.bf16 %v1110, %v1110
        %v1234 = vpack.c.bf16 %v1112, %v1112
        %v1235 = vpack.c.bf16 %v1114, %v1114
        %v1236 = vpack.c.bf16 %v1116, %v1116
        %v1237 = vpack.c.bf16 %v1118, %v1118
        %v1238 = vpack.c.bf16 %v1120, %v1120
        %v1239 = vpack.c.bf16 %v1122, %v1122
        %v1240 = vpack.c.bf16 %v1124, %v1124
        %v1241 = vpack.c.bf16 %v1126, %v1126
        %v1242 = vpack.c.bf16 %v1128, %v1128
        %v1243 = vpack.c.bf16 %v1130, %v1130
        %v1244 = vpack.c.bf16 %v1132, %v1132
        %v1245 = vpack.c.bf16 %v1150, %v1150
        %v1246 = vpack.c.bf16 %v1152, %v1152
        %v1247 = vpack.c.bf16 %v1154, %v1154
        %v1248 = vpack.c.bf16 %v1156, %v1156
        %v1249 = vpack.c.bf16 %v1158, %v1158
        %v1250 = vpack.c.bf16 %v1160, %v1160
        %v1251 = vpack.c.bf16 %v1162, %v1162
        %v1252 = vpack.c.bf16 %v1164, %v1164
        %v1253 = vpack.c.bf16 %v1166, %v1166
        %v1254 = vpack.c.bf16 %v1168, %v1168
        %v1255 = vpack.c.bf16 %v1170, %v1170
        %v1256 = vpack.c.bf16 %v1172, %v1172
        %v1257 = vpack.c.bf16 %v1174, %v1174
        %v1258 = vpack.c.bf16 %v1176, %v1176
        %v1259 = vpack.c.bf16 %v1178, %v1178
        %v1260 = vpack.c.bf16 %v1180, %v1180
        %v1263 = vunpack.c.l.b16 %v749
        %v1264 = vunpack.c.l.b16 %v750
        %v1265 = vpack.c.b16 %v1264, %v1263
        %v1268 = vunpack.c.l.b16 %v973
        %v1269 = vunpack.c.l.b16 %v974
        %v1270 = vpack.c.b16 %v1269, %v1268
        %v1272 = vsel %vm401, %v1265, 0
        %v1275 = vsel %vm401, %v1270, 0
        %1277 = vmatpush.bf16.xpose.msra.mxu0 0
        %1278 = vmatpush.bf16.xpose.msra.mxu0 0
        %1279 = vmatpush.bf16.xpose.msra.mxu0 0
        %1280 = vmatpush.bf16.xpose.msra.mxu0 0
        %1281 = vmatpush.bf16.xpose.msra.mxu0 0
        %1282 = vmatpush.bf16.xpose.msra.mxu0 0
        %1283 = vmatpush.bf16.xpose.msra.mxu0 0
        %1284 = vmatpush.bf16.xpose.msra.mxu0 %v1275
        %1285 = vmatmul.bf16.gmra.mxu0 %v1272
        %v1286 = vpop.f32.mrf.mxu0
        %v1287 = vadd.f32 0.0, %v1286
        %v1288 = vpop.f32.mrf.mxu0
        %v1289 = vadd.f32 0.0, %v1288
        %1290 = vdwg.mxu0
        %v1293 = vunpack.c.l.b16 %v751
        %v1294 = vunpack.c.l.b16 %v752
        %v1295 = vpack.c.b16 %v1294, %v1293
        %v1298 = vunpack.c.l.b16 %v975
        %v1299 = vunpack.c.l.b16 %v976
        %v1300 = vpack.c.b16 %v1299, %v1298
        %v1302 = vsel %vm401, %v1295, 0
        %v1305 = vsel %vm401, %v1300, 0
        %1307 = vmatpush.bf16.xpose.msra.mxu0 0
        %1308 = vmatpush.bf16.xpose.msra.mxu0 0
        %1309 = vmatpush.bf16.xpose.msra.mxu0 0
        %1310 = vmatpush.bf16.xpose.msra.mxu0 0
        %1311 = vmatpush.bf16.xpose.msra.mxu0 0
        %1312 = vmatpush.bf16.xpose.msra.mxu0 0
        %1313 = vmatpush.bf16.xpose.msra.mxu0 0
        %1314 = vmatpush.bf16.xpose.msra.mxu0 %v1305
        %1315 = vmatmul.bf16.gmra.mxu0 %v1302
        %v1316 = vpop.f32.mrf.mxu0
        %v1317 = vadd.f32 0.0, %v1316
        %v1318 = vpop.f32.mrf.mxu0
        %v1319 = vadd.f32 0.0, %v1318
        %1320 = vdwg.mxu0
        %v1323 = vunpack.c.l.b16 %v753
        %v1324 = vunpack.c.l.b16 %v754
        %v1325 = vpack.c.b16 %v1324, %v1323
        %v1328 = vunpack.c.l.b16 %v977
        %v1329 = vunpack.c.l.b16 %v978
        %v1330 = vpack.c.b16 %v1329, %v1328
        %v1332 = vsel %vm401, %v1325, 0
        %v1335 = vsel %vm401, %v1330, 0
        %1337 = vmatpush.bf16.xpose.msra.mxu0 0
        %1338 = vmatpush.bf16.xpose.msra.mxu0 0
        %1339 = vmatpush.bf16.xpose.msra.mxu0 0
        %1340 = vmatpush.bf16.xpose.msra.mxu0 0
        %1341 = vmatpush.bf16.xpose.msra.mxu0 0
        %1342 = vmatpush.bf16.xpose.msra.mxu0 0
        %1343 = vmatpush.bf16.xpose.msra.mxu0 0
        %1344 = vmatpush.bf16.xpose.msra.mxu0 %v1335
        %1345 = vmatmul.bf16.gmra.mxu0 %v1332
        %v1346 = vpop.f32.mrf.mxu0
        %v1347 = vadd.f32 0.0, %v1346
        %v1348 = vpop.f32.mrf.mxu0
        %v1349 = vadd.f32 0.0, %v1348
        %1350 = vdwg.mxu0
        %v1353 = vunpack.c.l.b16 %v755
        %v1354 = vunpack.c.l.b16 %v756
        %v1355 = vpack.c.b16 %v1354, %v1353
        %v1358 = vunpack.c.l.b16 %v979
        %v1359 = vunpack.c.l.b16 %v980
        %v1360 = vpack.c.b16 %v1359, %v1358
        %v1362 = vsel %vm401, %v1355, 0
        %v1365 = vsel %vm401, %v1360, 0
        %1367 = vmatpush.bf16.xpose.msra.mxu0 0
        %1368 = vmatpush.bf16.xpose.msra.mxu0 0
        %1369 = vmatpush.bf16.xpose.msra.mxu0 0
        %1370 = vmatpush.bf16.xpose.msra.mxu0 0
        %1371 = vmatpush.bf16.xpose.msra.mxu0 0
        %1372 = vmatpush.bf16.xpose.msra.mxu0 0
        %1373 = vmatpush.bf16.xpose.msra.mxu0 0
        %1374 = vmatpush.bf16.xpose.msra.mxu0 %v1365
        %1375 = vmatmul.bf16.gmra.mxu0 %v1362
        %v1376 = vpop.f32.mrf.mxu0
        %v1377 = vadd.f32 0.0, %v1376
        %v1378 = vpop.f32.mrf.mxu0
        %v1379 = vadd.f32 0.0, %v1378
        %1380 = vdwg.mxu0
        %v1383 = vunpack.c.l.b16 %v757
        %v1384 = vunpack.c.l.b16 %v758
        %v1385 = vpack.c.b16 %v1384, %v1383
        %v1388 = vunpack.c.l.b16 %v981
        %v1389 = vunpack.c.l.b16 %v982
        %v1390 = vpack.c.b16 %v1389, %v1388
        %v1392 = vsel %vm401, %v1385, 0
        %v1395 = vsel %vm401, %v1390, 0
        %1397 = vmatpush.bf16.xpose.msra.mxu0 0
        %1398 = vmatpush.bf16.xpose.msra.mxu0 0
        %1399 = vmatpush.bf16.xpose.msra.mxu0 0
        %1400 = vmatpush.bf16.xpose.msra.mxu0 0
        %1401 = vmatpush.bf16.xpose.msra.mxu0 0
        %1402 = vmatpush.bf16.xpose.msra.mxu0 0
        %1403 = vmatpush.bf16.xpose.msra.mxu0 0
        %1404 = vmatpush.bf16.xpose.msra.mxu0 %v1395
        %1405 = vmatmul.bf16.gmra.mxu0 %v1392
        %v1406 = vpop.f32.mrf.mxu0
        %v1407 = vadd.f32 0.0, %v1406
        %v1408 = vpop.f32.mrf.mxu0
        %v1409 = vadd.f32 0.0, %v1408
        %1410 = vdwg.mxu0
        %v1413 = vunpack.c.l.b16 %v759
        %v1414 = vunpack.c.l.b16 %v760
        %v1415 = vpack.c.b16 %v1414, %v1413
        %v1418 = vunpack.c.l.b16 %v983
        %v1419 = vunpack.c.l.b16 %v984
        %v1420 = vpack.c.b16 %v1419, %v1418
        %v1422 = vsel %vm401, %v1415, 0
        %v1425 = vsel %vm401, %v1420, 0
        %1427 = vmatpush.bf16.xpose.msra.mxu0 0
        %1428 = vmatpush.bf16.xpose.msra.mxu0 0
        %1429 = vmatpush.bf16.xpose.msra.mxu0 0
        %1430 = vmatpush.bf16.xpose.msra.mxu0 0
        %1431 = vmatpush.bf16.xpose.msra.mxu0 0
        %1432 = vmatpush.bf16.xpose.msra.mxu0 0
        %1433 = vmatpush.bf16.xpose.msra.mxu0 0
        %1434 = vmatpush.bf16.xpose.msra.mxu0 %v1425
        %1435 = vmatmul.bf16.gmra.mxu0 %v1422
        %v1436 = vpop.f32.mrf.mxu0
        %v1437 = vadd.f32 0.0, %v1436
        %v1438 = vpop.f32.mrf.mxu0
        %v1439 = vadd.f32 0.0, %v1438
        %1440 = vdwg.mxu0
        %v1443 = vunpack.c.l.b16 %v761
        %v1444 = vunpack.c.l.b16 %v762
        %v1445 = vpack.c.b16 %v1444, %v1443
        %v1448 = vunpack.c.l.b16 %v985
        %v1449 = vunpack.c.l.b16 %v986
        %v1450 = vpack.c.b16 %v1449, %v1448
        %v1452 = vsel %vm401, %v1445, 0
        %v1455 = vsel %vm401, %v1450, 0
        %1457 = vmatpush.bf16.xpose.msra.mxu0 0
        %1458 = vmatpush.bf16.xpose.msra.mxu0 0
        %1459 = vmatpush.bf16.xpose.msra.mxu0 0
        %1460 = vmatpush.bf16.xpose.msra.mxu0 0
        %1461 = vmatpush.bf16.xpose.msra.mxu0 0
        %1462 = vmatpush.bf16.xpose.msra.mxu0 0
        %1463 = vmatpush.bf16.xpose.msra.mxu0 0
        %1464 = vmatpush.bf16.xpose.msra.mxu0 %v1455
        %1465 = vmatmul.bf16.gmra.mxu0 %v1452
        %v1466 = vpop.f32.mrf.mxu0
        %v1467 = vadd.f32 0.0, %v1466
        %v1468 = vpop.f32.mrf.mxu0
        %v1469 = vadd.f32 0.0, %v1468
        %1470 = vdwg.mxu0
        %v1473 = vunpack.c.l.b16 %v763
        %v1474 = vunpack.c.l.b16 %v764
        %v1475 = vpack.c.b16 %v1474, %v1473
        %v1478 = vunpack.c.l.b16 %v987
        %v1479 = vunpack.c.l.b16 %v988
        %v1480 = vpack.c.b16 %v1479, %v1478
        %v1482 = vsel %vm401, %v1475, 0
        %v1485 = vsel %vm401, %v1480, 0
        %1487 = vmatpush.bf16.xpose.msra.mxu0 0
        %1488 = vmatpush.bf16.xpose.msra.mxu0 0
        %1489 = vmatpush.bf16.xpose.msra.mxu0 0
        %1490 = vmatpush.bf16.xpose.msra.mxu0 0
        %1491 = vmatpush.bf16.xpose.msra.mxu0 0
        %1492 = vmatpush.bf16.xpose.msra.mxu0 0
        %1493 = vmatpush.bf16.xpose.msra.mxu0 0
        %1494 = vmatpush.bf16.xpose.msra.mxu0 %v1485
        %1495 = vmatmul.bf16.gmra.mxu0 %v1482
        %v1496 = vpop.f32.mrf.mxu0
        %v1497 = vadd.f32 0.0, %v1496
        %v1498 = vpop.f32.mrf.mxu0
        %v1499 = vadd.f32 0.0, %v1498
        %1500 = vdwg.mxu0
        %v1503 = vunpack.c.l.b16 %v765
        %v1504 = vunpack.c.l.b16 %v766
        %v1505 = vpack.c.b16 %v1504, %v1503
        %v1508 = vunpack.c.l.b16 %v989
        %v1509 = vunpack.c.l.b16 %v990
        %v1510 = vpack.c.b16 %v1509, %v1508
        %v1512 = vsel %vm401, %v1505, 0
        %v1515 = vsel %vm401, %v1510, 0
        %1517 = vmatpush.bf16.xpose.msra.mxu0 0
        %1518 = vmatpush.bf16.xpose.msra.mxu0 0
        %1519 = vmatpush.bf16.xpose.msra.mxu0 0
        %1520 = vmatpush.bf16.xpose.msra.mxu0 0
        %1521 = vmatpush.bf16.xpose.msra.mxu0 0
        %1522 = vmatpush.bf16.xpose.msra.mxu0 0
        %1523 = vmatpush.bf16.xpose.msra.mxu0 0
        %1524 = vmatpush.bf16.xpose.msra.mxu0 %v1515
        %1525 = vmatmul.bf16.gmra.mxu0 %v1512
        %v1526 = vpop.f32.mrf.mxu0
        %v1527 = vadd.f32 0.0, %v1526
        %v1528 = vpop.f32.mrf.mxu0
        %v1529 = vadd.f32 0.0, %v1528
        %1530 = vdwg.mxu0
        %v1533 = vunpack.c.l.b16 %v767
        %v1534 = vunpack.c.l.b16 %v768
        %v1535 = vpack.c.b16 %v1534, %v1533
        %v1538 = vunpack.c.l.b16 %v991
        %v1539 = vunpack.c.l.b16 %v992
        %v1540 = vpack.c.b16 %v1539, %v1538
        %v1542 = vsel %vm401, %v1535, 0
        %v1545 = vsel %vm401, %v1540, 0
        %1547 = vmatpush.bf16.xpose.msra.mxu0 0
        %1548 = vmatpush.bf16.xpose.msra.mxu0 0
        %1549 = vmatpush.bf16.xpose.msra.mxu0 0
        %1550 = vmatpush.bf16.xpose.msra.mxu0 0
        %1551 = vmatpush.bf16.xpose.msra.mxu0 0
        %1552 = vmatpush.bf16.xpose.msra.mxu0 0
        %1553 = vmatpush.bf16.xpose.msra.mxu0 0
        %1554 = vmatpush.bf16.xpose.msra.mxu0 %v1545
        %1555 = vmatmul.bf16.gmra.mxu0 %v1542
        %v1556 = vpop.f32.mrf.mxu0
        %v1557 = vadd.f32 0.0, %v1556
        %v1558 = vpop.f32.mrf.mxu0
        %v1559 = vadd.f32 0.0, %v1558
        %1560 = vdwg.mxu0
        %v1563 = vunpack.c.l.b16 %v769
        %v1564 = vunpack.c.l.b16 %v770
        %v1565 = vpack.c.b16 %v1564, %v1563
        %v1568 = vunpack.c.l.b16 %v993
        %v1569 = vunpack.c.l.b16 %v994
        %v1570 = vpack.c.b16 %v1569, %v1568
        %v1572 = vsel %vm401, %v1565, 0
        %v1575 = vsel %vm401, %v1570, 0
        %1577 = vmatpush.bf16.xpose.msra.mxu0 0
        %1578 = vmatpush.bf16.xpose.msra.mxu0 0
        %1579 = vmatpush.bf16.xpose.msra.mxu0 0
        %1580 = vmatpush.bf16.xpose.msra.mxu0 0
        %1581 = vmatpush.bf16.xpose.msra.mxu0 0
        %1582 = vmatpush.bf16.xpose.msra.mxu0 0
        %1583 = vmatpush.bf16.xpose.msra.mxu0 0
        %1584 = vmatpush.bf16.xpose.msra.mxu0 %v1575
        %1585 = vmatmul.bf16.gmra.mxu0 %v1572
        %v1586 = vpop.f32.mrf.mxu0
        %v1587 = vadd.f32 0.0, %v1586
        %v1588 = vpop.f32.mrf.mxu0
        %v1589 = vadd.f32 0.0, %v1588
        %1590 = vdwg.mxu0
        %v1593 = vunpack.c.l.b16 %v771
        %v1594 = vunpack.c.l.b16 %v772
        %v1595 = vpack.c.b16 %v1594, %v1593
        %v1598 = vunpack.c.l.b16 %v995
        %v1599 = vunpack.c.l.b16 %v996
        %v1600 = vpack.c.b16 %v1599, %v1598
        %v1602 = vsel %vm401, %v1595, 0
        %v1605 = vsel %vm401, %v1600, 0
        %1607 = vmatpush.bf16.xpose.msra.mxu0 0
        %1608 = vmatpush.bf16.xpose.msra.mxu0 0
        %1609 = vmatpush.bf16.xpose.msra.mxu0 0
        %1610 = vmatpush.bf16.xpose.msra.mxu0 0
        %1611 = vmatpush.bf16.xpose.msra.mxu0 0
        %1612 = vmatpush.bf16.xpose.msra.mxu0 0
        %1613 = vmatpush.bf16.xpose.msra.mxu0 0
        %1614 = vmatpush.bf16.xpose.msra.mxu0 %v1605
        %1615 = vmatmul.bf16.gmra.mxu0 %v1602
        %v1616 = vpop.f32.mrf.mxu0
        %v1617 = vadd.f32 0.0, %v1616
        %v1618 = vpop.f32.mrf.mxu0
        %v1619 = vadd.f32 0.0, %v1618
        %1620 = vdwg.mxu0
        %v1623 = vunpack.c.l.b16 %v773
        %v1624 = vunpack.c.l.b16 %v774
        %v1625 = vpack.c.b16 %v1624, %v1623
        %v1628 = vunpack.c.l.b16 %v997
        %v1629 = vunpack.c.l.b16 %v998
        %v1630 = vpack.c.b16 %v1629, %v1628
        %v1632 = vsel %vm401, %v1625, 0
        %v1635 = vsel %vm401, %v1630, 0
        %1637 = vmatpush.bf16.xpose.msra.mxu0 0
        %1638 = vmatpush.bf16.xpose.msra.mxu0 0
        %1639 = vmatpush.bf16.xpose.msra.mxu0 0
        %1640 = vmatpush.bf16.xpose.msra.mxu0 0
        %1641 = vmatpush.bf16.xpose.msra.mxu0 0
        %1642 = vmatpush.bf16.xpose.msra.mxu0 0
        %1643 = vmatpush.bf16.xpose.msra.mxu0 0
        %1644 = vmatpush.bf16.xpose.msra.mxu0 %v1635
        %1645 = vmatmul.bf16.gmra.mxu0 %v1632
        %v1646 = vpop.f32.mrf.mxu0
        %v1647 = vadd.f32 0.0, %v1646
        %v1648 = vpop.f32.mrf.mxu0
        %v1649 = vadd.f32 0.0, %v1648
        %1650 = vdwg.mxu0
        %v1653 = vunpack.c.l.b16 %v775
        %v1654 = vunpack.c.l.b16 %v776
        %v1655 = vpack.c.b16 %v1654, %v1653
        %v1658 = vunpack.c.l.b16 %v999
        %v1659 = vunpack.c.l.b16 %v1000
        %v1660 = vpack.c.b16 %v1659, %v1658
        %v1662 = vsel %vm401, %v1655, 0
        %v1665 = vsel %vm401, %v1660, 0
        %1667 = vmatpush.bf16.xpose.msra.mxu0 0
        %1668 = vmatpush.bf16.xpose.msra.mxu0 0
        %1669 = vmatpush.bf16.xpose.msra.mxu0 0
        %1670 = vmatpush.bf16.xpose.msra.mxu0 0
        %1671 = vmatpush.bf16.xpose.msra.mxu0 0
        %1672 = vmatpush.bf16.xpose.msra.mxu0 0
        %1673 = vmatpush.bf16.xpose.msra.mxu0 0
        %1674 = vmatpush.bf16.xpose.msra.mxu0 %v1665
        %1675 = vmatmul.bf16.gmra.mxu0 %v1662
        %v1676 = vpop.f32.mrf.mxu0
        %v1677 = vadd.f32 0.0, %v1676
        %v1678 = vpop.f32.mrf.mxu0
        %v1679 = vadd.f32 0.0, %v1678
        %1680 = vdwg.mxu0
        %v1683 = vunpack.c.l.b16 %v777
        %v1684 = vunpack.c.l.b16 %v778
        %v1685 = vpack.c.b16 %v1684, %v1683
        %v1688 = vunpack.c.l.b16 %v1001
        %v1689 = vunpack.c.l.b16 %v1002
        %v1690 = vpack.c.b16 %v1689, %v1688
        %v1692 = vsel %vm401, %v1685, 0
        %v1695 = vsel %vm401, %v1690, 0
        %1697 = vmatpush.bf16.xpose.msra.mxu0 0
        %1698 = vmatpush.bf16.xpose.msra.mxu0 0
        %1699 = vmatpush.bf16.xpose.msra.mxu0 0
        %1700 = vmatpush.bf16.xpose.msra.mxu0 0
        %1701 = vmatpush.bf16.xpose.msra.mxu0 0
        %1702 = vmatpush.bf16.xpose.msra.mxu0 0
        %1703 = vmatpush.bf16.xpose.msra.mxu0 0
        %1704 = vmatpush.bf16.xpose.msra.mxu0 %v1695
        %1705 = vmatmul.bf16.gmra.mxu0 %v1692
        %v1706 = vpop.f32.mrf.mxu0
        %v1707 = vadd.f32 0.0, %v1706
        %v1708 = vpop.f32.mrf.mxu0
        %v1709 = vadd.f32 0.0, %v1708
        %1710 = vdwg.mxu0
        %v1713 = vunpack.c.l.b16 %v779
        %v1714 = vunpack.c.l.b16 %v780
        %v1715 = vpack.c.b16 %v1714, %v1713
        %v1718 = vunpack.c.l.b16 %v1003
        %v1719 = vunpack.c.l.b16 %v1004
        %v1720 = vpack.c.b16 %v1719, %v1718
        %v1722 = vsel %vm401, %v1715, 0
        %v1725 = vsel %vm401, %v1720, 0
        %1727 = vmatpush.bf16.xpose.msra.mxu0 0
        %1728 = vmatpush.bf16.xpose.msra.mxu0 0
        %1729 = vmatpush.bf16.xpose.msra.mxu0 0
        %1730 = vmatpush.bf16.xpose.msra.mxu0 0
        %1731 = vmatpush.bf16.xpose.msra.mxu0 0
        %1732 = vmatpush.bf16.xpose.msra.mxu0 0
        %1733 = vmatpush.bf16.xpose.msra.mxu0 0
        %1734 = vmatpush.bf16.xpose.msra.mxu0 %v1725
        %1735 = vmatmul.bf16.gmra.mxu0 %v1722
        %v1736 = vpop.f32.mrf.mxu0
        %v1737 = vadd.f32 0.0, %v1736
        %v1738 = vpop.f32.mrf.mxu0
        %v1739 = vadd.f32 0.0, %v1738
        %1740 = vdwg.mxu0
        %v1743 = vunpack.c.l.b16 %v781
        %v1744 = vunpack.c.l.b16 %v782
        %v1745 = vpack.c.b16 %v1744, %v1743
        %v1748 = vunpack.c.l.b16 %v1005
        %v1749 = vunpack.c.l.b16 %v1006
        %v1750 = vpack.c.b16 %v1749, %v1748
        %v1752 = vsel %vm401, %v1745, 0
        %v1755 = vsel %vm401, %v1750, 0
        %1757 = vmatpush.bf16.xpose.msra.mxu0 0
        %1758 = vmatpush.bf16.xpose.msra.mxu0 0
        %1759 = vmatpush.bf16.xpose.msra.mxu0 0
        %1760 = vmatpush.bf16.xpose.msra.mxu0 0
        %1761 = vmatpush.bf16.xpose.msra.mxu0 0
        %1762 = vmatpush.bf16.xpose.msra.mxu0 0
        %1763 = vmatpush.bf16.xpose.msra.mxu0 0
        %1764 = vmatpush.bf16.xpose.msra.mxu0 %v1755
        %1765 = vmatmul.bf16.gmra.mxu0 %v1752
        %v1766 = vpop.f32.mrf.mxu0
        %v1767 = vadd.f32 0.0, %v1766
        %v1768 = vpop.f32.mrf.mxu0
        %v1769 = vadd.f32 0.0, %v1768
        %1770 = vdwg.mxu0
        %v1773 = vunpack.c.l.b16 %v783
        %v1774 = vunpack.c.l.b16 %v784
        %v1775 = vpack.c.b16 %v1774, %v1773
        %v1778 = vunpack.c.l.b16 %v1007
        %v1779 = vunpack.c.l.b16 %v1008
        %v1780 = vpack.c.b16 %v1779, %v1778
        %v1782 = vsel %vm401, %v1775, 0
        %v1785 = vsel %vm401, %v1780, 0
        %1787 = vmatpush.bf16.xpose.msra.mxu0 0
        %1788 = vmatpush.bf16.xpose.msra.mxu0 0
        %1789 = vmatpush.bf16.xpose.msra.mxu0 0
        %1790 = vmatpush.bf16.xpose.msra.mxu0 0
        %1791 = vmatpush.bf16.xpose.msra.mxu0 0
        %1792 = vmatpush.bf16.xpose.msra.mxu0 0
        %1793 = vmatpush.bf16.xpose.msra.mxu0 0
        %1794 = vmatpush.bf16.xpose.msra.mxu0 %v1785
        %1795 = vmatmul.bf16.gmra.mxu0 %v1782
        %v1796 = vpop.f32.mrf.mxu0
        %v1797 = vadd.f32 0.0, %v1796
        %v1798 = vpop.f32.mrf.mxu0
        %v1799 = vadd.f32 0.0, %v1798
        %1800 = vdwg.mxu0
        %v1803 = vunpack.c.l.b16 %v785
        %v1804 = vunpack.c.l.b16 %v786
        %v1805 = vpack.c.b16 %v1804, %v1803
        %v1808 = vunpack.c.l.b16 %v1009
        %v1809 = vunpack.c.l.b16 %v1010
        %v1810 = vpack.c.b16 %v1809, %v1808
        %v1812 = vsel %vm401, %v1805, 0
        %v1815 = vsel %vm401, %v1810, 0
        %1817 = vmatpush.bf16.xpose.msra.mxu0 0
        %1818 = vmatpush.bf16.xpose.msra.mxu0 0
        %1819 = vmatpush.bf16.xpose.msra.mxu0 0
        %1820 = vmatpush.bf16.xpose.msra.mxu0 0
        %1821 = vmatpush.bf16.xpose.msra.mxu0 0
        %1822 = vmatpush.bf16.xpose.msra.mxu0 0
        %1823 = vmatpush.bf16.xpose.msra.mxu0 0
        %1824 = vmatpush.bf16.xpose.msra.mxu0 %v1815
        %1825 = vmatmul.bf16.gmra.mxu0 %v1812
        %v1826 = vpop.f32.mrf.mxu0
        %v1827 = vadd.f32 0.0, %v1826
        %v1828 = vpop.f32.mrf.mxu0
        %v1829 = vadd.f32 0.0, %v1828
        %1830 = vdwg.mxu0
        %v1833 = vunpack.c.l.b16 %v787
        %v1834 = vunpack.c.l.b16 %v788
        %v1835 = vpack.c.b16 %v1834, %v1833
        %v1838 = vunpack.c.l.b16 %v1011
        %v1839 = vunpack.c.l.b16 %v1012
        %v1840 = vpack.c.b16 %v1839, %v1838
        %v1842 = vsel %vm401, %v1835, 0
        %v1845 = vsel %vm401, %v1840, 0
        %1847 = vmatpush.bf16.xpose.msra.mxu0 0
        %1848 = vmatpush.bf16.xpose.msra.mxu0 0
        %1849 = vmatpush.bf16.xpose.msra.mxu0 0
        %1850 = vmatpush.bf16.xpose.msra.mxu0 0
        %1851 = vmatpush.bf16.xpose.msra.mxu0 0
        %1852 = vmatpush.bf16.xpose.msra.mxu0 0
        %1853 = vmatpush.bf16.xpose.msra.mxu0 0
        %1854 = vmatpush.bf16.xpose.msra.mxu0 %v1845
        %1855 = vmatmul.bf16.gmra.mxu0 %v1842
        %v1856 = vpop.f32.mrf.mxu0
        %v1857 = vadd.f32 0.0, %v1856
        %v1858 = vpop.f32.mrf.mxu0
        %v1859 = vadd.f32 0.0, %v1858
        %1860 = vdwg.mxu0
        %v1863 = vunpack.c.l.b16 %v789
        %v1864 = vunpack.c.l.b16 %v790
        %v1865 = vpack.c.b16 %v1864, %v1863
        %v1868 = vunpack.c.l.b16 %v1013
        %v1869 = vunpack.c.l.b16 %v1014
        %v1870 = vpack.c.b16 %v1869, %v1868
        %v1872 = vsel %vm401, %v1865, 0
        %v1875 = vsel %vm401, %v1870, 0
        %1877 = vmatpush.bf16.xpose.msra.mxu0 0
        %1878 = vmatpush.bf16.xpose.msra.mxu0 0
        %1879 = vmatpush.bf16.xpose.msra.mxu0 0
        %1880 = vmatpush.bf16.xpose.msra.mxu0 0
        %1881 = vmatpush.bf16.xpose.msra.mxu0 0
        %1882 = vmatpush.bf16.xpose.msra.mxu0 0
        %1883 = vmatpush.bf16.xpose.msra.mxu0 0
        %1884 = vmatpush.bf16.xpose.msra.mxu0 %v1875
        %1885 = vmatmul.bf16.gmra.mxu0 %v1872
        %v1886 = vpop.f32.mrf.mxu0
        %v1887 = vadd.f32 0.0, %v1886
        %v1888 = vpop.f32.mrf.mxu0
        %v1889 = vadd.f32 0.0, %v1888
        %1890 = vdwg.mxu0
        %v1893 = vunpack.c.l.b16 %v791
        %v1894 = vunpack.c.l.b16 %v792
        %v1895 = vpack.c.b16 %v1894, %v1893
        %v1898 = vunpack.c.l.b16 %v1015
        %v1899 = vunpack.c.l.b16 %v1016
        %v1900 = vpack.c.b16 %v1899, %v1898
        %v1902 = vsel %vm401, %v1895, 0
        %v1905 = vsel %vm401, %v1900, 0
        %1907 = vmatpush.bf16.xpose.msra.mxu0 0
        %1908 = vmatpush.bf16.xpose.msra.mxu0 0
        %1909 = vmatpush.bf16.xpose.msra.mxu0 0
        %1910 = vmatpush.bf16.xpose.msra.mxu0 0
        %1911 = vmatpush.bf16.xpose.msra.mxu0 0
        %1912 = vmatpush.bf16.xpose.msra.mxu0 0
        %1913 = vmatpush.bf16.xpose.msra.mxu0 0
        %1914 = vmatpush.bf16.xpose.msra.mxu0 %v1905
        %1915 = vmatmul.bf16.gmra.mxu0 %v1902
        %v1916 = vpop.f32.mrf.mxu0
        %v1917 = vadd.f32 0.0, %v1916
        %v1918 = vpop.f32.mrf.mxu0
        %v1919 = vadd.f32 0.0, %v1918
        %1920 = vdwg.mxu0
        %v1923 = vunpack.c.l.b16 %v793
        %v1924 = vunpack.c.l.b16 %v794
        %v1925 = vpack.c.b16 %v1924, %v1923
        %v1928 = vunpack.c.l.b16 %v1017
        %v1929 = vunpack.c.l.b16 %v1018
        %v1930 = vpack.c.b16 %v1929, %v1928
        %v1932 = vsel %vm401, %v1925, 0
        %v1935 = vsel %vm401, %v1930, 0
        %1937 = vmatpush.bf16.xpose.msra.mxu0 0
        %1938 = vmatpush.bf16.xpose.msra.mxu0 0
        %1939 = vmatpush.bf16.xpose.msra.mxu0 0
        %1940 = vmatpush.bf16.xpose.msra.mxu0 0
        %1941 = vmatpush.bf16.xpose.msra.mxu0 0
        %1942 = vmatpush.bf16.xpose.msra.mxu0 0
        %1943 = vmatpush.bf16.xpose.msra.mxu0 0
        %1944 = vmatpush.bf16.xpose.msra.mxu0 %v1935
        %1945 = vmatmul.bf16.gmra.mxu0 %v1932
        %v1946 = vpop.f32.mrf.mxu0
        %v1947 = vadd.f32 0.0, %v1946
        %v1948 = vpop.f32.mrf.mxu0
        %v1949 = vadd.f32 0.0, %v1948
        %1950 = vdwg.mxu0
        %v1953 = vunpack.c.l.b16 %v795
        %v1954 = vunpack.c.l.b16 %v796
        %v1955 = vpack.c.b16 %v1954, %v1953
        %v1958 = vunpack.c.l.b16 %v1019
        %v1959 = vunpack.c.l.b16 %v1020
        %v1960 = vpack.c.b16 %v1959, %v1958
        %v1962 = vsel %vm401, %v1955, 0
        %v1965 = vsel %vm401, %v1960, 0
        %1967 = vmatpush.bf16.xpose.msra.mxu0 0
        %1968 = vmatpush.bf16.xpose.msra.mxu0 0
        %1969 = vmatpush.bf16.xpose.msra.mxu0 0
        %1970 = vmatpush.bf16.xpose.msra.mxu0 0
        %1971 = vmatpush.bf16.xpose.msra.mxu0 0
        %1972 = vmatpush.bf16.xpose.msra.mxu0 0
        %1973 = vmatpush.bf16.xpose.msra.mxu0 0
        %1974 = vmatpush.bf16.xpose.msra.mxu0 %v1965
        %1975 = vmatmul.bf16.gmra.mxu0 %v1962
        %v1976 = vpop.f32.mrf.mxu0
        %v1977 = vadd.f32 0.0, %v1976
        %v1978 = vpop.f32.mrf.mxu0
        %v1979 = vadd.f32 0.0, %v1978
        %1980 = vdwg.mxu0
        %v1983 = vunpack.c.l.b16 %v797
        %v1984 = vunpack.c.l.b16 %v798
        %v1985 = vpack.c.b16 %v1984, %v1983
        %v1988 = vunpack.c.l.b16 %v1021
        %v1989 = vunpack.c.l.b16 %v1022
        %v1990 = vpack.c.b16 %v1989, %v1988
        %v1992 = vsel %vm401, %v1985, 0
        %v1995 = vsel %vm401, %v1990, 0
        %1997 = vmatpush.bf16.xpose.msra.mxu0 0
        %1998 = vmatpush.bf16.xpose.msra.mxu0 0
        %1999 = vmatpush.bf16.xpose.msra.mxu0 0
        %2000 = vmatpush.bf16.xpose.msra.mxu0 0
        %2001 = vmatpush.bf16.xpose.msra.mxu0 0
        %2002 = vmatpush.bf16.xpose.msra.mxu0 0
        %2003 = vmatpush.bf16.xpose.msra.mxu0 0
        %2004 = vmatpush.bf16.xpose.msra.mxu0 %v1995
        %2005 = vmatmul.bf16.gmra.mxu0 %v1992
        %v2006 = vpop.f32.mrf.mxu0
        %v2007 = vadd.f32 0.0, %v2006
        %v2008 = vpop.f32.mrf.mxu0
        %v2009 = vadd.f32 0.0, %v2008
        %2010 = vdwg.mxu0
        %v2013 = vunpack.c.l.b16 %v799
        %v2014 = vunpack.c.l.b16 %v800
        %v2015 = vpack.c.b16 %v2014, %v2013
        %v2018 = vunpack.c.l.b16 %v1023
        %v2019 = vunpack.c.l.b16 %v1024
        %v2020 = vpack.c.b16 %v2019, %v2018
        %v2022 = vsel %vm401, %v2015, 0
        %v2025 = vsel %vm401, %v2020, 0
        %2027 = vmatpush.bf16.xpose.msra.mxu0 0
        %2028 = vmatpush.bf16.xpose.msra.mxu0 0
        %2029 = vmatpush.bf16.xpose.msra.mxu0 0
        %2030 = vmatpush.bf16.xpose.msra.mxu0 0
        %2031 = vmatpush.bf16.xpose.msra.mxu0 0
        %2032 = vmatpush.bf16.xpose.msra.mxu0 0
        %2033 = vmatpush.bf16.xpose.msra.mxu0 0
        %2034 = vmatpush.bf16.xpose.msra.mxu0 %v2025
        %2035 = vmatmul.bf16.gmra.mxu0 %v2022
        %v2036 = vpop.f32.mrf.mxu0
        %v2037 = vadd.f32 0.0, %v2036
        %v2038 = vpop.f32.mrf.mxu0
        %v2039 = vadd.f32 0.0, %v2038
        %2040 = vdwg.mxu0
        %v2043 = vunpack.c.l.b16 %v801
        %v2044 = vunpack.c.l.b16 %v802
        %v2045 = vpack.c.b16 %v2044, %v2043
        %v2048 = vunpack.c.l.b16 %v1025
        %v2049 = vunpack.c.l.b16 %v1026
        %v2050 = vpack.c.b16 %v2049, %v2048
        %v2052 = vsel %vm401, %v2045, 0
        %v2055 = vsel %vm401, %v2050, 0
        %2057 = vmatpush.bf16.xpose.msra.mxu0 0
        %2058 = vmatpush.bf16.xpose.msra.mxu0 0
        %2059 = vmatpush.bf16.xpose.msra.mxu0 0
        %2060 = vmatpush.bf16.xpose.msra.mxu0 0
        %2061 = vmatpush.bf16.xpose.msra.mxu0 0
        %2062 = vmatpush.bf16.xpose.msra.mxu0 0
        %2063 = vmatpush.bf16.xpose.msra.mxu0 0
        %2064 = vmatpush.bf16.xpose.msra.mxu0 %v2055
        %2065 = vmatmul.bf16.gmra.mxu0 %v2052
        %v2066 = vpop.f32.mrf.mxu0
        %v2067 = vadd.f32 0.0, %v2066
        %v2068 = vpop.f32.mrf.mxu0
        %v2069 = vadd.f32 0.0, %v2068
        %2070 = vdwg.mxu0
        %v2073 = vunpack.c.l.b16 %v803
        %v2074 = vunpack.c.l.b16 %v804
        %v2075 = vpack.c.b16 %v2074, %v2073
        %v2078 = vunpack.c.l.b16 %v1027
        %v2079 = vunpack.c.l.b16 %v1028
        %v2080 = vpack.c.b16 %v2079, %v2078
        %v2082 = vsel %vm401, %v2075, 0
        %v2085 = vsel %vm401, %v2080, 0
        %2087 = vmatpush.bf16.xpose.msra.mxu0 0
        %2088 = vmatpush.bf16.xpose.msra.mxu0 0
        %2089 = vmatpush.bf16.xpose.msra.mxu0 0
        %2090 = vmatpush.bf16.xpose.msra.mxu0 0
        %2091 = vmatpush.bf16.xpose.msra.mxu0 0
        %2092 = vmatpush.bf16.xpose.msra.mxu0 0
        %2093 = vmatpush.bf16.xpose.msra.mxu0 0
        %2094 = vmatpush.bf16.xpose.msra.mxu0 %v2085
        %2095 = vmatmul.bf16.gmra.mxu0 %v2082
        %v2096 = vpop.f32.mrf.mxu0
        %v2097 = vadd.f32 0.0, %v2096
        %v2098 = vpop.f32.mrf.mxu0
        %v2099 = vadd.f32 0.0, %v2098
        %2100 = vdwg.mxu0
        %v2103 = vunpack.c.l.b16 %v805
        %v2104 = vunpack.c.l.b16 %v806
        %v2105 = vpack.c.b16 %v2104, %v2103
        %v2108 = vunpack.c.l.b16 %v1029
        %v2109 = vunpack.c.l.b16 %v1030
        %v2110 = vpack.c.b16 %v2109, %v2108
        %v2112 = vsel %vm401, %v2105, 0
        %v2115 = vsel %vm401, %v2110, 0
        %2117 = vmatpush.bf16.xpose.msra.mxu0 0
        %2118 = vmatpush.bf16.xpose.msra.mxu0 0
        %2119 = vmatpush.bf16.xpose.msra.mxu0 0
        %2120 = vmatpush.bf16.xpose.msra.mxu0 0
        %2121 = vmatpush.bf16.xpose.msra.mxu0 0
        %2122 = vmatpush.bf16.xpose.msra.mxu0 0
        %2123 = vmatpush.bf16.xpose.msra.mxu0 0
        %2124 = vmatpush.bf16.xpose.msra.mxu0 %v2115
        %2125 = vmatmul.bf16.gmra.mxu0 %v2112
        %v2126 = vpop.f32.mrf.mxu0
        %v2127 = vadd.f32 0.0, %v2126
        %v2128 = vpop.f32.mrf.mxu0
        %v2129 = vadd.f32 0.0, %v2128
        %2130 = vdwg.mxu0
        %v2133 = vunpack.c.l.b16 %v807
        %v2134 = vunpack.c.l.b16 %v808
        %v2135 = vpack.c.b16 %v2134, %v2133
        %v2138 = vunpack.c.l.b16 %v1031
        %v2139 = vunpack.c.l.b16 %v1032
        %v2140 = vpack.c.b16 %v2139, %v2138
        %v2142 = vsel %vm401, %v2135, 0
        %v2145 = vsel %vm401, %v2140, 0
        %2147 = vmatpush.bf16.xpose.msra.mxu0 0
        %2148 = vmatpush.bf16.xpose.msra.mxu0 0
        %2149 = vmatpush.bf16.xpose.msra.mxu0 0
        %2150 = vmatpush.bf16.xpose.msra.mxu0 0
        %2151 = vmatpush.bf16.xpose.msra.mxu0 0
        %2152 = vmatpush.bf16.xpose.msra.mxu0 0
        %2153 = vmatpush.bf16.xpose.msra.mxu0 0
        %2154 = vmatpush.bf16.xpose.msra.mxu0 %v2145
        %2155 = vmatmul.bf16.gmra.mxu0 %v2142
        %v2156 = vpop.f32.mrf.mxu0
        %v2157 = vadd.f32 0.0, %v2156
        %v2158 = vpop.f32.mrf.mxu0
        %v2159 = vadd.f32 0.0, %v2158
        %2160 = vdwg.mxu0
        %v2163 = vunpack.c.l.b16 %v809
        %v2164 = vunpack.c.l.b16 %v810
        %v2165 = vpack.c.b16 %v2164, %v2163
        %v2168 = vunpack.c.l.b16 %v1033
        %v2169 = vunpack.c.l.b16 %v1034
        %v2170 = vpack.c.b16 %v2169, %v2168
        %v2172 = vsel %vm401, %v2165, 0
        %v2175 = vsel %vm401, %v2170, 0
        %2177 = vmatpush.bf16.xpose.msra.mxu0 0
        %2178 = vmatpush.bf16.xpose.msra.mxu0 0
        %2179 = vmatpush.bf16.xpose.msra.mxu0 0
        %2180 = vmatpush.bf16.xpose.msra.mxu0 0
        %2181 = vmatpush.bf16.xpose.msra.mxu0 0
        %2182 = vmatpush.bf16.xpose.msra.mxu0 0
        %2183 = vmatpush.bf16.xpose.msra.mxu0 0
        %2184 = vmatpush.bf16.xpose.msra.mxu0 %v2175
        %2185 = vmatmul.bf16.gmra.mxu0 %v2172
        %v2186 = vpop.f32.mrf.mxu0
        %v2187 = vadd.f32 0.0, %v2186
        %v2188 = vpop.f32.mrf.mxu0
        %v2189 = vadd.f32 0.0, %v2188
        %2190 = vdwg.mxu0
        %v2193 = vunpack.c.l.b16 %v811
        %v2194 = vunpack.c.l.b16 %v812
        %v2195 = vpack.c.b16 %v2194, %v2193
        %v2198 = vunpack.c.l.b16 %v1035
        %v2199 = vunpack.c.l.b16 %v1036
        %v2200 = vpack.c.b16 %v2199, %v2198
        %v2202 = vsel %vm401, %v2195, 0
        %v2205 = vsel %vm401, %v2200, 0
        %2207 = vmatpush.bf16.xpose.msra.mxu0 0
        %2208 = vmatpush.bf16.xpose.msra.mxu0 0
        %2209 = vmatpush.bf16.xpose.msra.mxu0 0
        %2210 = vmatpush.bf16.xpose.msra.mxu0 0
        %2211 = vmatpush.bf16.xpose.msra.mxu0 0
        %2212 = vmatpush.bf16.xpose.msra.mxu0 0
        %2213 = vmatpush.bf16.xpose.msra.mxu0 0
        %2214 = vmatpush.bf16.xpose.msra.mxu0 %v2205
        %2215 = vmatmul.bf16.gmra.mxu0 %v2202
        %v2216 = vpop.f32.mrf.mxu0
        %v2217 = vadd.f32 0.0, %v2216
        %v2218 = vpop.f32.mrf.mxu0
        %v2219 = vadd.f32 0.0, %v2218
        %2220 = vdwg.mxu0
        %vm2221 = vcmask 130048
        %v2222 = vsel %vm2221, %v1287, -inf
        %2223 = vmax.xlane.f32.xlu0 %v2222
        %v2224 = vpop.xlane.xlu0 %2223
        %v2225 = vsel %vm2221, %v1289, -inf
        %2226 = vmax.xlane.f32.xlu0 %v2225
        %v2227 = vpop.xlane.xlu0 %2226
        %v2228 = vsel %vm2221, %v1317, -inf
        %2229 = vmax.xlane.f32.xlu0 %v2228
        %v2230 = vpop.xlane.xlu0 %2229
        %v2231 = vsel %vm2221, %v1319, -inf
        %2232 = vmax.xlane.f32.xlu0 %v2231
        %v2233 = vpop.xlane.xlu0 %2232
        %v2234 = vsel %vm2221, %v1347, -inf
        %2235 = vmax.xlane.f32.xlu0 %v2234
        %v2236 = vpop.xlane.xlu0 %2235
        %v2237 = vsel %vm2221, %v1349, -inf
        %2238 = vmax.xlane.f32.xlu0 %v2237
        %v2239 = vpop.xlane.xlu0 %2238
        %v2240 = vsel %vm2221, %v1377, -inf
        %2241 = vmax.xlane.f32.xlu0 %v2240
        %v2242 = vpop.xlane.xlu0 %2241
        %v2243 = vsel %vm2221, %v1379, -inf
        %2244 = vmax.xlane.f32.xlu0 %v2243
        %v2245 = vpop.xlane.xlu0 %2244
        %v2246 = vsel %vm2221, %v1407, -inf
        %2247 = vmax.xlane.f32.xlu0 %v2246
        %v2248 = vpop.xlane.xlu0 %2247
        %v2249 = vsel %vm2221, %v1409, -inf
        %2250 = vmax.xlane.f32.xlu0 %v2249
        %v2251 = vpop.xlane.xlu0 %2250
        %v2252 = vsel %vm2221, %v1437, -inf
        %2253 = vmax.xlane.f32.xlu0 %v2252
        %v2254 = vpop.xlane.xlu0 %2253
        %v2255 = vsel %vm2221, %v1439, -inf
        %2256 = vmax.xlane.f32.xlu0 %v2255
        %v2257 = vpop.xlane.xlu0 %2256
        %v2258 = vsel %vm2221, %v1467, -inf
        %2259 = vmax.xlane.f32.xlu0 %v2258
        %v2260 = vpop.xlane.xlu0 %2259
        %v2261 = vsel %vm2221, %v1469, -inf
        %2262 = vmax.xlane.f32.xlu0 %v2261
        %v2263 = vpop.xlane.xlu0 %2262
        %v2264 = vsel %vm2221, %v1497, -inf
        %2265 = vmax.xlane.f32.xlu0 %v2264
        %v2266 = vpop.xlane.xlu0 %2265
        %v2267 = vsel %vm2221, %v1499, -inf
        %2268 = vmax.xlane.f32.xlu0 %v2267
        %v2269 = vpop.xlane.xlu0 %2268
        %v2270 = vsel %vm2221, %v1527, -inf
        %2271 = vmax.xlane.f32.xlu0 %v2270
        %v2272 = vpop.xlane.xlu0 %2271
        %v2273 = vsel %vm2221, %v1529, -inf
        %2274 = vmax.xlane.f32.xlu0 %v2273
        %v2275 = vpop.xlane.xlu0 %2274
        %v2276 = vsel %vm2221, %v1557, -inf
        %2277 = vmax.xlane.f32.xlu0 %v2276
        %v2278 = vpop.xlane.xlu0 %2277
        %v2279 = vsel %vm2221, %v1559, -inf
        %2280 = vmax.xlane.f32.xlu0 %v2279
        %v2281 = vpop.xlane.xlu0 %2280
        %v2282 = vsel %vm2221, %v1587, -inf
        %2283 = vmax.xlane.f32.xlu0 %v2282
        %v2284 = vpop.xlane.xlu0 %2283
        %v2285 = vsel %vm2221, %v1589, -inf
        %2286 = vmax.xlane.f32.xlu0 %v2285
        %v2287 = vpop.xlane.xlu0 %2286
        %v2288 = vsel %vm2221, %v1617, -inf
        %2289 = vmax.xlane.f32.xlu0 %v2288
        %v2290 = vpop.xlane.xlu0 %2289
        %v2291 = vsel %vm2221, %v1619, -inf
        %2292 = vmax.xlane.f32.xlu0 %v2291
        %v2293 = vpop.xlane.xlu0 %2292
        %v2294 = vsel %vm2221, %v1647, -inf
        %2295 = vmax.xlane.f32.xlu0 %v2294
        %v2296 = vpop.xlane.xlu0 %2295
        %v2297 = vsel %vm2221, %v1649, -inf
        %2298 = vmax.xlane.f32.xlu0 %v2297
        %v2299 = vpop.xlane.xlu0 %2298
        %v2300 = vsel %vm2221, %v1677, -inf
        %2301 = vmax.xlane.f32.xlu0 %v2300
        %v2302 = vpop.xlane.xlu0 %2301
        %v2303 = vsel %vm2221, %v1679, -inf
        %2304 = vmax.xlane.f32.xlu0 %v2303
        %v2305 = vpop.xlane.xlu0 %2304
        %v2306 = vsel %vm2221, %v1707, -inf
        %2307 = vmax.xlane.f32.xlu0 %v2306
        %v2308 = vpop.xlane.xlu0 %2307
        %v2309 = vsel %vm2221, %v1709, -inf
        %2310 = vmax.xlane.f32.xlu0 %v2309
        %v2311 = vpop.xlane.xlu0 %2310
        %v2312 = vsel %vm2221, %v1737, -inf
        %2313 = vmax.xlane.f32.xlu0 %v2312
        %v2314 = vpop.xlane.xlu0 %2313
        %v2315 = vsel %vm2221, %v1739, -inf
        %2316 = vmax.xlane.f32.xlu0 %v2315
        %v2317 = vpop.xlane.xlu0 %2316
        %v2318 = vsel %vm2221, %v1767, -inf
        %2319 = vmax.xlane.f32.xlu0 %v2318
        %v2320 = vpop.xlane.xlu0 %2319
        %v2321 = vsel %vm2221, %v1769, -inf
        %2322 = vmax.xlane.f32.xlu0 %v2321
        %v2323 = vpop.xlane.xlu0 %2322
        %v2324 = vsel %vm2221, %v1797, -inf
        %2325 = vmax.xlane.f32.xlu0 %v2324
        %v2326 = vpop.xlane.xlu0 %2325
        %v2327 = vsel %vm2221, %v1799, -inf
        %2328 = vmax.xlane.f32.xlu0 %v2327
        %v2329 = vpop.xlane.xlu0 %2328
        %v2330 = vsel %vm2221, %v1827, -inf
        %2331 = vmax.xlane.f32.xlu0 %v2330
        %v2332 = vpop.xlane.xlu0 %2331
        %v2333 = vsel %vm2221, %v1829, -inf
        %2334 = vmax.xlane.f32.xlu0 %v2333
        %v2335 = vpop.xlane.xlu0 %2334
        %v2336 = vsel %vm2221, %v1857, -inf
        %2337 = vmax.xlane.f32.xlu0 %v2336
        %v2338 = vpop.xlane.xlu0 %2337
        %v2339 = vsel %vm2221, %v1859, -inf
        %2340 = vmax.xlane.f32.xlu0 %v2339
        %v2341 = vpop.xlane.xlu0 %2340
        %v2342 = vsel %vm2221, %v1887, -inf
        %2343 = vmax.xlane.f32.xlu0 %v2342
        %v2344 = vpop.xlane.xlu0 %2343
        %v2345 = vsel %vm2221, %v1889, -inf
        %2346 = vmax.xlane.f32.xlu0 %v2345
        %v2347 = vpop.xlane.xlu0 %2346
        %v2348 = vsel %vm2221, %v1917, -inf
        %2349 = vmax.xlane.f32.xlu0 %v2348
        %v2350 = vpop.xlane.xlu0 %2349
        %v2351 = vsel %vm2221, %v1919, -inf
        %2352 = vmax.xlane.f32.xlu0 %v2351
        %v2353 = vpop.xlane.xlu0 %2352
        %v2354 = vsel %vm2221, %v1947, -inf
        %2355 = vmax.xlane.f32.xlu0 %v2354
        %v2356 = vpop.xlane.xlu0 %2355
        %v2357 = vsel %vm2221, %v1949, -inf
        %2358 = vmax.xlane.f32.xlu0 %v2357
        %v2359 = vpop.xlane.xlu0 %2358
        %v2360 = vsel %vm2221, %v1977, -inf
        %2361 = vmax.xlane.f32.xlu0 %v2360
        %v2362 = vpop.xlane.xlu0 %2361
        %v2363 = vsel %vm2221, %v1979, -inf
        %2364 = vmax.xlane.f32.xlu0 %v2363
        %v2365 = vpop.xlane.xlu0 %2364
        %v2366 = vsel %vm2221, %v2007, -inf
        %2367 = vmax.xlane.f32.xlu0 %v2366
        %v2368 = vpop.xlane.xlu0 %2367
        %v2369 = vsel %vm2221, %v2009, -inf
        %2370 = vmax.xlane.f32.xlu0 %v2369
        %v2371 = vpop.xlane.xlu0 %2370
        %v2372 = vsel %vm2221, %v2037, -inf
        %2373 = vmax.xlane.f32.xlu0 %v2372
        %v2374 = vpop.xlane.xlu0 %2373
        %v2375 = vsel %vm2221, %v2039, -inf
        %2376 = vmax.xlane.f32.xlu0 %v2375
        %v2377 = vpop.xlane.xlu0 %2376
        %v2378 = vsel %vm2221, %v2067, -inf
        %2379 = vmax.xlane.f32.xlu0 %v2378
        %v2380 = vpop.xlane.xlu0 %2379
        %v2381 = vsel %vm2221, %v2069, -inf
        %2382 = vmax.xlane.f32.xlu0 %v2381
        %v2383 = vpop.xlane.xlu0 %2382
        %v2384 = vsel %vm2221, %v2097, -inf
        %2385 = vmax.xlane.f32.xlu0 %v2384
        %v2386 = vpop.xlane.xlu0 %2385
        %v2387 = vsel %vm2221, %v2099, -inf
        %2388 = vmax.xlane.f32.xlu0 %v2387
        %v2389 = vpop.xlane.xlu0 %2388
        %v2390 = vsel %vm2221, %v2127, -inf
        %2391 = vmax.xlane.f32.xlu0 %v2390
        %v2392 = vpop.xlane.xlu0 %2391
        %v2393 = vsel %vm2221, %v2129, -inf
        %2394 = vmax.xlane.f32.xlu0 %v2393
        %v2395 = vpop.xlane.xlu0 %2394
        %v2396 = vsel %vm2221, %v2157, -inf
        %2397 = vmax.xlane.f32.xlu0 %v2396
        %v2398 = vpop.xlane.xlu0 %2397
        %v2399 = vsel %vm2221, %v2159, -inf
        %2400 = vmax.xlane.f32.xlu0 %v2399
        %v2401 = vpop.xlane.xlu0 %2400
        %v2402 = vsel %vm2221, %v2187, -inf
        %2403 = vmax.xlane.f32.xlu0 %v2402
        %v2404 = vpop.xlane.xlu0 %2403
        %v2405 = vsel %vm2221, %v2189, -inf
        %2406 = vmax.xlane.f32.xlu0 %v2405
        %v2407 = vpop.xlane.xlu0 %2406
        %v2408 = vsel %vm2221, %v2217, -inf
        %2409 = vmax.xlane.f32.xlu0 %v2408
        %v2410 = vpop.xlane.xlu0 %2409
        %v2411 = vsel %vm2221, %v2219, -inf
        %2412 = vmax.xlane.f32.xlu0 %v2411
        %v2413 = vpop.xlane.xlu0 %2412
        %v2414 = vsub.f32 %v1287, %v2224
        %v2415 = vsub.f32 %v1289, %v2227
        %v2416 = vsub.f32 %v1317, %v2230
        %v2417 = vsub.f32 %v1319, %v2233
        %v2418 = vsub.f32 %v1347, %v2236
        %v2419 = vsub.f32 %v1349, %v2239
        %v2420 = vsub.f32 %v1377, %v2242
        %v2421 = vsub.f32 %v1379, %v2245
        %v2422 = vsub.f32 %v1407, %v2248
        %v2423 = vsub.f32 %v1409, %v2251
        %v2424 = vsub.f32 %v1437, %v2254
        %v2425 = vsub.f32 %v1439, %v2257
        %v2426 = vsub.f32 %v1467, %v2260
        %v2427 = vsub.f32 %v1469, %v2263
        %v2428 = vsub.f32 %v1497, %v2266
        %v2429 = vsub.f32 %v1499, %v2269
        %v2430 = vsub.f32 %v1527, %v2272
        %v2431 = vsub.f32 %v1529, %v2275
        %v2432 = vsub.f32 %v1557, %v2278
        %v2433 = vsub.f32 %v1559, %v2281
        %v2434 = vsub.f32 %v1587, %v2284
        %v2435 = vsub.f32 %v1589, %v2287
        %v2436 = vsub.f32 %v1617, %v2290
        %v2437 = vsub.f32 %v1619, %v2293
        %v2438 = vsub.f32 %v1647, %v2296
        %v2439 = vsub.f32 %v1649, %v2299
        %v2440 = vsub.f32 %v1677, %v2302
        %v2441 = vsub.f32 %v1679, %v2305
        %v2442 = vsub.f32 %v1707, %v2308
        %v2443 = vsub.f32 %v1709, %v2311
        %v2444 = vsub.f32 %v1737, %v2314
        %v2445 = vsub.f32 %v1739, %v2317
        %v2446 = vsub.f32 %v1767, %v2320
        %v2447 = vsub.f32 %v1769, %v2323
        %v2448 = vsub.f32 %v1797, %v2326
        %v2449 = vsub.f32 %v1799, %v2329
        %v2450 = vsub.f32 %v1827, %v2332
        %v2451 = vsub.f32 %v1829, %v2335
        %v2452 = vsub.f32 %v1857, %v2338
        %v2453 = vsub.f32 %v1859, %v2341
        %v2454 = vsub.f32 %v1887, %v2344
        %v2455 = vsub.f32 %v1889, %v2347
        %v2456 = vsub.f32 %v1917, %v2350
        %v2457 = vsub.f32 %v1919, %v2353
        %v2458 = vsub.f32 %v1947, %v2356
        %v2459 = vsub.f32 %v1949, %v2359
        %v2460 = vsub.f32 %v1977, %v2362
        %v2461 = vsub.f32 %v1979, %v2365
        %v2462 = vsub.f32 %v2007, %v2368
        %v2463 = vsub.f32 %v2009, %v2371
        %v2464 = vsub.f32 %v2037, %v2374
        %v2465 = vsub.f32 %v2039, %v2377
        %v2466 = vsub.f32 %v2067, %v2380
        %v2467 = vsub.f32 %v2069, %v2383
        %v2468 = vsub.f32 %v2097, %v2386
        %v2469 = vsub.f32 %v2099, %v2389
        %v2470 = vsub.f32 %v2127, %v2392
        %v2471 = vsub.f32 %v2129, %v2395
        %v2472 = vsub.f32 %v2157, %v2398
        %v2473 = vsub.f32 %v2159, %v2401
        %v2474 = vsub.f32 %v2187, %v2404
        %v2475 = vsub.f32 %v2189, %v2407
        %v2476 = vsub.f32 %v2217, %v2410
        %v2477 = vsub.f32 %v2219, %v2413
        %v2478 = vmul.f32 %v2414, 1.442695
        %v2479 = vpow.pop %v2478
        %v2480 = vmul.f32 %v2415, 1.442695
        %v2481 = vpow.pop %v2480
        %v2482 = vmul.f32 %v2416, 1.442695
        %v2483 = vpow.pop %v2482
        %v2484 = vmul.f32 %v2417, 1.442695
        %v2485 = vpow.pop %v2484
        %v2486 = vmul.f32 %v2418, 1.442695
        %v2487 = vpow.pop %v2486
        %v2488 = vmul.f32 %v2419, 1.442695
        %v2489 = vpow.pop %v2488
        %v2490 = vmul.f32 %v2420, 1.442695
        %v2491 = vpow.pop %v2490
        %v2492 = vmul.f32 %v2421, 1.442695
        %v2493 = vpow.pop %v2492
        %v2494 = vmul.f32 %v2422, 1.442695
        %v2495 = vpow.pop %v2494
        %v2496 = vmul.f32 %v2423, 1.442695
        %v2497 = vpow.pop %v2496
        %v2498 = vmul.f32 %v2424, 1.442695
        %v2499 = vpow.pop %v2498
        %v2500 = vmul.f32 %v2425, 1.442695
        %v2501 = vpow.pop %v2500
        %v2502 = vmul.f32 %v2426, 1.442695
        %v2503 = vpow.pop %v2502
        %v2504 = vmul.f32 %v2427, 1.442695
        %v2505 = vpow.pop %v2504
        %v2506 = vmul.f32 %v2428, 1.442695
        %v2507 = vpow.pop %v2506
        %v2508 = vmul.f32 %v2429, 1.442695
        %v2509 = vpow.pop %v2508
        %v2510 = vmul.f32 %v2430, 1.442695
        %v2511 = vpow.pop %v2510
        %v2512 = vmul.f32 %v2431, 1.442695
        %v2513 = vpow.pop %v2512
        %v2514 = vmul.f32 %v2432, 1.442695
        %v2515 = vpow.pop %v2514
        %v2516 = vmul.f32 %v2433, 1.442695
        %v2517 = vpow.pop %v2516
        %v2518 = vmul.f32 %v2434, 1.442695
        %v2519 = vpow.pop %v2518
        %v2520 = vmul.f32 %v2435, 1.442695
        %v2521 = vpow.pop %v2520
        %v2522 = vmul.f32 %v2436, 1.442695
        %v2523 = vpow.pop %v2522
        %v2524 = vmul.f32 %v2437, 1.442695
        %v2525 = vpow.pop %v2524
        %v2526 = vmul.f32 %v2438, 1.442695
        %v2527 = vpow.pop %v2526
        %v2528 = vmul.f32 %v2439, 1.442695
        %v2529 = vpow.pop %v2528
        %v2530 = vmul.f32 %v2440, 1.442695
        %v2531 = vpow.pop %v2530
        %v2532 = vmul.f32 %v2441, 1.442695
        %v2533 = vpow.pop %v2532
        %v2534 = vmul.f32 %v2442, 1.442695
        %v2535 = vpow.pop %v2534
        %v2536 = vmul.f32 %v2443, 1.442695
        %v2537 = vpow.pop %v2536
        %v2538 = vmul.f32 %v2444, 1.442695
        %v2539 = vpow.pop %v2538
        %v2540 = vmul.f32 %v2445, 1.442695
        %v2541 = vpow.pop %v2540
        %v2542 = vmul.f32 %v2446, 1.442695
        %v2543 = vpow.pop %v2542
        %v2544 = vmul.f32 %v2447, 1.442695
        %v2545 = vpow.pop %v2544
        %v2546 = vmul.f32 %v2448, 1.442695
        %v2547 = vpow.pop %v2546
        %v2548 = vmul.f32 %v2449, 1.442695
        %v2549 = vpow.pop %v2548
        %v2550 = vmul.f32 %v2450, 1.442695
        %v2551 = vpow.pop %v2550
        %v2552 = vmul.f32 %v2451, 1.442695
        %v2553 = vpow.pop %v2552
        %v2554 = vmul.f32 %v2452, 1.442695
        %v2555 = vpow.pop %v2554
        %v2556 = vmul.f32 %v2453, 1.442695
        %v2557 = vpow.pop %v2556
        %v2558 = vmul.f32 %v2454, 1.442695
        %v2559 = vpow.pop %v2558
        %v2560 = vmul.f32 %v2455, 1.442695
        %v2561 = vpow.pop %v2560
        %v2562 = vmul.f32 %v2456, 1.442695
        %v2563 = vpow.pop %v2562
        %v2564 = vmul.f32 %v2457, 1.442695
        %v2565 = vpow.pop %v2564
        %v2566 = vmul.f32 %v2458, 1.442695
        %v2567 = vpow.pop %v2566
        %v2568 = vmul.f32 %v2459, 1.442695
        %v2569 = vpow.pop %v2568
        %v2570 = vmul.f32 %v2460, 1.442695
        %v2571 = vpow.pop %v2570
        %v2572 = vmul.f32 %v2461, 1.442695
        %v2573 = vpow.pop %v2572
        %v2574 = vmul.f32 %v2462, 1.442695
        %v2575 = vpow.pop %v2574
        %v2576 = vmul.f32 %v2463, 1.442695
        %v2577 = vpow.pop %v2576
        %v2578 = vmul.f32 %v2464, 1.442695
        %v2579 = vpow.pop %v2578
        %v2580 = vmul.f32 %v2465, 1.442695
        %v2581 = vpow.pop %v2580
        %v2582 = vmul.f32 %v2466, 1.442695
        %v2583 = vpow.pop %v2582
        %v2584 = vmul.f32 %v2467, 1.442695
        %v2585 = vpow.pop %v2584
        %v2586 = vmul.f32 %v2468, 1.442695
        %v2587 = vpow.pop %v2586
        %v2588 = vmul.f32 %v2469, 1.442695
        %v2589 = vpow.pop %v2588
        %v2590 = vmul.f32 %v2470, 1.442695
        %v2591 = vpow.pop %v2590
        %v2592 = vmul.f32 %v2471, 1.442695
        %v2593 = vpow.pop %v2592
        %v2594 = vmul.f32 %v2472, 1.442695
        %v2595 = vpow.pop %v2594
        %v2596 = vmul.f32 %v2473, 1.442695
        %v2597 = vpow.pop %v2596
        %v2598 = vmul.f32 %v2474, 1.442695
        %v2599 = vpow.pop %v2598
        %v2600 = vmul.f32 %v2475, 1.442695
        %v2601 = vpow.pop %v2600
        %v2602 = vmul.f32 %v2476, 1.442695
        %v2603 = vpow.pop %v2602
        %v2604 = vmul.f32 %v2477, 1.442695
        %v2605 = vpow.pop %v2604
        %v2606 = vsel %vm2221, %v2479, 0.0
        %2607 = vadd.xlane.f32.xlu0 %v2606
        %v2608 = vpop.xlane.xlu0 %2607
        %v2609 = vsel %vm2221, %v2481, 0.0
        %2610 = vadd.xlane.f32.xlu0 %v2609
        %v2611 = vpop.xlane.xlu0 %2610
        %v2612 = vsel %vm2221, %v2483, 0.0
        %2613 = vadd.xlane.f32.xlu0 %v2612
        %v2614 = vpop.xlane.xlu0 %2613
        %v2615 = vsel %vm2221, %v2485, 0.0
        %2616 = vadd.xlane.f32.xlu0 %v2615
        %v2617 = vpop.xlane.xlu0 %2616
        %v2618 = vsel %vm2221, %v2487, 0.0
        %2619 = vadd.xlane.f32.xlu0 %v2618
        %v2620 = vpop.xlane.xlu0 %2619
        %v2621 = vsel %vm2221, %v2489, 0.0
        %2622 = vadd.xlane.f32.xlu0 %v2621
        %v2623 = vpop.xlane.xlu0 %2622
        %v2624 = vsel %vm2221, %v2491, 0.0
        %2625 = vadd.xlane.f32.xlu0 %v2624
        %v2626 = vpop.xlane.xlu0 %2625
        %v2627 = vsel %vm2221, %v2493, 0.0
        %2628 = vadd.xlane.f32.xlu0 %v2627
        %v2629 = vpop.xlane.xlu0 %2628
        %v2630 = vsel %vm2221, %v2495, 0.0
        %2631 = vadd.xlane.f32.xlu0 %v2630
        %v2632 = vpop.xlane.xlu0 %2631
        %v2633 = vsel %vm2221, %v2497, 0.0
        %2634 = vadd.xlane.f32.xlu0 %v2633
        %v2635 = vpop.xlane.xlu0 %2634
        %v2636 = vsel %vm2221, %v2499, 0.0
        %2637 = vadd.xlane.f32.xlu0 %v2636
        %v2638 = vpop.xlane.xlu0 %2637
        %v2639 = vsel %vm2221, %v2501, 0.0
        %2640 = vadd.xlane.f32.xlu0 %v2639
        %v2641 = vpop.xlane.xlu0 %2640
        %v2642 = vsel %vm2221, %v2503, 0.0
        %2643 = vadd.xlane.f32.xlu0 %v2642
        %v2644 = vpop.xlane.xlu0 %2643
        %v2645 = vsel %vm2221, %v2505, 0.0
        %2646 = vadd.xlane.f32.xlu0 %v2645
        %v2647 = vpop.xlane.xlu0 %2646
        %v2648 = vsel %vm2221, %v2507, 0.0
        %2649 = vadd.xlane.f32.xlu0 %v2648
        %v2650 = vpop.xlane.xlu0 %2649
        %v2651 = vsel %vm2221, %v2509, 0.0
        %2652 = vadd.xlane.f32.xlu0 %v2651
        %v2653 = vpop.xlane.xlu0 %2652
        %v2654 = vsel %vm2221, %v2511, 0.0
        %2655 = vadd.xlane.f32.xlu0 %v2654
        %v2656 = vpop.xlane.xlu0 %2655
        %v2657 = vsel %vm2221, %v2513, 0.0
        %2658 = vadd.xlane.f32.xlu0 %v2657
        %v2659 = vpop.xlane.xlu0 %2658
        %v2660 = vsel %vm2221, %v2515, 0.0
        %2661 = vadd.xlane.f32.xlu0 %v2660
        %v2662 = vpop.xlane.xlu0 %2661
        %v2663 = vsel %vm2221, %v2517, 0.0
        %2664 = vadd.xlane.f32.xlu0 %v2663
        %v2665 = vpop.xlane.xlu0 %2664
        %v2666 = vsel %vm2221, %v2519, 0.0
        %2667 = vadd.xlane.f32.xlu0 %v2666
        %v2668 = vpop.xlane.xlu0 %2667
        %v2669 = vsel %vm2221, %v2521, 0.0
        %2670 = vadd.xlane.f32.xlu0 %v2669
        %v2671 = vpop.xlane.xlu0 %2670
        %v2672 = vsel %vm2221, %v2523, 0.0
        %2673 = vadd.xlane.f32.xlu0 %v2672
        %v2674 = vpop.xlane.xlu0 %2673
        %v2675 = vsel %vm2221, %v2525, 0.0
        %2676 = vadd.xlane.f32.xlu0 %v2675
        %v2677 = vpop.xlane.xlu0 %2676
        %v2678 = vsel %vm2221, %v2527, 0.0
        %2679 = vadd.xlane.f32.xlu0 %v2678
        %v2680 = vpop.xlane.xlu0 %2679
        %v2681 = vsel %vm2221, %v2529, 0.0
        %2682 = vadd.xlane.f32.xlu0 %v2681
        %v2683 = vpop.xlane.xlu0 %2682
        %v2684 = vsel %vm2221, %v2531, 0.0
        %2685 = vadd.xlane.f32.xlu0 %v2684
        %v2686 = vpop.xlane.xlu0 %2685
        %v2687 = vsel %vm2221, %v2533, 0.0
        %2688 = vadd.xlane.f32.xlu0 %v2687
        %v2689 = vpop.xlane.xlu0 %2688
        %v2690 = vsel %vm2221, %v2535, 0.0
        %2691 = vadd.xlane.f32.xlu0 %v2690
        %v2692 = vpop.xlane.xlu0 %2691
        %v2693 = vsel %vm2221, %v2537, 0.0
        %2694 = vadd.xlane.f32.xlu0 %v2693
        %v2695 = vpop.xlane.xlu0 %2694
        %v2696 = vsel %vm2221, %v2539, 0.0
        %2697 = vadd.xlane.f32.xlu0 %v2696
        %v2698 = vpop.xlane.xlu0 %2697
        %v2699 = vsel %vm2221, %v2541, 0.0
        %2700 = vadd.xlane.f32.xlu0 %v2699
        %v2701 = vpop.xlane.xlu0 %2700
        %v2702 = vsel %vm2221, %v2543, 0.0
        %2703 = vadd.xlane.f32.xlu0 %v2702
        %v2704 = vpop.xlane.xlu0 %2703
        %v2705 = vsel %vm2221, %v2545, 0.0
        %2706 = vadd.xlane.f32.xlu0 %v2705
        %v2707 = vpop.xlane.xlu0 %2706
        %v2708 = vsel %vm2221, %v2547, 0.0
        %2709 = vadd.xlane.f32.xlu0 %v2708
        %v2710 = vpop.xlane.xlu0 %2709
        %v2711 = vsel %vm2221, %v2549, 0.0
        %2712 = vadd.xlane.f32.xlu0 %v2711
        %v2713 = vpop.xlane.xlu0 %2712
        %v2714 = vsel %vm2221, %v2551, 0.0
        %2715 = vadd.xlane.f32.xlu0 %v2714
        %v2716 = vpop.xlane.xlu0 %2715
        %v2717 = vsel %vm2221, %v2553, 0.0
        %2718 = vadd.xlane.f32.xlu0 %v2717
        %v2719 = vpop.xlane.xlu0 %2718
        %v2720 = vsel %vm2221, %v2555, 0.0
        %2721 = vadd.xlane.f32.xlu0 %v2720
        %v2722 = vpop.xlane.xlu0 %2721
        %v2723 = vsel %vm2221, %v2557, 0.0
        %2724 = vadd.xlane.f32.xlu0 %v2723
        %v2725 = vpop.xlane.xlu0 %2724
        %v2726 = vsel %vm2221, %v2559, 0.0
        %2727 = vadd.xlane.f32.xlu0 %v2726
        %v2728 = vpop.xlane.xlu0 %2727
        %v2729 = vsel %vm2221, %v2561, 0.0
        %2730 = vadd.xlane.f32.xlu0 %v2729
        %v2731 = vpop.xlane.xlu0 %2730
        %v2732 = vsel %vm2221, %v2563, 0.0
        %2733 = vadd.xlane.f32.xlu0 %v2732
        %v2734 = vpop.xlane.xlu0 %2733
        %v2735 = vsel %vm2221, %v2565, 0.0
        %2736 = vadd.xlane.f32.xlu0 %v2735
        %v2737 = vpop.xlane.xlu0 %2736
        %v2738 = vsel %vm2221, %v2567, 0.0
        %2739 = vadd.xlane.f32.xlu0 %v2738
        %v2740 = vpop.xlane.xlu0 %2739
        %v2741 = vsel %vm2221, %v2569, 0.0
        %2742 = vadd.xlane.f32.xlu0 %v2741
        %v2743 = vpop.xlane.xlu0 %2742
        %v2744 = vsel %vm2221, %v2571, 0.0
        %2745 = vadd.xlane.f32.xlu0 %v2744
        %v2746 = vpop.xlane.xlu0 %2745
        %v2747 = vsel %vm2221, %v2573, 0.0
        %2748 = vadd.xlane.f32.xlu0 %v2747
        %v2749 = vpop.xlane.xlu0 %2748
        %v2750 = vsel %vm2221, %v2575, 0.0
        %2751 = vadd.xlane.f32.xlu0 %v2750
        %v2752 = vpop.xlane.xlu0 %2751
        %v2753 = vsel %vm2221, %v2577, 0.0
        %2754 = vadd.xlane.f32.xlu0 %v2753
        %v2755 = vpop.xlane.xlu0 %2754
        %v2756 = vsel %vm2221, %v2579, 0.0
        %2757 = vadd.xlane.f32.xlu0 %v2756
        %v2758 = vpop.xlane.xlu0 %2757
        %v2759 = vsel %vm2221, %v2581, 0.0
        %2760 = vadd.xlane.f32.xlu0 %v2759
        %v2761 = vpop.xlane.xlu0 %2760
        %v2762 = vsel %vm2221, %v2583, 0.0
        %2763 = vadd.xlane.f32.xlu0 %v2762
        %v2764 = vpop.xlane.xlu0 %2763
        %v2765 = vsel %vm2221, %v2585, 0.0
        %2766 = vadd.xlane.f32.xlu0 %v2765
        %v2767 = vpop.xlane.xlu0 %2766
        %v2768 = vsel %vm2221, %v2587, 0.0
        %2769 = vadd.xlane.f32.xlu0 %v2768
        %v2770 = vpop.xlane.xlu0 %2769
        %v2771 = vsel %vm2221, %v2589, 0.0
        %2772 = vadd.xlane.f32.xlu0 %v2771
        %v2773 = vpop.xlane.xlu0 %2772
        %v2774 = vsel %vm2221, %v2591, 0.0
        %2775 = vadd.xlane.f32.xlu0 %v2774
        %v2776 = vpop.xlane.xlu0 %2775
        %v2777 = vsel %vm2221, %v2593, 0.0
        %2778 = vadd.xlane.f32.xlu0 %v2777
        %v2779 = vpop.xlane.xlu0 %2778
        %v2780 = vsel %vm2221, %v2595, 0.0
        %2781 = vadd.xlane.f32.xlu0 %v2780
        %v2782 = vpop.xlane.xlu0 %2781
        %v2783 = vsel %vm2221, %v2597, 0.0
        %2784 = vadd.xlane.f32.xlu0 %v2783
        %v2785 = vpop.xlane.xlu0 %2784
        %v2786 = vsel %vm2221, %v2599, 0.0
        %2787 = vadd.xlane.f32.xlu0 %v2786
        %v2788 = vpop.xlane.xlu0 %2787
        %v2789 = vsel %vm2221, %v2601, 0.0
        %2790 = vadd.xlane.f32.xlu0 %v2789
        %v2791 = vpop.xlane.xlu0 %2790
        %v2792 = vsel %vm2221, %v2603, 0.0
        %2793 = vadd.xlane.f32.xlu0 %v2792
        %v2794 = vpop.xlane.xlu0 %2793
        %v2795 = vsel %vm2221, %v2605, 0.0
        %2796 = vadd.xlane.f32.xlu0 %v2795
        %v2797 = vpop.xlane.xlu0 %2796
        %v2798 = vrcp.pop %v2608
        %v2799 = vrcp.pop %v2611
        %v2800 = vrcp.pop %v2614
        %v2801 = vrcp.pop %v2617
        %v2802 = vrcp.pop %v2620
        %v2803 = vrcp.pop %v2623
        %v2804 = vrcp.pop %v2626
        %v2805 = vrcp.pop %v2629
        %v2806 = vrcp.pop %v2632
        %v2807 = vrcp.pop %v2635
        %v2808 = vrcp.pop %v2638
        %v2809 = vrcp.pop %v2641
        %v2810 = vrcp.pop %v2644
        %v2811 = vrcp.pop %v2647
        %v2812 = vrcp.pop %v2650
        %v2813 = vrcp.pop %v2653
        %v2814 = vrcp.pop %v2656
        %v2815 = vrcp.pop %v2659
        %v2816 = vrcp.pop %v2662
        %v2817 = vrcp.pop %v2665
        %v2818 = vrcp.pop %v2668
        %v2819 = vrcp.pop %v2671
        %v2820 = vrcp.pop %v2674
        %v2821 = vrcp.pop %v2677
        %v2822 = vrcp.pop %v2680
        %v2823 = vrcp.pop %v2683
        %v2824 = vrcp.pop %v2686
        %v2825 = vrcp.pop %v2689
        %v2826 = vrcp.pop %v2692
        %v2827 = vrcp.pop %v2695
        %v2828 = vrcp.pop %v2698
        %v2829 = vrcp.pop %v2701
        %v2830 = vrcp.pop %v2704
        %v2831 = vrcp.pop %v2707
        %v2832 = vrcp.pop %v2710
        %v2833 = vrcp.pop %v2713
        %v2834 = vrcp.pop %v2716
        %v2835 = vrcp.pop %v2719
        %v2836 = vrcp.pop %v2722
        %v2837 = vrcp.pop %v2725
        %v2838 = vrcp.pop %v2728
        %v2839 = vrcp.pop %v2731
        %v2840 = vrcp.pop %v2734
        %v2841 = vrcp.pop %v2737
        %v2842 = vrcp.pop %v2740
        %v2843 = vrcp.pop %v2743
        %v2844 = vrcp.pop %v2746
        %v2845 = vrcp.pop %v2749
        %v2846 = vrcp.pop %v2752
        %v2847 = vrcp.pop %v2755
        %v2848 = vrcp.pop %v2758
        %v2849 = vrcp.pop %v2761
        %v2850 = vrcp.pop %v2764
        %v2851 = vrcp.pop %v2767
        %v2852 = vrcp.pop %v2770
        %v2853 = vrcp.pop %v2773
        %v2854 = vrcp.pop %v2776
        %v2855 = vrcp.pop %v2779
        %v2856 = vrcp.pop %v2782
        %v2857 = vrcp.pop %v2785
        %v2858 = vrcp.pop %v2788
        %v2859 = vrcp.pop %v2791
        %v2860 = vrcp.pop %v2794
        %v2861 = vrcp.pop %v2797
        %v2862 = vmul.f32 %v2479, %v2798
        %v2863 = vmul.f32 %v2481, %v2799
        %v2864 = vmul.f32 %v2483, %v2800
        %v2865 = vmul.f32 %v2485, %v2801
        %v2866 = vmul.f32 %v2487, %v2802
        %v2867 = vmul.f32 %v2489, %v2803
        %v2868 = vmul.f32 %v2491, %v2804
        %v2869 = vmul.f32 %v2493, %v2805
        %v2870 = vmul.f32 %v2495, %v2806
        %v2871 = vmul.f32 %v2497, %v2807
        %v2872 = vmul.f32 %v2499, %v2808
        %v2873 = vmul.f32 %v2501, %v2809
        %v2874 = vmul.f32 %v2503, %v2810
        %v2875 = vmul.f32 %v2505, %v2811
        %v2876 = vmul.f32 %v2507, %v2812
        %v2877 = vmul.f32 %v2509, %v2813
        %v2878 = vmul.f32 %v2511, %v2814
        %v2879 = vmul.f32 %v2513, %v2815
        %v2880 = vmul.f32 %v2515, %v2816
        %v2881 = vmul.f32 %v2517, %v2817
        %v2882 = vmul.f32 %v2519, %v2818
        %v2883 = vmul.f32 %v2521, %v2819
        %v2884 = vmul.f32 %v2523, %v2820
        %v2885 = vmul.f32 %v2525, %v2821
        %v2886 = vmul.f32 %v2527, %v2822
        %v2887 = vmul.f32 %v2529, %v2823
        %v2888 = vmul.f32 %v2531, %v2824
        %v2889 = vmul.f32 %v2533, %v2825
        %v2890 = vmul.f32 %v2535, %v2826
        %v2891 = vmul.f32 %v2537, %v2827
        %v2892 = vmul.f32 %v2539, %v2828
        %v2893 = vmul.f32 %v2541, %v2829
        %v2894 = vmul.f32 %v2543, %v2830
        %v2895 = vmul.f32 %v2545, %v2831
        %v2896 = vmul.f32 %v2547, %v2832
        %v2897 = vmul.f32 %v2549, %v2833
        %v2898 = vmul.f32 %v2551, %v2834
        %v2899 = vmul.f32 %v2553, %v2835
        %v2900 = vmul.f32 %v2555, %v2836
        %v2901 = vmul.f32 %v2557, %v2837
        %v2902 = vmul.f32 %v2559, %v2838
        %v2903 = vmul.f32 %v2561, %v2839
        %v2904 = vmul.f32 %v2563, %v2840
        %v2905 = vmul.f32 %v2565, %v2841
        %v2906 = vmul.f32 %v2567, %v2842
        %v2907 = vmul.f32 %v2569, %v2843
        %v2908 = vmul.f32 %v2571, %v2844
        %v2909 = vmul.f32 %v2573, %v2845
        %v2910 = vmul.f32 %v2575, %v2846
        %v2911 = vmul.f32 %v2577, %v2847
        %v2912 = vmul.f32 %v2579, %v2848
        %v2913 = vmul.f32 %v2581, %v2849
        %v2914 = vmul.f32 %v2583, %v2850
        %v2915 = vmul.f32 %v2585, %v2851
        %v2916 = vmul.f32 %v2587, %v2852
        %v2917 = vmul.f32 %v2589, %v2853
        %v2918 = vmul.f32 %v2591, %v2854
        %v2919 = vmul.f32 %v2593, %v2855
        %v2920 = vmul.f32 %v2595, %v2856
        %v2921 = vmul.f32 %v2597, %v2857
        %v2922 = vmul.f32 %v2599, %v2858
        %v2923 = vmul.f32 %v2601, %v2859
        %v2924 = vmul.f32 %v2603, %v2860
        %v2925 = vmul.f32 %v2605, %v2861
        %v2926 = vpack.c.bf16 %v2862, %v2862
        %v2927 = vpack.c.bf16 %v2863, %v2863
        %v2928 = vpack.c.bf16 %v2864, %v2864
        %v2929 = vpack.c.bf16 %v2865, %v2865
        %v2930 = vpack.c.bf16 %v2866, %v2866
        %v2931 = vpack.c.bf16 %v2867, %v2867
        %v2932 = vpack.c.bf16 %v2868, %v2868
        %v2933 = vpack.c.bf16 %v2869, %v2869
        %v2934 = vpack.c.bf16 %v2870, %v2870
        %v2935 = vpack.c.bf16 %v2871, %v2871
        %v2936 = vpack.c.bf16 %v2872, %v2872
        %v2937 = vpack.c.bf16 %v2873, %v2873
        %v2938 = vpack.c.bf16 %v2874, %v2874
        %v2939 = vpack.c.bf16 %v2875, %v2875
        %v2940 = vpack.c.bf16 %v2876, %v2876
        %v2941 = vpack.c.bf16 %v2877, %v2877
        %v2942 = vpack.c.bf16 %v2878, %v2878
        %v2943 = vpack.c.bf16 %v2879, %v2879
        %v2944 = vpack.c.bf16 %v2880, %v2880
        %v2945 = vpack.c.bf16 %v2881, %v2881
        %v2946 = vpack.c.bf16 %v2882, %v2882
        %v2947 = vpack.c.bf16 %v2883, %v2883
        %v2948 = vpack.c.bf16 %v2884, %v2884
        %v2949 = vpack.c.bf16 %v2885, %v2885
        %v2950 = vpack.c.bf16 %v2886, %v2886
        %v2951 = vpack.c.bf16 %v2887, %v2887
        %v2952 = vpack.c.bf16 %v2888, %v2888
        %v2953 = vpack.c.bf16 %v2889, %v2889
        %v2954 = vpack.c.bf16 %v2890, %v2890
        %v2955 = vpack.c.bf16 %v2891, %v2891
        %v2956 = vpack.c.bf16 %v2892, %v2892
        %v2957 = vpack.c.bf16 %v2893, %v2893
        %v2958 = vpack.c.bf16 %v2894, %v2894
        %v2959 = vpack.c.bf16 %v2895, %v2895
        %v2960 = vpack.c.bf16 %v2896, %v2896
        %v2961 = vpack.c.bf16 %v2897, %v2897
        %v2962 = vpack.c.bf16 %v2898, %v2898
        %v2963 = vpack.c.bf16 %v2899, %v2899
        %v2964 = vpack.c.bf16 %v2900, %v2900
        %v2965 = vpack.c.bf16 %v2901, %v2901
        %v2966 = vpack.c.bf16 %v2902, %v2902
        %v2967 = vpack.c.bf16 %v2903, %v2903
        %v2968 = vpack.c.bf16 %v2904, %v2904
        %v2969 = vpack.c.bf16 %v2905, %v2905
        %v2970 = vpack.c.bf16 %v2906, %v2906
        %v2971 = vpack.c.bf16 %v2907, %v2907
        %v2972 = vpack.c.bf16 %v2908, %v2908
        %v2973 = vpack.c.bf16 %v2909, %v2909
        %v2974 = vpack.c.bf16 %v2910, %v2910
        %v2975 = vpack.c.bf16 %v2911, %v2911
        %v2976 = vpack.c.bf16 %v2912, %v2912
        %v2977 = vpack.c.bf16 %v2913, %v2913
        %v2978 = vpack.c.bf16 %v2914, %v2914
        %v2979 = vpack.c.bf16 %v2915, %v2915
        %v2980 = vpack.c.bf16 %v2916, %v2916
        %v2981 = vpack.c.bf16 %v2917, %v2917
        %v2982 = vpack.c.bf16 %v2918, %v2918
        %v2983 = vpack.c.bf16 %v2919, %v2919
        %v2984 = vpack.c.bf16 %v2920, %v2920
        %v2985 = vpack.c.bf16 %v2921, %v2921
        %v2986 = vpack.c.bf16 %v2922, %v2922
        %v2987 = vpack.c.bf16 %v2923, %v2923
        %v2988 = vpack.c.bf16 %v2924, %v2924
        %v2989 = vpack.c.bf16 %v2925, %v2925
        %v2992 = vunpack.c.l.b16 %v2926
        %v2993 = vunpack.c.l.b16 %v2927
        %v2994 = vpack.c.b16 %v2993, %v2992
        %v2997 = vunpack.c.l.b16 %v1197
        %v2998 = vunpack.c.l.b16 %v1198
        %v2999 = vpack.c.b16 %v2998, %v2997
        %v3002 = vsel %vm2221, %v2994, 0
        %3004 = vmatpush.bf16.msra.mxu0 0
        %3005 = vmatpush.bf16.msra.mxu0 0
        %3006 = vmatpush.bf16.msra.mxu0 0
        %3007 = vmatpush.bf16.msra.mxu0 0
        %3008 = vmatpush.bf16.msra.mxu0 0
        %3009 = vmatpush.bf16.msra.mxu0 0
        %3010 = vmatpush.bf16.msra.mxu0 0
        %3011 = vmatpush.bf16.msra.mxu0 %v2999
        %3012 = vmatmul.bf16.gmra.mxu0 %v3002
        %v3013 = vpop.f32.mrf.mxu0
        %v3014 = vadd.f32 0.0, %v3013
        %v3015 = vpop.f32.mrf.mxu0
        %v3016 = vadd.f32 0.0, %v3015
        %3017 = vdwg.mxu0
        %v3020 = vunpack.c.l.b16 %v2928
        %v3021 = vunpack.c.l.b16 %v2929
        %v3022 = vpack.c.b16 %v3021, %v3020
        %v3025 = vunpack.c.l.b16 %v1199
        %v3026 = vunpack.c.l.b16 %v1200
        %v3027 = vpack.c.b16 %v3026, %v3025
        %v3030 = vsel %vm2221, %v3022, 0
        %3032 = vmatpush.bf16.msra.mxu0 0
        %3033 = vmatpush.bf16.msra.mxu0 0
        %3034 = vmatpush.bf16.msra.mxu0 0
        %3035 = vmatpush.bf16.msra.mxu0 0
        %3036 = vmatpush.bf16.msra.mxu0 0
        %3037 = vmatpush.bf16.msra.mxu0 0
        %3038 = vmatpush.bf16.msra.mxu0 0
        %3039 = vmatpush.bf16.msra.mxu0 %v3027
        %3040 = vmatmul.bf16.gmra.mxu0 %v3030
        %v3041 = vpop.f32.mrf.mxu0
        %v3042 = vadd.f32 0.0, %v3041
        %v3043 = vpop.f32.mrf.mxu0
        %v3044 = vadd.f32 0.0, %v3043
        %3045 = vdwg.mxu0
        %v3048 = vunpack.c.l.b16 %v2930
        %v3049 = vunpack.c.l.b16 %v2931
        %v3050 = vpack.c.b16 %v3049, %v3048
        %v3053 = vunpack.c.l.b16 %v1201
        %v3054 = vunpack.c.l.b16 %v1202
        %v3055 = vpack.c.b16 %v3054, %v3053
        %v3058 = vsel %vm2221, %v3050, 0
        %3060 = vmatpush.bf16.msra.mxu0 0
        %3061 = vmatpush.bf16.msra.mxu0 0
        %3062 = vmatpush.bf16.msra.mxu0 0
        %3063 = vmatpush.bf16.msra.mxu0 0
        %3064 = vmatpush.bf16.msra.mxu0 0
        %3065 = vmatpush.bf16.msra.mxu0 0
        %3066 = vmatpush.bf16.msra.mxu0 0
        %3067 = vmatpush.bf16.msra.mxu0 %v3055
        %3068 = vmatmul.bf16.gmra.mxu0 %v3058
        %v3069 = vpop.f32.mrf.mxu0
        %v3070 = vadd.f32 0.0, %v3069
        %v3071 = vpop.f32.mrf.mxu0
        %v3072 = vadd.f32 0.0, %v3071
        %3073 = vdwg.mxu0
        %v3076 = vunpack.c.l.b16 %v2932
        %v3077 = vunpack.c.l.b16 %v2933
        %v3078 = vpack.c.b16 %v3077, %v3076
        %v3081 = vunpack.c.l.b16 %v1203
        %v3082 = vunpack.c.l.b16 %v1204
        %v3083 = vpack.c.b16 %v3082, %v3081
        %v3086 = vsel %vm2221, %v3078, 0
        %3088 = vmatpush.bf16.msra.mxu0 0
        %3089 = vmatpush.bf16.msra.mxu0 0
        %3090 = vmatpush.bf16.msra.mxu0 0
        %3091 = vmatpush.bf16.msra.mxu0 0
        %3092 = vmatpush.bf16.msra.mxu0 0
        %3093 = vmatpush.bf16.msra.mxu0 0
        %3094 = vmatpush.bf16.msra.mxu0 0
        %3095 = vmatpush.bf16.msra.mxu0 %v3083
        %3096 = vmatmul.bf16.gmra.mxu0 %v3086
        %v3097 = vpop.f32.mrf.mxu0
        %v3098 = vadd.f32 0.0, %v3097
        %v3099 = vpop.f32.mrf.mxu0
        %v3100 = vadd.f32 0.0, %v3099
        %3101 = vdwg.mxu0
        %v3104 = vunpack.c.l.b16 %v2934
        %v3105 = vunpack.c.l.b16 %v2935
        %v3106 = vpack.c.b16 %v3105, %v3104
        %v3109 = vunpack.c.l.b16 %v1205
        %v3110 = vunpack.c.l.b16 %v1206
        %v3111 = vpack.c.b16 %v3110, %v3109
        %v3114 = vsel %vm2221, %v3106, 0
        %3116 = vmatpush.bf16.msra.mxu0 0
        %3117 = vmatpush.bf16.msra.mxu0 0
        %3118 = vmatpush.bf16.msra.mxu0 0
        %3119 = vmatpush.bf16.msra.mxu0 0
        %3120 = vmatpush.bf16.msra.mxu0 0
        %3121 = vmatpush.bf16.msra.mxu0 0
        %3122 = vmatpush.bf16.msra.mxu0 0
        %3123 = vmatpush.bf16.msra.mxu0 %v3111
        %3124 = vmatmul.bf16.gmra.mxu0 %v3114
        %v3125 = vpop.f32.mrf.mxu0
        %v3126 = vadd.f32 0.0, %v3125
        %v3127 = vpop.f32.mrf.mxu0
        %v3128 = vadd.f32 0.0, %v3127
        %3129 = vdwg.mxu0
        %v3132 = vunpack.c.l.b16 %v2936
        %v3133 = vunpack.c.l.b16 %v2937
        %v3134 = vpack.c.b16 %v3133, %v3132
        %v3137 = vunpack.c.l.b16 %v1207
        %v3138 = vunpack.c.l.b16 %v1208
        %v3139 = vpack.c.b16 %v3138, %v3137
        %v3142 = vsel %vm2221, %v3134, 0
        %3144 = vmatpush.bf16.msra.mxu0 0
        %3145 = vmatpush.bf16.msra.mxu0 0
        %3146 = vmatpush.bf16.msra.mxu0 0
        %3147 = vmatpush.bf16.msra.mxu0 0
        %3148 = vmatpush.bf16.msra.mxu0 0
        %3149 = vmatpush.bf16.msra.mxu0 0
        %3150 = vmatpush.bf16.msra.mxu0 0
        %3151 = vmatpush.bf16.msra.mxu0 %v3139
        %3152 = vmatmul.bf16.gmra.mxu0 %v3142
        %v3153 = vpop.f32.mrf.mxu0
        %v3154 = vadd.f32 0.0, %v3153
        %v3155 = vpop.f32.mrf.mxu0
        %v3156 = vadd.f32 0.0, %v3155
        %3157 = vdwg.mxu0
        %v3160 = vunpack.c.l.b16 %v2938
        %v3161 = vunpack.c.l.b16 %v2939
        %v3162 = vpack.c.b16 %v3161, %v3160
        %v3165 = vunpack.c.l.b16 %v1209
        %v3166 = vunpack.c.l.b16 %v1210
        %v3167 = vpack.c.b16 %v3166, %v3165
        %v3170 = vsel %vm2221, %v3162, 0
        %3172 = vmatpush.bf16.msra.mxu0 0
        %3173 = vmatpush.bf16.msra.mxu0 0
        %3174 = vmatpush.bf16.msra.mxu0 0
        %3175 = vmatpush.bf16.msra.mxu0 0
        %3176 = vmatpush.bf16.msra.mxu0 0
        %3177 = vmatpush.bf16.msra.mxu0 0
        %3178 = vmatpush.bf16.msra.mxu0 0
        %3179 = vmatpush.bf16.msra.mxu0 %v3167
        %3180 = vmatmul.bf16.gmra.mxu0 %v3170
        %v3181 = vpop.f32.mrf.mxu0
        %v3182 = vadd.f32 0.0, %v3181
        %v3183 = vpop.f32.mrf.mxu0
        %v3184 = vadd.f32 0.0, %v3183
        %3185 = vdwg.mxu0
        %v3188 = vunpack.c.l.b16 %v2940
        %v3189 = vunpack.c.l.b16 %v2941
        %v3190 = vpack.c.b16 %v3189, %v3188
        %v3193 = vunpack.c.l.b16 %v1211
        %v3194 = vunpack.c.l.b16 %v1212
        %v3195 = vpack.c.b16 %v3194, %v3193
        %v3198 = vsel %vm2221, %v3190, 0
        %3200 = vmatpush.bf16.msra.mxu0 0
        %3201 = vmatpush.bf16.msra.mxu0 0
        %3202 = vmatpush.bf16.msra.mxu0 0
        %3203 = vmatpush.bf16.msra.mxu0 0
        %3204 = vmatpush.bf16.msra.mxu0 0
        %3205 = vmatpush.bf16.msra.mxu0 0
        %3206 = vmatpush.bf16.msra.mxu0 0
        %3207 = vmatpush.bf16.msra.mxu0 %v3195
        %3208 = vmatmul.bf16.gmra.mxu0 %v3198
        %v3209 = vpop.f32.mrf.mxu0
        %v3210 = vadd.f32 0.0, %v3209
        %v3211 = vpop.f32.mrf.mxu0
        %v3212 = vadd.f32 0.0, %v3211
        %3213 = vdwg.mxu0
        %v3216 = vunpack.c.l.b16 %v2942
        %v3217 = vunpack.c.l.b16 %v2943
        %v3218 = vpack.c.b16 %v3217, %v3216
        %v3221 = vunpack.c.l.b16 %v1213
        %v3222 = vunpack.c.l.b16 %v1214
        %v3223 = vpack.c.b16 %v3222, %v3221
        %v3226 = vsel %vm2221, %v3218, 0
        %3228 = vmatpush.bf16.msra.mxu0 0
        %3229 = vmatpush.bf16.msra.mxu0 0
        %3230 = vmatpush.bf16.msra.mxu0 0
        %3231 = vmatpush.bf16.msra.mxu0 0
        %3232 = vmatpush.bf16.msra.mxu0 0
        %3233 = vmatpush.bf16.msra.mxu0 0
        %3234 = vmatpush.bf16.msra.mxu0 0
        %3235 = vmatpush.bf16.msra.mxu0 %v3223
        %3236 = vmatmul.bf16.gmra.mxu0 %v3226
        %v3237 = vpop.f32.mrf.mxu0
        %v3238 = vadd.f32 0.0, %v3237
        %v3239 = vpop.f32.mrf.mxu0
        %v3240 = vadd.f32 0.0, %v3239
        %3241 = vdwg.mxu0
        %v3244 = vunpack.c.l.b16 %v2944
        %v3245 = vunpack.c.l.b16 %v2945
        %v3246 = vpack.c.b16 %v3245, %v3244
        %v3249 = vunpack.c.l.b16 %v1215
        %v3250 = vunpack.c.l.b16 %v1216
        %v3251 = vpack.c.b16 %v3250, %v3249
        %v3254 = vsel %vm2221, %v3246, 0
        %3256 = vmatpush.bf16.msra.mxu0 0
        %3257 = vmatpush.bf16.msra.mxu0 0
        %3258 = vmatpush.bf16.msra.mxu0 0
        %3259 = vmatpush.bf16.msra.mxu0 0
        %3260 = vmatpush.bf16.msra.mxu0 0
        %3261 = vmatpush.bf16.msra.mxu0 0
        %3262 = vmatpush.bf16.msra.mxu0 0
        %3263 = vmatpush.bf16.msra.mxu0 %v3251
        %3264 = vmatmul.bf16.gmra.mxu0 %v3254
        %v3265 = vpop.f32.mrf.mxu0
        %v3266 = vadd.f32 0.0, %v3265
        %v3267 = vpop.f32.mrf.mxu0
        %v3268 = vadd.f32 0.0, %v3267
        %3269 = vdwg.mxu0
        %v3272 = vunpack.c.l.b16 %v2946
        %v3273 = vunpack.c.l.b16 %v2947
        %v3274 = vpack.c.b16 %v3273, %v3272
        %v3277 = vunpack.c.l.b16 %v1217
        %v3278 = vunpack.c.l.b16 %v1218
        %v3279 = vpack.c.b16 %v3278, %v3277
        %v3282 = vsel %vm2221, %v3274, 0
        %3284 = vmatpush.bf16.msra.mxu0 0
        %3285 = vmatpush.bf16.msra.mxu0 0
        %3286 = vmatpush.bf16.msra.mxu0 0
        %3287 = vmatpush.bf16.msra.mxu0 0
        %3288 = vmatpush.bf16.msra.mxu0 0
        %3289 = vmatpush.bf16.msra.mxu0 0
        %3290 = vmatpush.bf16.msra.mxu0 0
        %3291 = vmatpush.bf16.msra.mxu0 %v3279
        %3292 = vmatmul.bf16.gmra.mxu0 %v3282
        %v3293 = vpop.f32.mrf.mxu0
        %v3294 = vadd.f32 0.0, %v3293
        %v3295 = vpop.f32.mrf.mxu0
        %v3296 = vadd.f32 0.0, %v3295
        %3297 = vdwg.mxu0
        %v3300 = vunpack.c.l.b16 %v2948
        %v3301 = vunpack.c.l.b16 %v2949
        %v3302 = vpack.c.b16 %v3301, %v3300
        %v3305 = vunpack.c.l.b16 %v1219
        %v3306 = vunpack.c.l.b16 %v1220
        %v3307 = vpack.c.b16 %v3306, %v3305
        %v3310 = vsel %vm2221, %v3302, 0
        %3312 = vmatpush.bf16.msra.mxu0 0
        %3313 = vmatpush.bf16.msra.mxu0 0
        %3314 = vmatpush.bf16.msra.mxu0 0
        %3315 = vmatpush.bf16.msra.mxu0 0
        %3316 = vmatpush.bf16.msra.mxu0 0
        %3317 = vmatpush.bf16.msra.mxu0 0
        %3318 = vmatpush.bf16.msra.mxu0 0
        %3319 = vmatpush.bf16.msra.mxu0 %v3307
        %3320 = vmatmul.bf16.gmra.mxu0 %v3310
        %v3321 = vpop.f32.mrf.mxu0
        %v3322 = vadd.f32 0.0, %v3321
        %v3323 = vpop.f32.mrf.mxu0
        %v3324 = vadd.f32 0.0, %v3323
        %3325 = vdwg.mxu0
        %v3328 = vunpack.c.l.b16 %v2950
        %v3329 = vunpack.c.l.b16 %v2951
        %v3330 = vpack.c.b16 %v3329, %v3328
        %v3333 = vunpack.c.l.b16 %v1221
        %v3334 = vunpack.c.l.b16 %v1222
        %v3335 = vpack.c.b16 %v3334, %v3333
        %v3338 = vsel %vm2221, %v3330, 0
        %3340 = vmatpush.bf16.msra.mxu0 0
        %3341 = vmatpush.bf16.msra.mxu0 0
        %3342 = vmatpush.bf16.msra.mxu0 0
        %3343 = vmatpush.bf16.msra.mxu0 0
        %3344 = vmatpush.bf16.msra.mxu0 0
        %3345 = vmatpush.bf16.msra.mxu0 0
        %3346 = vmatpush.bf16.msra.mxu0 0
        %3347 = vmatpush.bf16.msra.mxu0 %v3335
        %3348 = vmatmul.bf16.gmra.mxu0 %v3338
        %v3349 = vpop.f32.mrf.mxu0
        %v3350 = vadd.f32 0.0, %v3349
        %v3351 = vpop.f32.mrf.mxu0
        %v3352 = vadd.f32 0.0, %v3351
        %3353 = vdwg.mxu0
        %v3356 = vunpack.c.l.b16 %v2952
        %v3357 = vunpack.c.l.b16 %v2953
        %v3358 = vpack.c.b16 %v3357, %v3356
        %v3361 = vunpack.c.l.b16 %v1223
        %v3362 = vunpack.c.l.b16 %v1224
        %v3363 = vpack.c.b16 %v3362, %v3361
        %v3366 = vsel %vm2221, %v3358, 0
        %3368 = vmatpush.bf16.msra.mxu0 0
        %3369 = vmatpush.bf16.msra.mxu0 0
        %3370 = vmatpush.bf16.msra.mxu0 0
        %3371 = vmatpush.bf16.msra.mxu0 0
        %3372 = vmatpush.bf16.msra.mxu0 0
        %3373 = vmatpush.bf16.msra.mxu0 0
        %3374 = vmatpush.bf16.msra.mxu0 0
        %3375 = vmatpush.bf16.msra.mxu0 %v3363
        %3376 = vmatmul.bf16.gmra.mxu0 %v3366
        %v3377 = vpop.f32.mrf.mxu0
        %v3378 = vadd.f32 0.0, %v3377
        %v3379 = vpop.f32.mrf.mxu0
        %v3380 = vadd.f32 0.0, %v3379
        %3381 = vdwg.mxu0
        %v3384 = vunpack.c.l.b16 %v2954
        %v3385 = vunpack.c.l.b16 %v2955
        %v3386 = vpack.c.b16 %v3385, %v3384
        %v3389 = vunpack.c.l.b16 %v1225
        %v3390 = vunpack.c.l.b16 %v1226
        %v3391 = vpack.c.b16 %v3390, %v3389
        %v3394 = vsel %vm2221, %v3386, 0
        %3396 = vmatpush.bf16.msra.mxu0 0
        %3397 = vmatpush.bf16.msra.mxu0 0
        %3398 = vmatpush.bf16.msra.mxu0 0
        %3399 = vmatpush.bf16.msra.mxu0 0
        %3400 = vmatpush.bf16.msra.mxu0 0
        %3401 = vmatpush.bf16.msra.mxu0 0
        %3402 = vmatpush.bf16.msra.mxu0 0
        %3403 = vmatpush.bf16.msra.mxu0 %v3391
        %3404 = vmatmul.bf16.gmra.mxu0 %v3394
        %v3405 = vpop.f32.mrf.mxu0
        %v3406 = vadd.f32 0.0, %v3405
        %v3407 = vpop.f32.mrf.mxu0
        %v3408 = vadd.f32 0.0, %v3407
        %3409 = vdwg.mxu0
        %v3412 = vunpack.c.l.b16 %v2956
        %v3413 = vunpack.c.l.b16 %v2957
        %v3414 = vpack.c.b16 %v3413, %v3412
        %v3417 = vunpack.c.l.b16 %v1227
        %v3418 = vunpack.c.l.b16 %v1228
        %v3419 = vpack.c.b16 %v3418, %v3417
        %v3422 = vsel %vm2221, %v3414, 0
        %3424 = vmatpush.bf16.msra.mxu0 0
        %3425 = vmatpush.bf16.msra.mxu0 0
        %3426 = vmatpush.bf16.msra.mxu0 0
        %3427 = vmatpush.bf16.msra.mxu0 0
        %3428 = vmatpush.bf16.msra.mxu0 0
        %3429 = vmatpush.bf16.msra.mxu0 0
        %3430 = vmatpush.bf16.msra.mxu0 0
        %3431 = vmatpush.bf16.msra.mxu0 %v3419
        %3432 = vmatmul.bf16.gmra.mxu0 %v3422
        %v3433 = vpop.f32.mrf.mxu0
        %v3434 = vadd.f32 0.0, %v3433
        %v3435 = vpop.f32.mrf.mxu0
        %v3436 = vadd.f32 0.0, %v3435
        %3437 = vdwg.mxu0
        %v3440 = vunpack.c.l.b16 %v2958
        %v3441 = vunpack.c.l.b16 %v2959
        %v3442 = vpack.c.b16 %v3441, %v3440
        %v3445 = vunpack.c.l.b16 %v1229
        %v3446 = vunpack.c.l.b16 %v1230
        %v3447 = vpack.c.b16 %v3446, %v3445
        %v3450 = vsel %vm2221, %v3442, 0
        %3452 = vmatpush.bf16.msra.mxu0 0
        %3453 = vmatpush.bf16.msra.mxu0 0
        %3454 = vmatpush.bf16.msra.mxu0 0
        %3455 = vmatpush.bf16.msra.mxu0 0
        %3456 = vmatpush.bf16.msra.mxu0 0
        %3457 = vmatpush.bf16.msra.mxu0 0
        %3458 = vmatpush.bf16.msra.mxu0 0
        %3459 = vmatpush.bf16.msra.mxu0 %v3447
        %3460 = vmatmul.bf16.gmra.mxu0 %v3450
        %v3461 = vpop.f32.mrf.mxu0
        %v3462 = vadd.f32 0.0, %v3461
        %v3463 = vpop.f32.mrf.mxu0
        %v3464 = vadd.f32 0.0, %v3463
        %3465 = vdwg.mxu0
        %v3468 = vunpack.c.l.b16 %v2960
        %v3469 = vunpack.c.l.b16 %v2961
        %v3470 = vpack.c.b16 %v3469, %v3468
        %v3473 = vunpack.c.l.b16 %v1231
        %v3474 = vunpack.c.l.b16 %v1232
        %v3475 = vpack.c.b16 %v3474, %v3473
        %v3478 = vsel %vm2221, %v3470, 0
        %3480 = vmatpush.bf16.msra.mxu0 0
        %3481 = vmatpush.bf16.msra.mxu0 0
        %3482 = vmatpush.bf16.msra.mxu0 0
        %3483 = vmatpush.bf16.msra.mxu0 0
        %3484 = vmatpush.bf16.msra.mxu0 0
        %3485 = vmatpush.bf16.msra.mxu0 0
        %3486 = vmatpush.bf16.msra.mxu0 0
        %3487 = vmatpush.bf16.msra.mxu0 %v3475
        %3488 = vmatmul.bf16.gmra.mxu0 %v3478
        %v3489 = vpop.f32.mrf.mxu0
        %v3490 = vadd.f32 0.0, %v3489
        %v3491 = vpop.f32.mrf.mxu0
        %v3492 = vadd.f32 0.0, %v3491
        %3493 = vdwg.mxu0
        %v3496 = vunpack.c.l.b16 %v2962
        %v3497 = vunpack.c.l.b16 %v2963
        %v3498 = vpack.c.b16 %v3497, %v3496
        %v3501 = vunpack.c.l.b16 %v1233
        %v3502 = vunpack.c.l.b16 %v1234
        %v3503 = vpack.c.b16 %v3502, %v3501
        %v3506 = vsel %vm2221, %v3498, 0
        %3508 = vmatpush.bf16.msra.mxu0 0
        %3509 = vmatpush.bf16.msra.mxu0 0
        %3510 = vmatpush.bf16.msra.mxu0 0
        %3511 = vmatpush.bf16.msra.mxu0 0
        %3512 = vmatpush.bf16.msra.mxu0 0
        %3513 = vmatpush.bf16.msra.mxu0 0
        %3514 = vmatpush.bf16.msra.mxu0 0
        %3515 = vmatpush.bf16.msra.mxu0 %v3503
        %3516 = vmatmul.bf16.gmra.mxu0 %v3506
        %v3517 = vpop.f32.mrf.mxu0
        %v3518 = vadd.f32 0.0, %v3517
        %v3519 = vpop.f32.mrf.mxu0
        %v3520 = vadd.f32 0.0, %v3519
        %3521 = vdwg.mxu0
        %v3524 = vunpack.c.l.b16 %v2964
        %v3525 = vunpack.c.l.b16 %v2965
        %v3526 = vpack.c.b16 %v3525, %v3524
        %v3529 = vunpack.c.l.b16 %v1235
        %v3530 = vunpack.c.l.b16 %v1236
        %v3531 = vpack.c.b16 %v3530, %v3529
        %v3534 = vsel %vm2221, %v3526, 0
        %3536 = vmatpush.bf16.msra.mxu0 0
        %3537 = vmatpush.bf16.msra.mxu0 0
        %3538 = vmatpush.bf16.msra.mxu0 0
        %3539 = vmatpush.bf16.msra.mxu0 0
        %3540 = vmatpush.bf16.msra.mxu0 0
        %3541 = vmatpush.bf16.msra.mxu0 0
        %3542 = vmatpush.bf16.msra.mxu0 0
        %3543 = vmatpush.bf16.msra.mxu0 %v3531
        %3544 = vmatmul.bf16.gmra.mxu0 %v3534
        %v3545 = vpop.f32.mrf.mxu0
        %v3546 = vadd.f32 0.0, %v3545
        %v3547 = vpop.f32.mrf.mxu0
        %v3548 = vadd.f32 0.0, %v3547
        %3549 = vdwg.mxu0
        %v3552 = vunpack.c.l.b16 %v2966
        %v3553 = vunpack.c.l.b16 %v2967
        %v3554 = vpack.c.b16 %v3553, %v3552
        %v3557 = vunpack.c.l.b16 %v1237
        %v3558 = vunpack.c.l.b16 %v1238
        %v3559 = vpack.c.b16 %v3558, %v3557
        %v3562 = vsel %vm2221, %v3554, 0
        %3564 = vmatpush.bf16.msra.mxu0 0
        %3565 = vmatpush.bf16.msra.mxu0 0
        %3566 = vmatpush.bf16.msra.mxu0 0
        %3567 = vmatpush.bf16.msra.mxu0 0
        %3568 = vmatpush.bf16.msra.mxu0 0
        %3569 = vmatpush.bf16.msra.mxu0 0
        %3570 = vmatpush.bf16.msra.mxu0 0
        %3571 = vmatpush.bf16.msra.mxu0 %v3559
        %3572 = vmatmul.bf16.gmra.mxu0 %v3562
        %v3573 = vpop.f32.mrf.mxu0
        %v3574 = vadd.f32 0.0, %v3573
        %v3575 = vpop.f32.mrf.mxu0
        %v3576 = vadd.f32 0.0, %v3575
        %3577 = vdwg.mxu0
        %v3580 = vunpack.c.l.b16 %v2968
        %v3581 = vunpack.c.l.b16 %v2969
        %v3582 = vpack.c.b16 %v3581, %v3580
        %v3585 = vunpack.c.l.b16 %v1239
        %v3586 = vunpack.c.l.b16 %v1240
        %v3587 = vpack.c.b16 %v3586, %v3585
        %v3590 = vsel %vm2221, %v3582, 0
        %3592 = vmatpush.bf16.msra.mxu0 0
        %3593 = vmatpush.bf16.msra.mxu0 0
        %3594 = vmatpush.bf16.msra.mxu0 0
        %3595 = vmatpush.bf16.msra.mxu0 0
        %3596 = vmatpush.bf16.msra.mxu0 0
        %3597 = vmatpush.bf16.msra.mxu0 0
        %3598 = vmatpush.bf16.msra.mxu0 0
        %3599 = vmatpush.bf16.msra.mxu0 %v3587
        %3600 = vmatmul.bf16.gmra.mxu0 %v3590
        %v3601 = vpop.f32.mrf.mxu0
        %v3602 = vadd.f32 0.0, %v3601
        %v3603 = vpop.f32.mrf.mxu0
        %v3604 = vadd.f32 0.0, %v3603
        %3605 = vdwg.mxu0
        %v3608 = vunpack.c.l.b16 %v2970
        %v3609 = vunpack.c.l.b16 %v2971
        %v3610 = vpack.c.b16 %v3609, %v3608
        %v3613 = vunpack.c.l.b16 %v1241
        %v3614 = vunpack.c.l.b16 %v1242
        %v3615 = vpack.c.b16 %v3614, %v3613
        %v3618 = vsel %vm2221, %v3610, 0
        %3620 = vmatpush.bf16.msra.mxu0 0
        %3621 = vmatpush.bf16.msra.mxu0 0
        %3622 = vmatpush.bf16.msra.mxu0 0
        %3623 = vmatpush.bf16.msra.mxu0 0
        %3624 = vmatpush.bf16.msra.mxu0 0
        %3625 = vmatpush.bf16.msra.mxu0 0
        %3626 = vmatpush.bf16.msra.mxu0 0
        %3627 = vmatpush.bf16.msra.mxu0 %v3615
        %3628 = vmatmul.bf16.gmra.mxu0 %v3618
        %v3629 = vpop.f32.mrf.mxu0
        %v3630 = vadd.f32 0.0, %v3629
        %v3631 = vpop.f32.mrf.mxu0
        %v3632 = vadd.f32 0.0, %v3631
        %3633 = vdwg.mxu0
        %v3636 = vunpack.c.l.b16 %v2972
        %v3637 = vunpack.c.l.b16 %v2973
        %v3638 = vpack.c.b16 %v3637, %v3636
        %v3641 = vunpack.c.l.b16 %v1243
        %v3642 = vunpack.c.l.b16 %v1244
        %v3643 = vpack.c.b16 %v3642, %v3641
        %v3646 = vsel %vm2221, %v3638, 0
        %3648 = vmatpush.bf16.msra.mxu0 0
        %3649 = vmatpush.bf16.msra.mxu0 0
        %3650 = vmatpush.bf16.msra.mxu0 0
        %3651 = vmatpush.bf16.msra.mxu0 0
        %3652 = vmatpush.bf16.msra.mxu0 0
        %3653 = vmatpush.bf16.msra.mxu0 0
        %3654 = vmatpush.bf16.msra.mxu0 0
        %3655 = vmatpush.bf16.msra.mxu0 %v3643
        %3656 = vmatmul.bf16.gmra.mxu0 %v3646
        %v3657 = vpop.f32.mrf.mxu0
        %v3658 = vadd.f32 0.0, %v3657
        %v3659 = vpop.f32.mrf.mxu0
        %v3660 = vadd.f32 0.0, %v3659
        %3661 = vdwg.mxu0
        %v3664 = vunpack.c.l.b16 %v2974
        %v3665 = vunpack.c.l.b16 %v2975
        %v3666 = vpack.c.b16 %v3665, %v3664
        %v3669 = vunpack.c.l.b16 %v1245
        %v3670 = vunpack.c.l.b16 %v1246
        %v3671 = vpack.c.b16 %v3670, %v3669
        %v3674 = vsel %vm2221, %v3666, 0
        %3676 = vmatpush.bf16.msra.mxu0 0
        %3677 = vmatpush.bf16.msra.mxu0 0
        %3678 = vmatpush.bf16.msra.mxu0 0
        %3679 = vmatpush.bf16.msra.mxu0 0
        %3680 = vmatpush.bf16.msra.mxu0 0
        %3681 = vmatpush.bf16.msra.mxu0 0
        %3682 = vmatpush.bf16.msra.mxu0 0
        %3683 = vmatpush.bf16.msra.mxu0 %v3671
        %3684 = vmatmul.bf16.gmra.mxu0 %v3674
        %v3685 = vpop.f32.mrf.mxu0
        %v3686 = vadd.f32 0.0, %v3685
        %v3687 = vpop.f32.mrf.mxu0
        %v3688 = vadd.f32 0.0, %v3687
        %3689 = vdwg.mxu0
        %v3692 = vunpack.c.l.b16 %v2976
        %v3693 = vunpack.c.l.b16 %v2977
        %v3694 = vpack.c.b16 %v3693, %v3692
        %v3697 = vunpack.c.l.b16 %v1247
        %v3698 = vunpack.c.l.b16 %v1248
        %v3699 = vpack.c.b16 %v3698, %v3697
        %v3702 = vsel %vm2221, %v3694, 0
        %3704 = vmatpush.bf16.msra.mxu0 0
        %3705 = vmatpush.bf16.msra.mxu0 0
        %3706 = vmatpush.bf16.msra.mxu0 0
        %3707 = vmatpush.bf16.msra.mxu0 0
        %3708 = vmatpush.bf16.msra.mxu0 0
        %3709 = vmatpush.bf16.msra.mxu0 0
        %3710 = vmatpush.bf16.msra.mxu0 0
        %3711 = vmatpush.bf16.msra.mxu0 %v3699
        %3712 = vmatmul.bf16.gmra.mxu0 %v3702
        %v3713 = vpop.f32.mrf.mxu0
        %v3714 = vadd.f32 0.0, %v3713
        %v3715 = vpop.f32.mrf.mxu0
        %v3716 = vadd.f32 0.0, %v3715
        %3717 = vdwg.mxu0
        %v3720 = vunpack.c.l.b16 %v2978
        %v3721 = vunpack.c.l.b16 %v2979
        %v3722 = vpack.c.b16 %v3721, %v3720
        %v3725 = vunpack.c.l.b16 %v1249
        %v3726 = vunpack.c.l.b16 %v1250
        %v3727 = vpack.c.b16 %v3726, %v3725
        %v3730 = vsel %vm2221, %v3722, 0
        %3732 = vmatpush.bf16.msra.mxu0 0
        %3733 = vmatpush.bf16.msra.mxu0 0
        %3734 = vmatpush.bf16.msra.mxu0 0
        %3735 = vmatpush.bf16.msra.mxu0 0
        %3736 = vmatpush.bf16.msra.mxu0 0
        %3737 = vmatpush.bf16.msra.mxu0 0
        %3738 = vmatpush.bf16.msra.mxu0 0
        %3739 = vmatpush.bf16.msra.mxu0 %v3727
        %3740 = vmatmul.bf16.gmra.mxu0 %v3730
        %v3741 = vpop.f32.mrf.mxu0
        %v3742 = vadd.f32 0.0, %v3741
        %v3743 = vpop.f32.mrf.mxu0
        %v3744 = vadd.f32 0.0, %v3743
        %3745 = vdwg.mxu0
        %v3748 = vunpack.c.l.b16 %v2980
        %v3749 = vunpack.c.l.b16 %v2981
        %v3750 = vpack.c.b16 %v3749, %v3748
        %v3753 = vunpack.c.l.b16 %v1251
        %v3754 = vunpack.c.l.b16 %v1252
        %v3755 = vpack.c.b16 %v3754, %v3753
        %v3758 = vsel %vm2221, %v3750, 0
        %3760 = vmatpush.bf16.msra.mxu0 0
        %3761 = vmatpush.bf16.msra.mxu0 0
        %3762 = vmatpush.bf16.msra.mxu0 0
        %3763 = vmatpush.bf16.msra.mxu0 0
        %3764 = vmatpush.bf16.msra.mxu0 0
        %3765 = vmatpush.bf16.msra.mxu0 0
        %3766 = vmatpush.bf16.msra.mxu0 0
        %3767 = vmatpush.bf16.msra.mxu0 %v3755
        %3768 = vmatmul.bf16.gmra.mxu0 %v3758
        %v3769 = vpop.f32.mrf.mxu0
        %v3770 = vadd.f32 0.0, %v3769
        %v3771 = vpop.f32.mrf.mxu0
        %v3772 = vadd.f32 0.0, %v3771
        %3773 = vdwg.mxu0
        %v3776 = vunpack.c.l.b16 %v2982
        %v3777 = vunpack.c.l.b16 %v2983
        %v3778 = vpack.c.b16 %v3777, %v3776
        %v3781 = vunpack.c.l.b16 %v1253
        %v3782 = vunpack.c.l.b16 %v1254
        %v3783 = vpack.c.b16 %v3782, %v3781
        %v3786 = vsel %vm2221, %v3778, 0
        %3788 = vmatpush.bf16.msra.mxu0 0
        %3789 = vmatpush.bf16.msra.mxu0 0
        %3790 = vmatpush.bf16.msra.mxu0 0
        %3791 = vmatpush.bf16.msra.mxu0 0
        %3792 = vmatpush.bf16.msra.mxu0 0
        %3793 = vmatpush.bf16.msra.mxu0 0
        %3794 = vmatpush.bf16.msra.mxu0 0
        %3795 = vmatpush.bf16.msra.mxu0 %v3783
        %3796 = vmatmul.bf16.gmra.mxu0 %v3786
        %v3797 = vpop.f32.mrf.mxu0
        %v3798 = vadd.f32 0.0, %v3797
        %v3799 = vpop.f32.mrf.mxu0
        %v3800 = vadd.f32 0.0, %v3799
        %3801 = vdwg.mxu0
        %v3804 = vunpack.c.l.b16 %v2984
        %v3805 = vunpack.c.l.b16 %v2985
        %v3806 = vpack.c.b16 %v3805, %v3804
        %v3809 = vunpack.c.l.b16 %v1255
        %v3810 = vunpack.c.l.b16 %v1256
        %v3811 = vpack.c.b16 %v3810, %v3809
        %v3814 = vsel %vm2221, %v3806, 0
        %3816 = vmatpush.bf16.msra.mxu0 0
        %3817 = vmatpush.bf16.msra.mxu0 0
        %3818 = vmatpush.bf16.msra.mxu0 0
        %3819 = vmatpush.bf16.msra.mxu0 0
        %3820 = vmatpush.bf16.msra.mxu0 0
        %3821 = vmatpush.bf16.msra.mxu0 0
        %3822 = vmatpush.bf16.msra.mxu0 0
        %3823 = vmatpush.bf16.msra.mxu0 %v3811
        %3824 = vmatmul.bf16.gmra.mxu0 %v3814
        %v3825 = vpop.f32.mrf.mxu0
        %v3826 = vadd.f32 0.0, %v3825
        %v3827 = vpop.f32.mrf.mxu0
        %v3828 = vadd.f32 0.0, %v3827
        %3829 = vdwg.mxu0
        %v3832 = vunpack.c.l.b16 %v2986
        %v3833 = vunpack.c.l.b16 %v2987
        %v3834 = vpack.c.b16 %v3833, %v3832
        %v3837 = vunpack.c.l.b16 %v1257
        %v3838 = vunpack.c.l.b16 %v1258
        %v3839 = vpack.c.b16 %v3838, %v3837
        %v3842 = vsel %vm2221, %v3834, 0
        %3844 = vmatpush.bf16.msra.mxu0 0
        %3845 = vmatpush.bf16.msra.mxu0 0
        %3846 = vmatpush.bf16.msra.mxu0 0
        %3847 = vmatpush.bf16.msra.mxu0 0
        %3848 = vmatpush.bf16.msra.mxu0 0
        %3849 = vmatpush.bf16.msra.mxu0 0
        %3850 = vmatpush.bf16.msra.mxu0 0
        %3851 = vmatpush.bf16.msra.mxu0 %v3839
        %3852 = vmatmul.bf16.gmra.mxu0 %v3842
        %v3853 = vpop.f32.mrf.mxu0
        %v3854 = vadd.f32 0.0, %v3853
        %v3855 = vpop.f32.mrf.mxu0
        %v3856 = vadd.f32 0.0, %v3855
        %3857 = vdwg.mxu0
        %v3860 = vunpack.c.l.b16 %v2988
        %v3861 = vunpack.c.l.b16 %v2989
        %v3862 = vpack.c.b16 %v3861, %v3860
        %v3865 = vunpack.c.l.b16 %v1259
        %v3866 = vunpack.c.l.b16 %v1260
        %v3867 = vpack.c.b16 %v3866, %v3865
        %v3870 = vsel %vm2221, %v3862, 0
        %3872 = vmatpush.bf16.msra.mxu0 0
        %3873 = vmatpush.bf16.msra.mxu0 0
        %3874 = vmatpush.bf16.msra.mxu0 0
        %3875 = vmatpush.bf16.msra.mxu0 0
        %3876 = vmatpush.bf16.msra.mxu0 0
        %3877 = vmatpush.bf16.msra.mxu0 0
        %3878 = vmatpush.bf16.msra.mxu0 0
        %3879 = vmatpush.bf16.msra.mxu0 %v3867
        %3880 = vmatmul.bf16.gmra.mxu0 %v3870
        %v3881 = vpop.f32.mrf.mxu0
        %v3882 = vadd.f32 0.0, %v3881
        %v3883 = vpop.f32.mrf.mxu0
        %v3884 = vadd.f32 0.0, %v3883
        %3885 = vdwg.mxu0
        %3902 = vrot.lane.b32.xlu0 %v3238, 32
        %v3903 = vpop.permute.xlu0 %3902
        %3904 = vrot.lane.b32.xlu0 %v3240, 32
        %v3905 = vpop.permute.xlu0 %3904
        %3906 = vrot.lane.b32.xlu0 %v3266, 32
        %v3907 = vpop.permute.xlu0 %3906
        %3908 = vrot.lane.b32.xlu0 %v3268, 32
        %v3909 = vpop.permute.xlu0 %3908
        %3910 = vrot.lane.b32.xlu0 %v3294, 32
        %v3911 = vpop.permute.xlu0 %3910
        %3912 = vrot.lane.b32.xlu0 %v3296, 32
        %v3913 = vpop.permute.xlu0 %3912
        %3914 = vrot.lane.b32.xlu0 %v3322, 32
        %v3915 = vpop.permute.xlu0 %3914
        %3916 = vrot.lane.b32.xlu0 %v3324, 32
        %v3917 = vpop.permute.xlu0 %3916
        %3918 = vrot.lane.b32.xlu0 %v3350, 32
        %v3919 = vpop.permute.xlu0 %3918
        %3920 = vrot.lane.b32.xlu0 %v3352, 32
        %v3921 = vpop.permute.xlu0 %3920
        %3922 = vrot.lane.b32.xlu0 %v3378, 32
        %v3923 = vpop.permute.xlu0 %3922
        %3924 = vrot.lane.b32.xlu0 %v3380, 32
        %v3925 = vpop.permute.xlu0 %3924
        %3926 = vrot.lane.b32.xlu0 %v3406, 32
        %v3927 = vpop.permute.xlu0 %3926
        %3928 = vrot.lane.b32.xlu0 %v3408, 32
        %v3929 = vpop.permute.xlu0 %3928
        %3930 = vrot.lane.b32.xlu0 %v3434, 32
        %v3931 = vpop.permute.xlu0 %3930
        %3932 = vrot.lane.b32.xlu0 %v3436, 32
        %v3933 = vpop.permute.xlu0 %3932
        %3966 = vrot.lane.b32.xlu0 %v3462, 64
        %v3967 = vpop.permute.xlu0 %3966
        %3968 = vrot.lane.b32.xlu0 %v3464, 64
        %v3969 = vpop.permute.xlu0 %3968
        %3970 = vrot.lane.b32.xlu0 %v3490, 64
        %v3971 = vpop.permute.xlu0 %3970
        %3972 = vrot.lane.b32.xlu0 %v3492, 64
        %v3973 = vpop.permute.xlu0 %3972
        %3974 = vrot.lane.b32.xlu0 %v3518, 64
        %v3975 = vpop.permute.xlu0 %3974
        %3976 = vrot.lane.b32.xlu0 %v3520, 64
        %v3977 = vpop.permute.xlu0 %3976
        %3978 = vrot.lane.b32.xlu0 %v3546, 64
        %v3979 = vpop.permute.xlu0 %3978
        %3980 = vrot.lane.b32.xlu0 %v3548, 64
        %v3981 = vpop.permute.xlu0 %3980
        %3982 = vrot.lane.b32.xlu0 %v3574, 64
        %v3983 = vpop.permute.xlu0 %3982
        %3984 = vrot.lane.b32.xlu0 %v3576, 64
        %v3985 = vpop.permute.xlu0 %3984
        %3986 = vrot.lane.b32.xlu0 %v3602, 64
        %v3987 = vpop.permute.xlu0 %3986
        %3988 = vrot.lane.b32.xlu0 %v3604, 64
        %v3989 = vpop.permute.xlu0 %3988
        %3990 = vrot.lane.b32.xlu0 %v3630, 64
        %v3991 = vpop.permute.xlu0 %3990
        %3992 = vrot.lane.b32.xlu0 %v3632, 64
        %v3993 = vpop.permute.xlu0 %3992
        %3994 = vrot.lane.b32.xlu0 %v3658, 64
        %v3995 = vpop.permute.xlu0 %3994
        %3996 = vrot.lane.b32.xlu0 %v3660, 64
        %v3997 = vpop.permute.xlu0 %3996
        %4030 = vrot.lane.b32.xlu0 %v3686, 96
        %v4031 = vpop.permute.xlu0 %4030
        %4032 = vrot.lane.b32.xlu0 %v3688, 96
        %v4033 = vpop.permute.xlu0 %4032
        %4034 = vrot.lane.b32.xlu0 %v3714, 96
        %v4035 = vpop.permute.xlu0 %4034
        %4036 = vrot.lane.b32.xlu0 %v3716, 96
        %v4037 = vpop.permute.xlu0 %4036
        %4038 = vrot.lane.b32.xlu0 %v3742, 96
        %v4039 = vpop.permute.xlu0 %4038
        %4040 = vrot.lane.b32.xlu0 %v3744, 96
        %v4041 = vpop.permute.xlu0 %4040
        %4042 = vrot.lane.b32.xlu0 %v3770, 96
        %v4043 = vpop.permute.xlu0 %4042
        %4044 = vrot.lane.b32.xlu0 %v3772, 96
        %v4045 = vpop.permute.xlu0 %4044
        %4046 = vrot.lane.b32.xlu0 %v3798, 96
        %v4047 = vpop.permute.xlu0 %4046
        %4048 = vrot.lane.b32.xlu0 %v3800, 96
        %v4049 = vpop.permute.xlu0 %4048
        %4050 = vrot.lane.b32.xlu0 %v3826, 96
        %v4051 = vpop.permute.xlu0 %4050
        %4052 = vrot.lane.b32.xlu0 %v3828, 96
        %v4053 = vpop.permute.xlu0 %4052
        %4054 = vrot.lane.b32.xlu0 %v3854, 96
        %v4055 = vpop.permute.xlu0 %4054
        %4056 = vrot.lane.b32.xlu0 %v3856, 96
        %v4057 = vpop.permute.xlu0 %4056
        %4058 = vrot.lane.b32.xlu0 %v3882, 96
        %v4059 = vpop.permute.xlu0 %4058
        %4060 = vrot.lane.b32.xlu0 %v3884, 96
        %v4061 = vpop.permute.xlu0 %4060
        %v4078 = vsel %vm401, %v3014, %v3903
        %v4079 = vsel %vm401, %v3016, %v3905
        %v4080 = vsel %vm401, %v3042, %v3907
        %v4081 = vsel %vm401, %v3044, %v3909
        %v4082 = vsel %vm401, %v3070, %v3911
        %v4083 = vsel %vm401, %v3072, %v3913
        %v4084 = vsel %vm401, %v3098, %v3915
        %v4085 = vsel %vm401, %v3100, %v3917
        %v4086 = vsel %vm401, %v3126, %v3919
        %v4087 = vsel %vm401, %v3128, %v3921
        %v4088 = vsel %vm401, %v3154, %v3923
        %v4089 = vsel %vm401, %v3156, %v3925
        %v4090 = vsel %vm401, %v3182, %v3927
        %v4091 = vsel %vm401, %v3184, %v3929
        %v4092 = vsel %vm401, %v3210, %v3931
        %v4093 = vsel %vm401, %v3212, %v3933
        %vm4094 = vcmask 523264
        %v4095 = vsel %vm4094, %v4078, %v3967
        %v4096 = vsel %vm4094, %v4079, %v3969
        %v4097 = vsel %vm4094, %v4080, %v3971
        %v4098 = vsel %vm4094, %v4081, %v3973
        %v4099 = vsel %vm4094, %v4082, %v3975
        %v4100 = vsel %vm4094, %v4083, %v3977
        %v4101 = vsel %vm4094, %v4084, %v3979
        %v4102 = vsel %vm4094, %v4085, %v3981
        %v4103 = vsel %vm4094, %v4086, %v3983
        %v4104 = vsel %vm4094, %v4087, %v3985
        %v4105 = vsel %vm4094, %v4088, %v3987
        %v4106 = vsel %vm4094, %v4089, %v3989
        %v4107 = vsel %vm4094, %v4090, %v3991
        %v4108 = vsel %vm4094, %v4091, %v3993
        %v4109 = vsel %vm4094, %v4092, %v3995
        %v4110 = vsel %vm4094, %v4093, %v3997
        %vm4111 = vcmask 785408
        %v4112 = vsel %vm4111, %v4095, %v4031
        %v4113 = vsel %vm4111, %v4096, %v4033
        %v4114 = vsel %vm4111, %v4097, %v4035
        %v4115 = vsel %vm4111, %v4098, %v4037
        %v4116 = vsel %vm4111, %v4099, %v4039
        %v4117 = vsel %vm4111, %v4100, %v4041
        %v4118 = vsel %vm4111, %v4101, %v4043
        %v4119 = vsel %vm4111, %v4102, %v4045
        %v4120 = vsel %vm4111, %v4103, %v4047
        %v4121 = vsel %vm4111, %v4104, %v4049
        %v4122 = vsel %vm4111, %v4105, %v4051
        %v4123 = vsel %vm4111, %v4106, %v4053
        %v4124 = vsel %vm4111, %v4107, %v4055
        %v4125 = vsel %vm4111, %v4108, %v4057
        %v4126 = vsel %vm4111, %v4109, %v4059
        %v4127 = vsel %vm4111, %v4110, %v4061
        %v4128 = vadd.f32 %v436, %v4112
        %v4129 = vadd.f32 %v438, %v4113
        %v4130 = vadd.f32 %v441, %v4114
        %v4131 = vadd.f32 %v443, %v4115
        %v4132 = vadd.f32 %v446, %v4116
        %v4133 = vadd.f32 %v448, %v4117
        %v4134 = vadd.f32 %v451, %v4118
        %v4135 = vadd.f32 %v453, %v4119
        %v4136 = vadd.f32 %v456, %v4120
        %v4137 = vadd.f32 %v458, %v4121
        %v4138 = vadd.f32 %v461, %v4122
        %v4139 = vadd.f32 %v463, %v4123
        %v4140 = vadd.f32 %v466, %v4124
        %v4141 = vadd.f32 %v468, %v4125
        %v4142 = vadd.f32 %v471, %v4126
        %v4143 = vadd.f32 %v473, %v4127
        %v4144 = vld [vmem:[#allocation7] sm:$0xf]
        %v4145 = vld [vmem:[#allocation7 + $0x4] sm:$0xf]
        %v4146 = vld [vmem:[#allocation7 + $0x8] sm:$0xf]
        %v4147 = vld [vmem:[#allocation7 + $0xc] sm:$0xf]
        %v4148 = vld [vmem:[#allocation7 + $0x10] sm:$0xf]
        %v4149 = vld [vmem:[#allocation7 + $0x14] sm:$0xf]
        %v4150 = vld [vmem:[#allocation7 + $0x18] sm:$0xf]
        %v4151 = vld [vmem:[#allocation7 + $0x1c] sm:$0xf]
        %v4152 = vld [vmem:[#allocation7 + $0x20] sm:$0xf]
        %v4153 = vld [vmem:[#allocation7 + $0x24] sm:$0xf]
        %v4154 = vld [vmem:[#allocation7 + $0x28] sm:$0xf]
        %v4155 = vld [vmem:[#allocation7 + $0x2c] sm:$0xf]
        %v4156 = vld [vmem:[#allocation7 + $0x30] sm:$0xf]
        %v4157 = vld [vmem:[#allocation7 + $0x34] sm:$0xf]
        %v4158 = vld [vmem:[#allocation7 + $0x38] sm:$0xf]
        %v4159 = vld [vmem:[#allocation7 + $0x3c] sm:$0xf]
        %v4160 = vpack.c.bf16 %v4129, %v4128
        %v4161 = vpack.c.bf16 %v4131, %v4130
        %v4162 = vpack.c.bf16 %v4133, %v4132
        %v4163 = vpack.c.bf16 %v4135, %v4134
        %v4164 = vpack.c.bf16 %v4137, %v4136
        %v4165 = vpack.c.bf16 %v4139, %v4138
        %v4166 = vpack.c.bf16 %v4141, %v4140
        %v4167 = vpack.c.bf16 %v4143, %v4142
        %v4168 = vld [vmem:[%s4] sm:$0x1]
        %v4170 = vperm.slane %v4168, 0
        %v4188 = vunpack.c.l.b16 %v4144
        %v4189 = vunpack.c.l.b16 %v4145
        %v4190 = vunpack.c.l.b16 %v4146
        %v4191 = vunpack.c.l.b16 %v4147
        %v4192 = vunpack.c.l.b16 %v4148
        %v4193 = vunpack.c.l.b16 %v4149
        %v4194 = vunpack.c.l.b16 %v4150
        %v4195 = vunpack.c.l.b16 %v4151
        %v4196 = vunpack.c.l.b16 %v4152
        %v4197 = vunpack.c.l.b16 %v4153
        %v4198 = vunpack.c.l.b16 %v4154
        %v4199 = vunpack.c.l.b16 %v4155
        %v4200 = vunpack.c.l.b16 %v4156
        %v4201 = vunpack.c.l.b16 %v4157
        %v4202 = vunpack.c.l.b16 %v4158
        %v4203 = vunpack.c.l.b16 %v4159
        %v4204 = vpack.c.b16 %v4189, %v4188
        %v4205 = vpack.c.b16 %v4191, %v4190
        %v4206 = vpack.c.b16 %v4193, %v4192
        %v4207 = vpack.c.b16 %v4195, %v4194
        %v4208 = vpack.c.b16 %v4197, %v4196
        %v4209 = vpack.c.b16 %v4199, %v4198
        %v4210 = vpack.c.b16 %v4201, %v4200
        %v4211 = vpack.c.b16 %v4203, %v4202
        %4220 = vmatpush.bf16.msra.mxu0 %v4211
        %4221 = vmatpush.bf16.msra.mxu0 %v4210
        %4222 = vmatpush.bf16.msra.mxu0 %v4209
        %4223 = vmatpush.bf16.msra.mxu0 %v4208
        %4224 = vmatpush.bf16.msra.mxu0 %v4207
        %4225 = vmatpush.bf16.msra.mxu0 %v4206
        %4226 = vmatpush.bf16.msra.mxu0 %v4205
        %4227 = vmatpush.bf16.msra.mxu0 %v4204
        %4228 = vmatmul.bf16.gmra.mxu0 %v4160
        %v4229 = vpop.f32.mrf.mxu0
        %v4230 = vadd.f32 %v4170, %v4229
        %v4231 = vpop.f32.mrf.mxu0
        %v4232 = vadd.f32 %v4170, %v4231
        %4233 = vmatmul.bf16.gmra.mxu0 %v4161
        %v4234 = vpop.f32.mrf.mxu0
        %v4235 = vadd.f32 %v4170, %v4234
        %v4236 = vpop.f32.mrf.mxu0
        %v4237 = vadd.f32 %v4170, %v4236
        %4238 = vmatmul.bf16.gmra.mxu0 %v4162
        %v4239 = vpop.f32.mrf.mxu0
        %v4240 = vadd.f32 %v4170, %v4239
        %v4241 = vpop.f32.mrf.mxu0
        %v4242 = vadd.f32 %v4170, %v4241
        %4243 = vmatmul.bf16.gmra.mxu0 %v4163
        %v4244 = vpop.f32.mrf.mxu0
        %v4245 = vadd.f32 %v4170, %v4244
        %v4246 = vpop.f32.mrf.mxu0
        %v4247 = vadd.f32 %v4170, %v4246
        %4248 = vmatmul.bf16.gmra.mxu0 %v4164
        %v4249 = vpop.f32.mrf.mxu0
        %v4250 = vadd.f32 %v4170, %v4249
        %v4251 = vpop.f32.mrf.mxu0
        %v4252 = vadd.f32 %v4170, %v4251
        %4253 = vmatmul.bf16.gmra.mxu0 %v4165
        %v4254 = vpop.f32.mrf.mxu0
        %v4255 = vadd.f32 %v4170, %v4254
        %v4256 = vpop.f32.mrf.mxu0
        %v4257 = vadd.f32 %v4170, %v4256
        %4258 = vmatmul.bf16.gmra.mxu0 %v4166
        %v4259 = vpop.f32.mrf.mxu0
        %v4260 = vadd.f32 %v4170, %v4259
        %v4261 = vpop.f32.mrf.mxu0
        %v4262 = vadd.f32 %v4170, %v4261
        %4263 = vmatmul.bf16.gmra.mxu0 %v4167
        %v4264 = vpop.f32.mrf.mxu0
        %v4265 = vadd.f32 %v4170, %v4264
        %v4266 = vpop.f32.mrf.mxu0
        %v4267 = vadd.f32 %v4170, %v4266
        %4268 = vdwg.mxu0
        %v4269 = vmax.f32 %v4230, 0.0
        %v4270 = vmax.f32 %v4232, 0.0
        %v4271 = vmax.f32 %v4235, 0.0
        %v4272 = vmax.f32 %v4237, 0.0
        %v4273 = vmax.f32 %v4240, 0.0
        %v4274 = vmax.f32 %v4242, 0.0
        %v4275 = vmax.f32 %v4245, 0.0
        %v4276 = vmax.f32 %v4247, 0.0
        %v4277 = vmax.f32 %v4250, 0.0
        %v4278 = vmax.f32 %v4252, 0.0
        %v4279 = vmax.f32 %v4255, 0.0
        %v4280 = vmax.f32 %v4257, 0.0
        %v4281 = vmax.f32 %v4260, 0.0
        %v4282 = vmax.f32 %v4262, 0.0
        %v4283 = vmax.f32 %v4265, 0.0
        %v4284 = vmax.f32 %v4267, 0.0
        %v4285 = vadd.f32 %v4128, %v4269
        %v4286 = vadd.f32 %v4129, %v4270
        %v4287 = vadd.f32 %v4130, %v4271
        %v4288 = vadd.f32 %v4131, %v4272
        %v4289 = vadd.f32 %v4132, %v4273
        %v4290 = vadd.f32 %v4133, %v4274
        %v4291 = vadd.f32 %v4134, %v4275
        %v4292 = vadd.f32 %v4135, %v4276
        %v4293 = vadd.f32 %v4136, %v4277
        %v4294 = vadd.f32 %v4137, %v4278
        %v4295 = vadd.f32 %v4138, %v4279
        %v4296 = vadd.f32 %v4139, %v4280
        %v4297 = vadd.f32 %v4140, %v4281
        %v4298 = vadd.f32 %v4141, %v4282
        %v4299 = vadd.f32 %v4142, %v4283
        %v4300 = vadd.f32 %v4143, %v4284
        %v4301 = vpack.c.bf16 %v4285, %v4285
        %v4302 = vpack.c.bf16 %v4286, %v4286
        %v4303 = vpack.c.bf16 %v4287, %v4287
        %v4304 = vpack.c.bf16 %v4288, %v4288
        %v4305 = vpack.c.bf16 %v4289, %v4289
        %v4306 = vpack.c.bf16 %v4290, %v4290
        %v4307 = vpack.c.bf16 %v4291, %v4291
        %v4308 = vpack.c.bf16 %v4292, %v4292
        %v4309 = vpack.c.bf16 %v4293, %v4293
        %v4310 = vpack.c.bf16 %v4294, %v4294
        %v4311 = vpack.c.bf16 %v4295, %v4295
        %v4312 = vpack.c.bf16 %v4296, %v4296
        %v4313 = vpack.c.bf16 %v4297, %v4297
        %v4314 = vpack.c.bf16 %v4298, %v4298
        %v4315 = vpack.c.bf16 %v4299, %v4299
        %v4316 = vpack.c.bf16 %v4300, %v4300
        %4317 = vst [vmem:[%s293] sm:$0xf] %v4301
        %4318 = vst [vmem:[%s293 + $0x4] sm:$0xf] %v4302
        %4319 = vst [vmem:[%s293 + $0x8] sm:$0xf] %v4303
        %4320 = vst [vmem:[%s293 + $0xc] sm:$0xf] %v4304
        %4321 = vst [vmem:[%s293 + $0x10] sm:$0xf] %v4305
        %4322 = vst [vmem:[%s293 + $0x14] sm:$0xf] %v4306
        %4323 = vst [vmem:[%s293 + $0x18] sm:$0xf] %v4307
        %4324 = vst [vmem:[%s293 + $0x1c] sm:$0xf] %v4308
        %4325 = vst [vmem:[%s293 + $0x20] sm:$0xf] %v4309
        %4326 = vst [vmem:[%s293 + $0x24] sm:$0xf] %v4310
        %4327 = vst [vmem:[%s293 + $0x28] sm:$0xf] %v4311
        %4328 = vst [vmem:[%s293 + $0x2c] sm:$0xf] %v4312
        %4329 = vst [vmem:[%s293 + $0x30] sm:$0xf] %v4313
        %4330 = vst [vmem:[%s293 + $0x34] sm:$0xf] %v4314
        %4331 = vst [vmem:[%s293 + $0x38] sm:$0xf] %v4315
        %4332 = vst [vmem:[%s293 + $0x3c] sm:$0xf] %v4316
        %s4333 = sand.u32 %s142, 1
        %s4334 = scalar_lea.sflag [#allocation4], %s4333
        %s4335 = sand.u32 %s142, 1
        %s4336 = smul.addr %s4335, 64
        %s4337 = scalar_lea.vmem [#allocation10], %s4336
        // Predicated region
        $region57: #{tpu_custom_call.1} parent=39 // pred_check
          %p4338 = pneg %p152
        $region58: #{tpu_custom_call.1} parent=39 // pred_check_branch
          %4340 = sbr.rel (%p4338) target = $region60
        $region59: #{tpu_custom_call.1} parent=39 // pred_region
          %s4341 = smul.u32 8, %s24
          %4343 = vsyncadd %s4334, 0
          %s4344 = smul.addr %s4341, 2
          %s4345 = smul.addr %s4344, 4
          %s4346 = scalar_lea.hbm %s5, %s4345
          %s4347 = sshll.u32 %s4337, 4
          %s4348 = int_to_ptr.vmem [resolvable:$true] %s4347
          %s4349 = sshll.u32 %s4346, 4
          %s4350 = int_to_ptr.hbm [resolvable:$true] %s4349
          %4355 = dma.vmem_to_hbm [thread:$0]  %s4348, 1024, %s4350, %s4334, 64, 64, 4
        $region60: #{tpu_custom_call.1} parent=39 // pred_fallthru
          _
      $region40: #{tpu_custom_call.1} parent=5 // pred_fallthru
        _
      %p4356 = scmp.le.s32.totalorder 2, %s19
      // Predicated region
      $region61: #{tpu_custom_call.1} parent=5 // pred_check
        %p4357 = pneg %p4356
      $region62: #{tpu_custom_call.1} parent=5 // pred_check_branch
        %4359 = sbr.rel (%p4357) target = $region64
      $region63: #{tpu_custom_call.1} parent=5 // pred_region
        %s4360 = ssub.s32 %s19, 2
        // Predicated region
        $region65: #{tpu_custom_call.1} parent=63 // pred_check
          %p4361 = pneg %p158
        $region66: #{tpu_custom_call.1} parent=63 // pred_check_branch
          %4363 = sbr.rel (%p4361) target = $region68
        $region67: #{tpu_custom_call.1} parent=63 // pred_region
          %s4364 = sand.u32 %s143, 1
          %s4365 = scalar_lea.sflag [#allocation4], %s4364
          %s4366 = sand.u32 %s143, 1
          %s4367 = smul.addr %s4366, 64
          %s4368 = scalar_lea.vmem [#allocation10], %s4367
          %4370 = dma.done %s4365, 1024
        $region68: #{tpu_custom_call.1} parent=63 // pred_fallthru
          _
      $region64: #{tpu_custom_call.1} parent=5 // pred_fallthru
        _
    $region6: #{tpu_custom_call.1} parent=1 // loop_footer
      %s23 = sadd.s32 1, %s19
    $region7: #{tpu_custom_call.1} parent=1 // loop_footer_branch
      %18 = sbr.rel target = $region3
    $region8: #{tpu_custom_call.1} parent=1 // loop_exit
      _
    %4371 = vsyncpa [#allocation3], 1
    %s4372 = scalar_lea.sflag [#allocation3], 1
    %4373 = vsyncpa %s4372, 1
    %4374 = vsyncpa [#allocation6], 1
    %4375 = vsyncpa [#allocation9], 1
    %4376 = vsyncpa [#allocation4], 1
    %s4377 = scalar_lea.sflag [#allocation4], 1
    %4378 = vsyncpa %s4377, 1

</llo_original>
